<compile_context>
chip_gen: v7x
topology: tpu7x:2x2x1
jax: 0.10.0
libtpu: 0.0.40
codegen_flags: <defaults>
</compile_context>

<pallas_src>
import functools

import jax
import jax.numpy as jnp
from jax.experimental import pallas as pl
from jax.experimental.pallas import tpu as pltpu

EPS = 1e-5


def _round_up(x, m):
    return ((x + m - 1) // m) * m


def _vmem_limit_bytes():
    """Generation-aware scoped-VMEM limit (v5e/v6e: 128 MiB phys, v7x: 64 MiB)."""
    try:
        cap = int(pltpu.get_tpu_info().vmem_capacity_bytes)
    except Exception:
        cap = 64 * 1024 * 1024
    return int(min(cap // 2, 96 * 1024 * 1024))


def prepare_aux_head_params(w1, g1, b1, w2_hwio, g2, b2, wc, bc):
    """One-time (offline) parameter prep: fold the 1/25 avg-pool scale into
    conv1, pad conv1 input channels and the classifier output to lane-dense
    widths, flatten conv2 to a [512, 768] matmul weight, pre-cast to bf16.
    Returns a dict of arrays only (jit-friendly pytree)."""
    c = w1.shape[0]
    nc = wc.shape[1]
    c_pad = max(128, _round_up(c, 128))
    lane_pad = max(128, _round_up(nc, 128))
    w1p = (jnp.zeros((c_pad, 128), jnp.float32)
           .at[:c, :].set(w1 * (1.0 / 25.0))).astype(jnp.bfloat16)
    w2p = w2_hwio.reshape(4 * 128, 768).astype(jnp.bfloat16)
    wcp = (jnp.zeros((768, lane_pad), jnp.float32)
           .at[:, :nc].set(wc)).astype(jnp.bfloat16)
    bcp = jnp.zeros((1, lane_pad), jnp.float32).at[:, :nc].set(bc)
    return dict(w1=w1p, g1=g1, b1=b1, w2=w2p, g2=g2, b2=b2, wc=wcp, bc=bcp)


# --------------------------------------------------------------------------
# Pass A: ReLU -> AvgPool2d(5, stride=3) -> Conv2d(C, 128, 1) per batch tile,
#         plus per-tile BN1 (sum, sumsq) partials.
# --------------------------------------------------------------------------
def _pool_conv1_kernel(x_ref, w1_ref, h1_ref, s1_ref):
    # x_ref : [T, 64*Cp] bf16, lane index = (spatial_pos)*Cp + channel
    # w1_ref: [Cp, 128]  bf16 (1x1 conv weight, 1/25 pool scale folded in)
    # h1_ref: [4T, 128]  f32, window-major rows (w*T + local batch index)
    # s1_ref: [8, 128]   f32, row 0 = sum(h1), row 1 = sum(h1*h1), rest zero
    cp = w1_ref.shape[0]
    xr = jnp.maximum(x_ref[...], 0)                           # bf16 [T, 64*Cp]

    def blk(r, c):                                            # [T, Cp] lane slice
        p = (r * 8 + c) * cp
        return xr[:, p:p + cp]

    # 5x5 / stride-3 window sums: 24 lane-aligned VPU adds per window (f32 acc),
    # batch independent -> O(N) total work (no indicator matmul).
    wins = []
    for i in (0, 1):
        for j in (0, 1):
            acc = blk(3 * i, 3 * j).astype(jnp.float32)
            for r in range(3 * i, 3 * i + 5):
                for c in range(3 * j, 3 * j + 5):
                    if r == 3 * i and c == 3 * j:
                        continue
                    acc = acc + blk(r, c).astype(jnp.float32)
            wins.append(acc)
    pooled = jnp.concatenate(wins, axis=0)                    # [4T, Cp] window-major

    # Conv2d(C, 128, 1): one [4T, Cp] @ [Cp, 128] MXU dot, f32 accumulation.
    h1 = jnp.dot(pooled.astype(jnp.bfloat16), w1_ref[...],
                 preferred_element_type=jnp.float32)          # [4T, 128]
    h1_ref[...] = h1

    # Tile-local BN1 partials (sum / sum-of-squares accumulate across tiles).
    s = jnp.sum(h1, axis=0, keepdims=True)
    ss = jnp.sum(h1 * h1, axis=0, keepdims=True)
    s1_ref[...] = jnp.concatenate(
        [s, ss, jnp.zeros((6, 128), jnp.float32)], axis=0)


# --------------------------------------------------------------------------
# Pass B: BN1 (precomputed scale/shift) -> ReLU -> Conv2d(128, 768, 2),
#         plus per-tile BN2 (sum, sumsq) partials.
# --------------------------------------------------------------------------
def _conv2_kernel(h1_ref, sc1_ref, sh1_ref, w2_ref, h2_ref, s2_ref):
    t = h1_ref.shape[0] // 4
    a1 = jnp.maximum(h1_ref[...] * sc1_ref[...] + sh1_ref[...], 0.0)  # f32 [4T,128]
    # Gather the 4 window row-blocks into the feature/lane axis: sublane-aligned
    # slices (T multiple of 8) + lane-aligned concat -> one K=512 dot.
    a1cat = jnp.concatenate([a1[w * t:(w + 1) * t, :] for w in range(4)],
                            axis=1).astype(jnp.bfloat16)              # [T, 512]
    h2 = jnp.dot(a1cat, w2_ref[...], preferred_element_type=jnp.float32)
    h2_ref[...] = h2                                                  # [T, 768]
    s = jnp.sum(h2, axis=0, keepdims=True)
    ss = jnp.sum(h2 * h2, axis=0, keepdims=True)
    s2_ref[...] = jnp.concatenate(
        [s, ss, jnp.zeros((6, 768), jnp.float32)], axis=0)


# --------------------------------------------------------------------------
# Pass C: BN2 -> ReLU -> Linear(768, NC) (output lane-padded to 128).
# --------------------------------------------------------------------------
def _classifier_kernel(h2_ref, sc2_ref, sh2_ref, wc_ref, bc_ref, out_ref):
    a2 = jnp.maximum(h2_ref[...] * sc2_ref[...] + sh2_ref[...], 0.0)
    out_ref[...] = (jnp.dot(a2.astype(jnp.bfloat16), wc_ref[...],
                            preferred_element_type=jnp.float32) + bc_ref[...])


def _const_spec(shape):
    nd = len(shape)
    return pl.BlockSpec(shape, lambda i, _nd=nd: (0,) * _nd)


@functools.partial(jax.jit, static_argnames=("tile", "num_classes"))
def aux_head_forward(x_nhwc, params, *, tile=8, num_classes=10):
    n, h, w, c = x_nhwc.shape
    if (h, w) != (8, 8):
        raise ValueError("AuxiliaryHeadCIFAR assumes an 8x8 input map")
    if tile % 8 != 0:
        raise ValueError("batch tile must be a multiple of 8 (sublane alignment)")
    if n % tile != 0:
        raise ValueError("batch must be a multiple of the tile size")
    n_tiles = n // tile

    cp = params["w1"].shape[0]
    lane = params["wc"].shape[1]
    cparams = pltpu.CompilerParams(dimension_semantics=("parallel",),
                                   vmem_limit_bytes=_vmem_limit_bytes())

    # Lane-dense bf16 input slab: [N, 64*Cp], lane = spatial_pos*Cp + channel
    # (padded channels hit zero rows of w1).
    xb = x_nhwc.astype(jnp.bfloat16)
    if cp > c:
        xb = jnp.pad(xb, ((0, 0), (0, 0), (0, 0), (0, cp - c)))
    x2 = xb.reshape(n, 64 * cp)

    # ---- Pass A -----------------------------------------------------------
    h1_all, s1_parts = pl.pallas_call(
        _pool_conv1_kernel,
        grid=(n_tiles,),
        in_specs=[pl.BlockSpec((tile, 64 * cp), lambda i: (i, 0)),
                  _const_spec((cp, 128))],
        out_specs=(pl.BlockSpec((4 * tile, 128), lambda i: (i, 0)),
                   pl.BlockSpec((8, 128), lambda i: (i, 0))),
        out_shape=(jax.ShapeDtypeStruct((4 * n, 128), jnp.float32),
                   jax.ShapeDtypeStruct((8 * n_tiles, 128), jnp.float32)),
        compiler_params=cparams,
    )(x2, params["w1"])

    # BN1: reduce tile partials -> training-mode stats over (batch, 2x2 spatial).
    s1 = s1_parts.reshape(n_tiles, 8, 128)
    cnt1 = 4.0 * n
    m1 = jnp.sum(s1[:, 0:1, :], axis=0) / cnt1                         # [1, 128]
    v1 = jnp.sum(s1[:, 1:2, :], axis=0) / cnt1 - m1 * m1
    sc1 = params["g1"] * jax.lax.rsqrt(v1 + EPS)
    sh1 = params["b1"] - m1 * sc1

    # ---- Pass B -----------------------------------------------------------
    h2_all, s2_parts = pl.pallas_call(
        _conv2_kernel,
        grid=(n_tiles,),
        in_specs=[pl.BlockSpec((4 * tile, 128), lambda i: (i, 0)),
                  _const_spec((1, 128)),
                  _const_spec((1, 128)),
                  _const_spec((512, 768))],
        out_specs=(pl.BlockSpec((tile, 768), lambda i: (i, 0)),
                   pl.BlockSpec((8, 768), lambda i: (i, 0))),
        out_shape=(jax.ShapeDtypeStruct((n, 768), jnp.float32),
                   jax.ShapeDtypeStruct((8 * n_tiles, 768), jnp.float32)),
        compiler_params=cparams,
    )(h1_all, sc1, sh1, params["w2"])

    # BN2: 1x1 spatial -> stats over the batch only.
    s2 = s2_parts.reshape(n_tiles, 8, 768)
    cnt2 = 1.0 * n
    m2 = jnp.sum(s2[:, 0:1, :], axis=0) / cnt2                         # [1, 768]
    v2 = jnp.sum(s2[:, 1:2, :], axis=0) / cnt2 - m2 * m2
    sc2 = params["g2"] * jax.lax.rsqrt(v2 + EPS)
    sh2 = params["b2"] - m2 * sc2

    # ---- Pass C -----------------------------------------------------------
    logits_pad = pl.pallas_call(
        _classifier_kernel,
        grid=(n_tiles,),
        in_specs=[pl.BlockSpec((tile, 768), lambda i: (i, 0)),
                  _const_spec((1, 768)),
                  _const_spec((1, 768)),
                  _const_spec((768, lane)),
                  _const_spec((1, lane))],
        out_specs=pl.BlockSpec((tile, lane), lambda i: (i, 0)),
        out_shape=jax.ShapeDtypeStruct((n, lane), jnp.float32),
        compiler_params=cparams,
    )(h2_all, sc2, sh2, params["wc"], params["bc"])

    return logits_pad[:, :num_classes]


def ref_forward(x_nhwc, w1, g1, b1, w2_hwio, g2, b2, wc, bc):
    """Pure-JAX reference of AuxiliaryHeadCIFAR.forward (training-mode BN).

    Mirrors the kernel's intentional precision policy (bf16 matmul operands,
    f32 accumulation) so the comparison isolates layout/indexing bugs from
    the reviewed bf16 rounding; otherwise written independently (explicit
    window pooling, einsum-form convolutions, centered-variance BN)."""
    f32, bf16 = jnp.float32, jnp.bfloat16
    xr = jnp.maximum(x_nhwc, 0.0).astype(bf16).astype(f32)
    pooled = jnp.stack(
        [xr[:, 3 * i:3 * i + 5, 3 * j:3 * j + 5, :].sum(axis=(1, 2))
         for i in (0, 1) for j in (0, 1)], axis=1)                     # [N,4,C]
    h1 = jnp.einsum("nwc,ck->nwk", pooled.astype(bf16),
                    (w1 * (1.0 / 25.0)).astype(bf16),
                    preferred_element_type=f32)                        # [N,4,128]
    m1 = h1.mean(axis=(0, 1))
    v1 = ((h1 - m1) ** 2).mean(axis=(0, 1))
    a1 = jnp.maximum((h1 - m1) * (g1[0] * jax.lax.rsqrt(v1 + EPS)) + b1[0], 0.0)
    h2 = jnp.einsum("nwk,wko->no", a1.astype(bf16),
                    w2_hwio.reshape(4, 128, 768).astype(bf16),
                    preferred_element_type=f32)                        # [N,768]
    m2 = h2.mean(axis=0)
    v2 = ((h2 - m2) ** 2).mean(axis=0)
    a2 = jnp.maximum((h2 - m2) * (g2[0] * jax.lax.rsqrt(v2 + EPS)) + b2[0], 0.0)
    return jnp.dot(a2.astype(bf16), wc.astype(bf16),
                   preferred_element_type=f32) + bc[0]


if __name__ == "__main__":
    # Small but multi-tile: batch 16 with tile 8 exercises the cross-tile BN
    # (sum/sumsq) accumulation path.  C=4 (lane-padded to 128), 8x8 input map.
    N, C, H, W, NUM_CLASSES, TILE = 16, 4, 8, 8, 10, 8

    key = jax.random.PRNGKey(0)
    ks = jax.random.split(key, 9)

    # Input in PyTorch layout (NCHW), transposed once to NHWC at the boundary.
    x_nchw = jax.random.normal(ks[0], (N, C, H, W), jnp.float32)
    x_nhwc = jnp.transpose(x_nchw, (0, 2, 3, 1))

    # Deterministic synthetic parameters (nn.Module shapes, pre-transposed to
    # matmul-friendly layouts).
    w1 = 0.1 * jax.random.normal(ks[1], (C, 128), jnp.float32)              # conv1 [128,C,1,1]^T
    g1 = 1.0 + 0.1 * jax.random.normal(ks[2], (1, 128), jnp.float32)        # bn1 gamma
    b1 = 0.1 * jax.random.normal(ks[3], (1, 128), jnp.float32)              # bn1 beta
    w2_hwio = 0.05 * jax.random.normal(ks[4], (2, 2, 128, 768), jnp.float32)  # conv2 HWIO
    g2 = 1.0 + 0.1 * jax.random.normal(ks[5], (1, 768), jnp.float32)        # bn2 gamma
    b2 = 0.1 * jax.random.normal(ks[6], (1, 768), jnp.float32)              # bn2 beta
    wc = 0.05 * jax.random.normal(ks[7], (768, NUM_CLASSES), jnp.float32)   # linear W^T
    bc = 0.05 * jax.random.normal(ks[8], (1, NUM_CLASSES), jnp.float32)     # linear bias

    params = prepare_aux_head_params(w1, g1, b1, w2_hwio, g2, b2, wc, bc)

    out = aux_head_forward(x_nhwc, params, tile=TILE, num_classes=NUM_CLASSES)
    out = jax.block_until_ready(out)

    ref = ref_forward(x_nhwc, w1, g1, b1, w2_hwio, g2, b2, wc, bc)
    assert out.shape == (N, NUM_CLASSES)
    # Both sides share the bf16-operand policy; remaining differences are only
    # f32 accumulation-order effects (amplified slightly by BatchNorm).
    assert jnp.allclose(out, ref, rtol=2e-2, atol=2e-2), (out, ref)

    print("KERNEL_OK")
</pallas_src>

<mosaic_0001>
module attributes {stable_mosaic.version = 11 : i64} {
  func.func @_pool_conv1_kernel(%arg0: i32, %arg1: memref<8x8192xbf16, #tpu.memory_space<vmem>>, %arg2: memref<128x128xbf16, #tpu.memory_space<vmem>>, %arg3: memref<32x128xf32, #tpu.memory_space<vmem>>, %arg4: memref<8x128xf32, #tpu.memory_space<vmem>>) attributes {dimension_semantics = [#tpu.dimension_semantics<parallel>], iteration_bounds = array<i64: 2>, scalar_prefetch = 0 : i64, scratch_operands = 0 : i64, tpu.core_type = #tpu.core_type<tc>, window_params = [{transform_indices = @transform_0, window_bounds = array<i64: 8, 8192>}, {pipeline_mode = #tpu.pipeline_mode<synchronous>, transform_indices = @transform_1, window_bounds = array<i64: 128, 128>}, {transform_indices = @transform_2, window_bounds = array<i64: 32, 128>}, {transform_indices = @transform_3, window_bounds = array<i64: 8, 128>}]} {
    %c0 = arith.constant 0 : index
    %c0_0 = arith.constant 0 : index
    %0 = vector.load %arg1[%c0, %c0_0] : memref<8x8192xbf16, #tpu.memory_space<vmem>>, vector<8x8192xbf16>
    %cst = arith.constant 0.000000e+00 : bf16
    %1 = vector.broadcast %cst : bf16 to vector<8x8192xbf16>
    %2 = arith.maximumf %0, %1 : vector<8x8192xbf16>
    %3 = vector.extract_strided_slice %2 {offsets = [0, 0], sizes = [8, 128], strides = [1, 1]} : vector<8x8192xbf16> to vector<8x128xbf16>
    %4 = arith.extf %3 : vector<8x128xbf16> to vector<8x128xf32>
    %5 = vector.extract_strided_slice %2 {offsets = [0, 128], sizes = [8, 128], strides = [1, 1]} : vector<8x8192xbf16> to vector<8x128xbf16>
    %6 = arith.extf %5 : vector<8x128xbf16> to vector<8x128xf32>
    %7 = arith.addf %4, %6 : vector<8x128xf32>
    %8 = vector.extract_strided_slice %2 {offsets = [0, 256], sizes = [8, 128], strides = [1, 1]} : vector<8x8192xbf16> to vector<8x128xbf16>
    %9 = arith.extf %8 : vector<8x128xbf16> to vector<8x128xf32>
    %10 = arith.addf %7, %9 : vector<8x128xf32>
    %11 = vector.extract_strided_slice %2 {offsets = [0, 384], sizes = [8, 128], strides = [1, 1]} : vector<8x8192xbf16> to vector<8x128xbf16>
    %12 = arith.extf %11 : vector<8x128xbf16> to vector<8x128xf32>
    %13 = arith.addf %10, %12 : vector<8x128xf32>
    %14 = vector.extract_strided_slice %2 {offsets = [0, 512], sizes = [8, 128], strides = [1, 1]} : vector<8x8192xbf16> to vector<8x128xbf16>
    %15 = arith.extf %14 : vector<8x128xbf16> to vector<8x128xf32>
    %16 = arith.addf %13, %15 : vector<8x128xf32>
    %17 = vector.extract_strided_slice %2 {offsets = [0, 1024], sizes = [8, 128], strides = [1, 1]} : vector<8x8192xbf16> to vector<8x128xbf16>
    %18 = arith.extf %17 : vector<8x128xbf16> to vector<8x128xf32>
    %19 = arith.addf %16, %18 : vector<8x128xf32>
    %20 = vector.extract_strided_slice %2 {offsets = [0, 1152], sizes = [8, 128], strides = [1, 1]} : vector<8x8192xbf16> to vector<8x128xbf16>
    %21 = arith.extf %20 : vector<8x128xbf16> to vector<8x128xf32>
    %22 = arith.addf %19, %21 : vector<8x128xf32>
    %23 = vector.extract_strided_slice %2 {offsets = [0, 1280], sizes = [8, 128], strides = [1, 1]} : vector<8x8192xbf16> to vector<8x128xbf16>
    %24 = arith.extf %23 : vector<8x128xbf16> to vector<8x128xf32>
    %25 = arith.addf %22, %24 : vector<8x128xf32>
    %26 = vector.extract_strided_slice %2 {offsets = [0, 1408], sizes = [8, 128], strides = [1, 1]} : vector<8x8192xbf16> to vector<8x128xbf16>
    %27 = arith.extf %26 : vector<8x128xbf16> to vector<8x128xf32>
    %28 = arith.addf %25, %27 : vector<8x128xf32>
    %29 = vector.extract_strided_slice %2 {offsets = [0, 1536], sizes = [8, 128], strides = [1, 1]} : vector<8x8192xbf16> to vector<8x128xbf16>
    %30 = arith.extf %29 : vector<8x128xbf16> to vector<8x128xf32>
    %31 = arith.addf %28, %30 : vector<8x128xf32>
    %32 = vector.extract_strided_slice %2 {offsets = [0, 2048], sizes = [8, 128], strides = [1, 1]} : vector<8x8192xbf16> to vector<8x128xbf16>
    %33 = arith.extf %32 : vector<8x128xbf16> to vector<8x128xf32>
    %34 = arith.addf %31, %33 : vector<8x128xf32>
    %35 = vector.extract_strided_slice %2 {offsets = [0, 2176], sizes = [8, 128], strides = [1, 1]} : vector<8x8192xbf16> to vector<8x128xbf16>
    %36 = arith.extf %35 : vector<8x128xbf16> to vector<8x128xf32>
    %37 = arith.addf %34, %36 : vector<8x128xf32>
    %38 = vector.extract_strided_slice %2 {offsets = [0, 2304], sizes = [8, 128], strides = [1, 1]} : vector<8x8192xbf16> to vector<8x128xbf16>
    %39 = arith.extf %38 : vector<8x128xbf16> to vector<8x128xf32>
    %40 = arith.addf %37, %39 : vector<8x128xf32>
    %41 = vector.extract_strided_slice %2 {offsets = [0, 2432], sizes = [8, 128], strides = [1, 1]} : vector<8x8192xbf16> to vector<8x128xbf16>
    %42 = arith.extf %41 : vector<8x128xbf16> to vector<8x128xf32>
    %43 = arith.addf %40, %42 : vector<8x128xf32>
    %44 = vector.extract_strided_slice %2 {offsets = [0, 2560], sizes = [8, 128], strides = [1, 1]} : vector<8x8192xbf16> to vector<8x128xbf16>
    %45 = arith.extf %44 : vector<8x128xbf16> to vector<8x128xf32>
    %46 = arith.addf %43, %45 : vector<8x128xf32>
    %47 = vector.extract_strided_slice %2 {offsets = [0, 3072], sizes = [8, 128], strides = [1, 1]} : vector<8x8192xbf16> to vector<8x128xbf16>
    %48 = arith.extf %47 : vector<8x128xbf16> to vector<8x128xf32>
    %49 = arith.addf %46, %48 : vector<8x128xf32>
    %50 = vector.extract_strided_slice %2 {offsets = [0, 3200], sizes = [8, 128], strides = [1, 1]} : vector<8x8192xbf16> to vector<8x128xbf16>
    %51 = arith.extf %50 : vector<8x128xbf16> to vector<8x128xf32>
    %52 = arith.addf %49, %51 : vector<8x128xf32>
    %53 = vector.extract_strided_slice %2 {offsets = [0, 3328], sizes = [8, 128], strides = [1, 1]} : vector<8x8192xbf16> to vector<8x128xbf16>
    %54 = arith.extf %53 : vector<8x128xbf16> to vector<8x128xf32>
    %55 = arith.addf %52, %54 : vector<8x128xf32>
    %56 = vector.extract_strided_slice %2 {offsets = [0, 3456], sizes = [8, 128], strides = [1, 1]} : vector<8x8192xbf16> to vector<8x128xbf16>
    %57 = arith.extf %56 : vector<8x128xbf16> to vector<8x128xf32>
    %58 = arith.addf %55, %57 : vector<8x128xf32>
    %59 = vector.extract_strided_slice %2 {offsets = [0, 3584], sizes = [8, 128], strides = [1, 1]} : vector<8x8192xbf16> to vector<8x128xbf16>
    %60 = arith.extf %59 : vector<8x128xbf16> to vector<8x128xf32>
    %61 = arith.addf %58, %60 : vector<8x128xf32>
    %62 = vector.extract_strided_slice %2 {offsets = [0, 4096], sizes = [8, 128], strides = [1, 1]} : vector<8x8192xbf16> to vector<8x128xbf16>
    %63 = arith.extf %62 : vector<8x128xbf16> to vector<8x128xf32>
    %64 = arith.addf %61, %63 : vector<8x128xf32>
    %65 = vector.extract_strided_slice %2 {offsets = [0, 4224], sizes = [8, 128], strides = [1, 1]} : vector<8x8192xbf16> to vector<8x128xbf16>
    %66 = arith.extf %65 : vector<8x128xbf16> to vector<8x128xf32>
    %67 = arith.addf %64, %66 : vector<8x128xf32>
    %68 = vector.extract_strided_slice %2 {offsets = [0, 4352], sizes = [8, 128], strides = [1, 1]} : vector<8x8192xbf16> to vector<8x128xbf16>
    %69 = arith.extf %68 : vector<8x128xbf16> to vector<8x128xf32>
    %70 = arith.addf %67, %69 : vector<8x128xf32>
    %71 = vector.extract_strided_slice %2 {offsets = [0, 4480], sizes = [8, 128], strides = [1, 1]} : vector<8x8192xbf16> to vector<8x128xbf16>
    %72 = arith.extf %71 : vector<8x128xbf16> to vector<8x128xf32>
    %73 = arith.addf %70, %72 : vector<8x128xf32>
    %74 = vector.extract_strided_slice %2 {offsets = [0, 4608], sizes = [8, 128], strides = [1, 1]} : vector<8x8192xbf16> to vector<8x128xbf16>
    %75 = arith.extf %74 : vector<8x128xbf16> to vector<8x128xf32>
    %76 = arith.addf %73, %75 : vector<8x128xf32>
    %77 = vector.extract_strided_slice %2 {offsets = [0, 384], sizes = [8, 128], strides = [1, 1]} : vector<8x8192xbf16> to vector<8x128xbf16>
    %78 = arith.extf %77 : vector<8x128xbf16> to vector<8x128xf32>
    %79 = vector.extract_strided_slice %2 {offsets = [0, 512], sizes = [8, 128], strides = [1, 1]} : vector<8x8192xbf16> to vector<8x128xbf16>
    %80 = arith.extf %79 : vector<8x128xbf16> to vector<8x128xf32>
    %81 = arith.addf %78, %80 : vector<8x128xf32>
    %82 = vector.extract_strided_slice %2 {offsets = [0, 640], sizes = [8, 128], strides = [1, 1]} : vector<8x8192xbf16> to vector<8x128xbf16>
    %83 = arith.extf %82 : vector<8x128xbf16> to vector<8x128xf32>
    %84 = arith.addf %81, %83 : vector<8x128xf32>
    %85 = vector.extract_strided_slice %2 {offsets = [0, 768], sizes = [8, 128], strides = [1, 1]} : vector<8x8192xbf16> to vector<8x128xbf16>
    %86 = arith.extf %85 : vector<8x128xbf16> to vector<8x128xf32>
    %87 = arith.addf %84, %86 : vector<8x128xf32>
    %88 = vector.extract_strided_slice %2 {offsets = [0, 896], sizes = [8, 128], strides = [1, 1]} : vector<8x8192xbf16> to vector<8x128xbf16>
    %89 = arith.extf %88 : vector<8x128xbf16> to vector<8x128xf32>
    %90 = arith.addf %87, %89 : vector<8x128xf32>
    %91 = vector.extract_strided_slice %2 {offsets = [0, 1408], sizes = [8, 128], strides = [1, 1]} : vector<8x8192xbf16> to vector<8x128xbf16>
    %92 = arith.extf %91 : vector<8x128xbf16> to vector<8x128xf32>
    %93 = arith.addf %90, %92 : vector<8x128xf32>
    %94 = vector.extract_strided_slice %2 {offsets = [0, 1536], sizes = [8, 128], strides = [1, 1]} : vector<8x8192xbf16> to vector<8x128xbf16>
    %95 = arith.extf %94 : vector<8x128xbf16> to vector<8x128xf32>
    %96 = arith.addf %93, %95 : vector<8x128xf32>
    %97 = vector.extract_strided_slice %2 {offsets = [0, 1664], sizes = [8, 128], strides = [1, 1]} : vector<8x8192xbf16> to vector<8x128xbf16>
    %98 = arith.extf %97 : vector<8x128xbf16> to vector<8x128xf32>
    %99 = arith.addf %96, %98 : vector<8x128xf32>
    %100 = vector.extract_strided_slice %2 {offsets = [0, 1792], sizes = [8, 128], strides = [1, 1]} : vector<8x8192xbf16> to vector<8x128xbf16>
    %101 = arith.extf %100 : vector<8x128xbf16> to vector<8x128xf32>
    %102 = arith.addf %99, %101 : vector<8x128xf32>
    %103 = vector.extract_strided_slice %2 {offsets = [0, 1920], sizes = [8, 128], strides = [1, 1]} : vector<8x8192xbf16> to vector<8x128xbf16>
    %104 = arith.extf %103 : vector<8x128xbf16> to vector<8x128xf32>
    %105 = arith.addf %102, %104 : vector<8x128xf32>
    %106 = vector.extract_strided_slice %2 {offsets = [0, 2432], sizes = [8, 128], strides = [1, 1]} : vector<8x8192xbf16> to vector<8x128xbf16>
    %107 = arith.extf %106 : vector<8x128xbf16> to vector<8x128xf32>
    %108 = arith.addf %105, %107 : vector<8x128xf32>
    %109 = vector.extract_strided_slice %2 {offsets = [0, 2560], sizes = [8, 128], strides = [1, 1]} : vector<8x8192xbf16> to vector<8x128xbf16>
    %110 = arith.extf %109 : vector<8x128xbf16> to vector<8x128xf32>
    %111 = arith.addf %108, %110 : vector<8x128xf32>
    %112 = vector.extract_strided_slice %2 {offsets = [0, 2688], sizes = [8, 128], strides = [1, 1]} : vector<8x8192xbf16> to vector<8x128xbf16>
    %113 = arith.extf %112 : vector<8x128xbf16> to vector<8x128xf32>
    %114 = arith.addf %111, %113 : vector<8x128xf32>
    %115 = vector.extract_strided_slice %2 {offsets = [0, 2816], sizes = [8, 128], strides = [1, 1]} : vector<8x8192xbf16> to vector<8x128xbf16>
    %116 = arith.extf %115 : vector<8x128xbf16> to vector<8x128xf32>
    %117 = arith.addf %114, %116 : vector<8x128xf32>
    %118 = vector.extract_strided_slice %2 {offsets = [0, 2944], sizes = [8, 128], strides = [1, 1]} : vector<8x8192xbf16> to vector<8x128xbf16>
    %119 = arith.extf %118 : vector<8x128xbf16> to vector<8x128xf32>
    %120 = arith.addf %117, %119 : vector<8x128xf32>
    %121 = vector.extract_strided_slice %2 {offsets = [0, 3456], sizes = [8, 128], strides = [1, 1]} : vector<8x8192xbf16> to vector<8x128xbf16>
    %122 = arith.extf %121 : vector<8x128xbf16> to vector<8x128xf32>
    %123 = arith.addf %120, %122 : vector<8x128xf32>
    %124 = vector.extract_strided_slice %2 {offsets = [0, 3584], sizes = [8, 128], strides = [1, 1]} : vector<8x8192xbf16> to vector<8x128xbf16>
    %125 = arith.extf %124 : vector<8x128xbf16> to vector<8x128xf32>
    %126 = arith.addf %123, %125 : vector<8x128xf32>
    %127 = vector.extract_strided_slice %2 {offsets = [0, 3712], sizes = [8, 128], strides = [1, 1]} : vector<8x8192xbf16> to vector<8x128xbf16>
    %128 = arith.extf %127 : vector<8x128xbf16> to vector<8x128xf32>
    %129 = arith.addf %126, %128 : vector<8x128xf32>
    %130 = vector.extract_strided_slice %2 {offsets = [0, 3840], sizes = [8, 128], strides = [1, 1]} : vector<8x8192xbf16> to vector<8x128xbf16>
    %131 = arith.extf %130 : vector<8x128xbf16> to vector<8x128xf32>
    %132 = arith.addf %129, %131 : vector<8x128xf32>
    %133 = vector.extract_strided_slice %2 {offsets = [0, 3968], sizes = [8, 128], strides = [1, 1]} : vector<8x8192xbf16> to vector<8x128xbf16>
    %134 = arith.extf %133 : vector<8x128xbf16> to vector<8x128xf32>
    %135 = arith.addf %132, %134 : vector<8x128xf32>
    %136 = vector.extract_strided_slice %2 {offsets = [0, 4480], sizes = [8, 128], strides = [1, 1]} : vector<8x8192xbf16> to vector<8x128xbf16>
    %137 = arith.extf %136 : vector<8x128xbf16> to vector<8x128xf32>
    %138 = arith.addf %135, %137 : vector<8x128xf32>
    %139 = vector.extract_strided_slice %2 {offsets = [0, 4608], sizes = [8, 128], strides = [1, 1]} : vector<8x8192xbf16> to vector<8x128xbf16>
    %140 = arith.extf %139 : vector<8x128xbf16> to vector<8x128xf32>
    %141 = arith.addf %138, %140 : vector<8x128xf32>
    %142 = vector.extract_strided_slice %2 {offsets = [0, 4736], sizes = [8, 128], strides = [1, 1]} : vector<8x8192xbf16> to vector<8x128xbf16>
    %143 = arith.extf %142 : vector<8x128xbf16> to vector<8x128xf32>
    %144 = arith.addf %141, %143 : vector<8x128xf32>
    %145 = vector.extract_strided_slice %2 {offsets = [0, 4864], sizes = [8, 128], strides = [1, 1]} : vector<8x8192xbf16> to vector<8x128xbf16>
    %146 = arith.extf %145 : vector<8x128xbf16> to vector<8x128xf32>
    %147 = arith.addf %144, %146 : vector<8x128xf32>
    %148 = vector.extract_strided_slice %2 {offsets = [0, 4992], sizes = [8, 128], strides = [1, 1]} : vector<8x8192xbf16> to vector<8x128xbf16>
    %149 = arith.extf %148 : vector<8x128xbf16> to vector<8x128xf32>
    %150 = arith.addf %147, %149 : vector<8x128xf32>
    %151 = vector.extract_strided_slice %2 {offsets = [0, 3072], sizes = [8, 128], strides = [1, 1]} : vector<8x8192xbf16> to vector<8x128xbf16>
    %152 = arith.extf %151 : vector<8x128xbf16> to vector<8x128xf32>
    %153 = vector.extract_strided_slice %2 {offsets = [0, 3200], sizes = [8, 128], strides = [1, 1]} : vector<8x8192xbf16> to vector<8x128xbf16>
    %154 = arith.extf %153 : vector<8x128xbf16> to vector<8x128xf32>
    %155 = arith.addf %152, %154 : vector<8x128xf32>
    %156 = vector.extract_strided_slice %2 {offsets = [0, 3328], sizes = [8, 128], strides = [1, 1]} : vector<8x8192xbf16> to vector<8x128xbf16>
    %157 = arith.extf %156 : vector<8x128xbf16> to vector<8x128xf32>
    %158 = arith.addf %155, %157 : vector<8x128xf32>
    %159 = vector.extract_strided_slice %2 {offsets = [0, 3456], sizes = [8, 128], strides = [1, 1]} : vector<8x8192xbf16> to vector<8x128xbf16>
    %160 = arith.extf %159 : vector<8x128xbf16> to vector<8x128xf32>
    %161 = arith.addf %158, %160 : vector<8x128xf32>
    %162 = vector.extract_strided_slice %2 {offsets = [0, 3584], sizes = [8, 128], strides = [1, 1]} : vector<8x8192xbf16> to vector<8x128xbf16>
    %163 = arith.extf %162 : vector<8x128xbf16> to vector<8x128xf32>
    %164 = arith.addf %161, %163 : vector<8x128xf32>
    %165 = vector.extract_strided_slice %2 {offsets = [0, 4096], sizes = [8, 128], strides = [1, 1]} : vector<8x8192xbf16> to vector<8x128xbf16>
    %166 = arith.extf %165 : vector<8x128xbf16> to vector<8x128xf32>
    %167 = arith.addf %164, %166 : vector<8x128xf32>
    %168 = vector.extract_strided_slice %2 {offsets = [0, 4224], sizes = [8, 128], strides = [1, 1]} : vector<8x8192xbf16> to vector<8x128xbf16>
    %169 = arith.extf %168 : vector<8x128xbf16> to vector<8x128xf32>
    %170 = arith.addf %167, %169 : vector<8x128xf32>
    %171 = vector.extract_strided_slice %2 {offsets = [0, 4352], sizes = [8, 128], strides = [1, 1]} : vector<8x8192xbf16> to vector<8x128xbf16>
    %172 = arith.extf %171 : vector<8x128xbf16> to vector<8x128xf32>
    %173 = arith.addf %170, %172 : vector<8x128xf32>
    %174 = vector.extract_strided_slice %2 {offsets = [0, 4480], sizes = [8, 128], strides = [1, 1]} : vector<8x8192xbf16> to vector<8x128xbf16>
    %175 = arith.extf %174 : vector<8x128xbf16> to vector<8x128xf32>
    %176 = arith.addf %173, %175 : vector<8x128xf32>
    %177 = vector.extract_strided_slice %2 {offsets = [0, 4608], sizes = [8, 128], strides = [1, 1]} : vector<8x8192xbf16> to vector<8x128xbf16>
    %178 = arith.extf %177 : vector<8x128xbf16> to vector<8x128xf32>
    %179 = arith.addf %176, %178 : vector<8x128xf32>
    %180 = vector.extract_strided_slice %2 {offsets = [0, 5120], sizes = [8, 128], strides = [1, 1]} : vector<8x8192xbf16> to vector<8x128xbf16>
    %181 = arith.extf %180 : vector<8x128xbf16> to vector<8x128xf32>
    %182 = arith.addf %179, %181 : vector<8x128xf32>
    %183 = vector.extract_strided_slice %2 {offsets = [0, 5248], sizes = [8, 128], strides = [1, 1]} : vector<8x8192xbf16> to vector<8x128xbf16>
    %184 = arith.extf %183 : vector<8x128xbf16> to vector<8x128xf32>
    %185 = arith.addf %182, %184 : vector<8x128xf32>
    %186 = vector.extract_strided_slice %2 {offsets = [0, 5376], sizes = [8, 128], strides = [1, 1]} : vector<8x8192xbf16> to vector<8x128xbf16>
    %187 = arith.extf %186 : vector<8x128xbf16> to vector<8x128xf32>
    %188 = arith.addf %185, %187 : vector<8x128xf32>
    %189 = vector.extract_strided_slice %2 {offsets = [0, 5504], sizes = [8, 128], strides = [1, 1]} : vector<8x8192xbf16> to vector<8x128xbf16>
    %190 = arith.extf %189 : vector<8x128xbf16> to vector<8x128xf32>
    %191 = arith.addf %188, %190 : vector<8x128xf32>
    %192 = vector.extract_strided_slice %2 {offsets = [0, 5632], sizes = [8, 128], strides = [1, 1]} : vector<8x8192xbf16> to vector<8x128xbf16>
    %193 = arith.extf %192 : vector<8x128xbf16> to vector<8x128xf32>
    %194 = arith.addf %191, %193 : vector<8x128xf32>
    %195 = vector.extract_strided_slice %2 {offsets = [0, 6144], sizes = [8, 128], strides = [1, 1]} : vector<8x8192xbf16> to vector<8x128xbf16>
    %196 = arith.extf %195 : vector<8x128xbf16> to vector<8x128xf32>
    %197 = arith.addf %194, %196 : vector<8x128xf32>
    %198 = vector.extract_strided_slice %2 {offsets = [0, 6272], sizes = [8, 128], strides = [1, 1]} : vector<8x8192xbf16> to vector<8x128xbf16>
    %199 = arith.extf %198 : vector<8x128xbf16> to vector<8x128xf32>
    %200 = arith.addf %197, %199 : vector<8x128xf32>
    %201 = vector.extract_strided_slice %2 {offsets = [0, 6400], sizes = [8, 128], strides = [1, 1]} : vector<8x8192xbf16> to vector<8x128xbf16>
    %202 = arith.extf %201 : vector<8x128xbf16> to vector<8x128xf32>
    %203 = arith.addf %200, %202 : vector<8x128xf32>
    %204 = vector.extract_strided_slice %2 {offsets = [0, 6528], sizes = [8, 128], strides = [1, 1]} : vector<8x8192xbf16> to vector<8x128xbf16>
    %205 = arith.extf %204 : vector<8x128xbf16> to vector<8x128xf32>
    %206 = arith.addf %203, %205 : vector<8x128xf32>
    %207 = vector.extract_strided_slice %2 {offsets = [0, 6656], sizes = [8, 128], strides = [1, 1]} : vector<8x8192xbf16> to vector<8x128xbf16>
    %208 = arith.extf %207 : vector<8x128xbf16> to vector<8x128xf32>
    %209 = arith.addf %206, %208 : vector<8x128xf32>
    %210 = vector.extract_strided_slice %2 {offsets = [0, 7168], sizes = [8, 128], strides = [1, 1]} : vector<8x8192xbf16> to vector<8x128xbf16>
    %211 = arith.extf %210 : vector<8x128xbf16> to vector<8x128xf32>
    %212 = arith.addf %209, %211 : vector<8x128xf32>
    %213 = vector.extract_strided_slice %2 {offsets = [0, 7296], sizes = [8, 128], strides = [1, 1]} : vector<8x8192xbf16> to vector<8x128xbf16>
    %214 = arith.extf %213 : vector<8x128xbf16> to vector<8x128xf32>
    %215 = arith.addf %212, %214 : vector<8x128xf32>
    %216 = vector.extract_strided_slice %2 {offsets = [0, 7424], sizes = [8, 128], strides = [1, 1]} : vector<8x8192xbf16> to vector<8x128xbf16>
    %217 = arith.extf %216 : vector<8x128xbf16> to vector<8x128xf32>
    %218 = arith.addf %215, %217 : vector<8x128xf32>
    %219 = vector.extract_strided_slice %2 {offsets = [0, 7552], sizes = [8, 128], strides = [1, 1]} : vector<8x8192xbf16> to vector<8x128xbf16>
    %220 = arith.extf %219 : vector<8x128xbf16> to vector<8x128xf32>
    %221 = arith.addf %218, %220 : vector<8x128xf32>
    %222 = vector.extract_strided_slice %2 {offsets = [0, 7680], sizes = [8, 128], strides = [1, 1]} : vector<8x8192xbf16> to vector<8x128xbf16>
    %223 = arith.extf %222 : vector<8x128xbf16> to vector<8x128xf32>
    %224 = arith.addf %221, %223 : vector<8x128xf32>
    %225 = vector.extract_strided_slice %2 {offsets = [0, 3456], sizes = [8, 128], strides = [1, 1]} : vector<8x8192xbf16> to vector<8x128xbf16>
    %226 = arith.extf %225 : vector<8x128xbf16> to vector<8x128xf32>
    %227 = vector.extract_strided_slice %2 {offsets = [0, 3584], sizes = [8, 128], strides = [1, 1]} : vector<8x8192xbf16> to vector<8x128xbf16>
    %228 = arith.extf %227 : vector<8x128xbf16> to vector<8x128xf32>
    %229 = arith.addf %226, %228 : vector<8x128xf32>
    %230 = vector.extract_strided_slice %2 {offsets = [0, 3712], sizes = [8, 128], strides = [1, 1]} : vector<8x8192xbf16> to vector<8x128xbf16>
    %231 = arith.extf %230 : vector<8x128xbf16> to vector<8x128xf32>
    %232 = arith.addf %229, %231 : vector<8x128xf32>
    %233 = vector.extract_strided_slice %2 {offsets = [0, 3840], sizes = [8, 128], strides = [1, 1]} : vector<8x8192xbf16> to vector<8x128xbf16>
    %234 = arith.extf %233 : vector<8x128xbf16> to vector<8x128xf32>
    %235 = arith.addf %232, %234 : vector<8x128xf32>
    %236 = vector.extract_strided_slice %2 {offsets = [0, 3968], sizes = [8, 128], strides = [1, 1]} : vector<8x8192xbf16> to vector<8x128xbf16>
    %237 = arith.extf %236 : vector<8x128xbf16> to vector<8x128xf32>
    %238 = arith.addf %235, %237 : vector<8x128xf32>
    %239 = vector.extract_strided_slice %2 {offsets = [0, 4480], sizes = [8, 128], strides = [1, 1]} : vector<8x8192xbf16> to vector<8x128xbf16>
    %240 = arith.extf %239 : vector<8x128xbf16> to vector<8x128xf32>
    %241 = arith.addf %238, %240 : vector<8x128xf32>
    %242 = vector.extract_strided_slice %2 {offsets = [0, 4608], sizes = [8, 128], strides = [1, 1]} : vector<8x8192xbf16> to vector<8x128xbf16>
    %243 = arith.extf %242 : vector<8x128xbf16> to vector<8x128xf32>
    %244 = arith.addf %241, %243 : vector<8x128xf32>
    %245 = vector.extract_strided_slice %2 {offsets = [0, 4736], sizes = [8, 128], strides = [1, 1]} : vector<8x8192xbf16> to vector<8x128xbf16>
    %246 = arith.extf %245 : vector<8x128xbf16> to vector<8x128xf32>
    %247 = arith.addf %244, %246 : vector<8x128xf32>
    %248 = vector.extract_strided_slice %2 {offsets = [0, 4864], sizes = [8, 128], strides = [1, 1]} : vector<8x8192xbf16> to vector<8x128xbf16>
    %249 = arith.extf %248 : vector<8x128xbf16> to vector<8x128xf32>
    %250 = arith.addf %247, %249 : vector<8x128xf32>
    %251 = vector.extract_strided_slice %2 {offsets = [0, 4992], sizes = [8, 128], strides = [1, 1]} : vector<8x8192xbf16> to vector<8x128xbf16>
    %252 = arith.extf %251 : vector<8x128xbf16> to vector<8x128xf32>
    %253 = arith.addf %250, %252 : vector<8x128xf32>
    %254 = vector.extract_strided_slice %2 {offsets = [0, 5504], sizes = [8, 128], strides = [1, 1]} : vector<8x8192xbf16> to vector<8x128xbf16>
    %255 = arith.extf %254 : vector<8x128xbf16> to vector<8x128xf32>
    %256 = arith.addf %253, %255 : vector<8x128xf32>
    %257 = vector.extract_strided_slice %2 {offsets = [0, 5632], sizes = [8, 128], strides = [1, 1]} : vector<8x8192xbf16> to vector<8x128xbf16>
    %258 = arith.extf %257 : vector<8x128xbf16> to vector<8x128xf32>
    %259 = arith.addf %256, %258 : vector<8x128xf32>
    %260 = vector.extract_strided_slice %2 {offsets = [0, 5760], sizes = [8, 128], strides = [1, 1]} : vector<8x8192xbf16> to vector<8x128xbf16>
    %261 = arith.extf %260 : vector<8x128xbf16> to vector<8x128xf32>
    %262 = arith.addf %259, %261 : vector<8x128xf32>
    %263 = vector.extract_strided_slice %2 {offsets = [0, 5888], sizes = [8, 128], strides = [1, 1]} : vector<8x8192xbf16> to vector<8x128xbf16>
    %264 = arith.extf %263 : vector<8x128xbf16> to vector<8x128xf32>
    %265 = arith.addf %262, %264 : vector<8x128xf32>
    %266 = vector.extract_strided_slice %2 {offsets = [0, 6016], sizes = [8, 128], strides = [1, 1]} : vector<8x8192xbf16> to vector<8x128xbf16>
    %267 = arith.extf %266 : vector<8x128xbf16> to vector<8x128xf32>
    %268 = arith.addf %265, %267 : vector<8x128xf32>
    %269 = vector.extract_strided_slice %2 {offsets = [0, 6528], sizes = [8, 128], strides = [1, 1]} : vector<8x8192xbf16> to vector<8x128xbf16>
    %270 = arith.extf %269 : vector<8x128xbf16> to vector<8x128xf32>
    %271 = arith.addf %268, %270 : vector<8x128xf32>
    %272 = vector.extract_strided_slice %2 {offsets = [0, 6656], sizes = [8, 128], strides = [1, 1]} : vector<8x8192xbf16> to vector<8x128xbf16>
    %273 = arith.extf %272 : vector<8x128xbf16> to vector<8x128xf32>
    %274 = arith.addf %271, %273 : vector<8x128xf32>
    %275 = vector.extract_strided_slice %2 {offsets = [0, 6784], sizes = [8, 128], strides = [1, 1]} : vector<8x8192xbf16> to vector<8x128xbf16>
    %276 = arith.extf %275 : vector<8x128xbf16> to vector<8x128xf32>
    %277 = arith.addf %274, %276 : vector<8x128xf32>
    %278 = vector.extract_strided_slice %2 {offsets = [0, 6912], sizes = [8, 128], strides = [1, 1]} : vector<8x8192xbf16> to vector<8x128xbf16>
    %279 = arith.extf %278 : vector<8x128xbf16> to vector<8x128xf32>
    %280 = arith.addf %277, %279 : vector<8x128xf32>
    %281 = vector.extract_strided_slice %2 {offsets = [0, 7040], sizes = [8, 128], strides = [1, 1]} : vector<8x8192xbf16> to vector<8x128xbf16>
    %282 = arith.extf %281 : vector<8x128xbf16> to vector<8x128xf32>
    %283 = arith.addf %280, %282 : vector<8x128xf32>
    %284 = vector.extract_strided_slice %2 {offsets = [0, 7552], sizes = [8, 128], strides = [1, 1]} : vector<8x8192xbf16> to vector<8x128xbf16>
    %285 = arith.extf %284 : vector<8x128xbf16> to vector<8x128xf32>
    %286 = arith.addf %283, %285 : vector<8x128xf32>
    %287 = vector.extract_strided_slice %2 {offsets = [0, 7680], sizes = [8, 128], strides = [1, 1]} : vector<8x8192xbf16> to vector<8x128xbf16>
    %288 = arith.extf %287 : vector<8x128xbf16> to vector<8x128xf32>
    %289 = arith.addf %286, %288 : vector<8x128xf32>
    %290 = vector.extract_strided_slice %2 {offsets = [0, 7808], sizes = [8, 128], strides = [1, 1]} : vector<8x8192xbf16> to vector<8x128xbf16>
    %291 = arith.extf %290 : vector<8x128xbf16> to vector<8x128xf32>
    %292 = arith.addf %289, %291 : vector<8x128xf32>
    %293 = vector.extract_strided_slice %2 {offsets = [0, 7936], sizes = [8, 128], strides = [1, 1]} : vector<8x8192xbf16> to vector<8x128xbf16>
    %294 = arith.extf %293 : vector<8x128xbf16> to vector<8x128xf32>
    %295 = arith.addf %292, %294 : vector<8x128xf32>
    %296 = vector.extract_strided_slice %2 {offsets = [0, 8064], sizes = [8, 128], strides = [1, 1]} : vector<8x8192xbf16> to vector<8x128xbf16>
    %297 = arith.extf %296 : vector<8x128xbf16> to vector<8x128xf32>
    %298 = arith.addf %295, %297 : vector<8x128xf32>
    %299 = tpu.concatenate %76, %150, %224, %298 in 0 : vector<8x128xf32>, vector<8x128xf32>, vector<8x128xf32>, vector<8x128xf32> -> vector<32x128xf32>
    %300 = arith.truncf %299 : vector<32x128xf32> to vector<32x128xbf16>
    %c0_1 = arith.constant 0 : index
    %c0_2 = arith.constant 0 : index
    %301 = vector.load %arg2[%c0_1, %c0_2] : memref<128x128xbf16, #tpu.memory_space<vmem>>, vector<128x128xbf16>
    %cst_3 = arith.constant dense<0.000000e+00> : vector<32x128xf32>
    %302 = tpu.matmul %300, %301, %cst_3 {dimension_numbers = #tpu.dot_dimension_numbers<[1], [0], [0], [1], [0, 0, 1, 1], [], []>} : vector<32x128xbf16>, vector<128x128xbf16>, vector<32x128xf32> -> vector<32x128xf32>
    %c0_4 = arith.constant 0 : index
    %c0_5 = arith.constant 0 : index
    %303 = vector.load %arg3[%c0_4, %c0_5] : memref<32x128xf32, #tpu.memory_space<vmem>>, vector<32x128xf32>
    tpu.vector_store %arg3[%c0_4, %c0_5], %302 {strides = array<i32>} : memref<32x128xf32, #tpu.memory_space<vmem>>, vector<32x128xf32>,
    %cst_6 = arith.constant dense<0.000000e+00> : vector<128xf32>
    %304 = vector.multi_reduction <add>, %302, %cst_6 [0] : vector<32x128xf32> to vector<128xf32>
    %305 = vector.shape_cast %304 : vector<128xf32> to vector<1x128xf32>
    %306 = arith.mulf %302, %302 : vector<32x128xf32>
    %cst_7 = arith.constant dense<0.000000e+00> : vector<128xf32>
    %307 = vector.multi_reduction <add>, %306, %cst_7 [0] : vector<32x128xf32> to vector<128xf32>
    %308 = vector.shape_cast %307 : vector<128xf32> to vector<1x128xf32>
    %cst_8 = arith.constant 0.000000e+00 : f32
    %309 = vector.broadcast %cst_8 : f32 to vector<6x128xf32>
    %310 = tpu.concatenate %305, %308, %309 in 0 : vector<1x128xf32>, vector<1x128xf32>, vector<6x128xf32> -> vector<8x128xf32>
    %c0_9 = arith.constant 0 : index
    %c0_10 = arith.constant 0 : index
    %311 = vector.load %arg4[%c0_9, %c0_10] : memref<8x128xf32, #tpu.memory_space<vmem>>, vector<8x128xf32>
    tpu.vector_store %arg4[%c0_9, %c0_10], %310 {strides = array<i32>} : memref<8x128xf32, #tpu.memory_space<vmem>>, vector<8x128xf32>,
    return
  }
  func.func @transform_0(%arg0: i32) -> (i32, i32) {
    %c0_i32 = arith.constant 0 : i32
    %c0_i32_0 = arith.constant 0 : i32
    return %arg0, %c0_i32 : i32, i32
  }
  func.func @transform_1(%arg0: i32) -> (i32, i32) {
    %c0_i32 = arith.constant 0 : i32
    %c0_i32_0 = arith.constant 0 : i32
    %c0_i32_1 = arith.constant 0 : i32
    return %c0_i32, %c0_i32_0 : i32, i32
  }
  func.func @transform_2(%arg0: i32) -> (i32, i32) {
    %c0_i32 = arith.constant 0 : i32
    %c0_i32_0 = arith.constant 0 : i32
    return %arg0, %c0_i32 : i32, i32
  }
  func.func @transform_3(%arg0: i32) -> (i32, i32) {
    %c0_i32 = arith.constant 0 : i32
    %c0_i32_0 = arith.constant 0 : i32
    return %arg0, %c0_i32 : i32, i32
  }
}

module attributes {stable_mosaic.version = 11 : i64} {
  func.func @_conv2_kernel(%arg0: i32, %arg1: memref<32x128xf32, #tpu.memory_space<vmem>>, %arg2: memref<1x128xf32, #tpu.memory_space<vmem>>, %arg3: memref<1x128xf32, #tpu.memory_space<vmem>>, %arg4: memref<512x768xbf16, #tpu.memory_space<vmem>>, %arg5: memref<8x768xf32, #tpu.memory_space<vmem>>, %arg6: memref<8x768xf32, #tpu.memory_space<vmem>>) attributes {dimension_semantics = [#tpu.dimension_semantics<parallel>], iteration_bounds = array<i64: 2>, scalar_prefetch = 0 : i64, scratch_operands = 0 : i64, tpu.core_type = #tpu.core_type<tc>, window_params = [{transform_indices = @transform_0, window_bounds = array<i64: 32, 128>}, {pipeline_mode = #tpu.pipeline_mode<synchronous>, transform_indices = @transform_1, window_bounds = array<i64: 1, 128>}, {pipeline_mode = #tpu.pipeline_mode<synchronous>, transform_indices = @transform_2, window_bounds = array<i64: 1, 128>}, {pipeline_mode = #tpu.pipeline_mode<synchronous>, transform_indices = @transform_3, window_bounds = array<i64: 512, 768>}, {transform_indices = @transform_4, window_bounds = array<i64: 8, 768>}, {transform_indices = @transform_5, window_bounds = array<i64: 8, 768>}]} {
    %c0 = arith.constant 0 : index
    %c0_0 = arith.constant 0 : index
    %0 = vector.load %arg1[%c0, %c0_0] : memref<32x128xf32, #tpu.memory_space<vmem>>, vector<32x128xf32>
    %c0_1 = arith.constant 0 : index
    %c0_2 = arith.constant 0 : index
    %1 = vector.load %arg2[%c0_1, %c0_2] : memref<1x128xf32, #tpu.memory_space<vmem>>, vector<1x128xf32>
    %2 = vector.broadcast %1 : vector<1x128xf32> to vector<32x128xf32>
    %3 = arith.mulf %0, %2 : vector<32x128xf32>
    %c0_3 = arith.constant 0 : index
    %c0_4 = arith.constant 0 : index
    %4 = vector.load %arg3[%c0_3, %c0_4] : memref<1x128xf32, #tpu.memory_space<vmem>>, vector<1x128xf32>
    %5 = vector.broadcast %4 : vector<1x128xf32> to vector<32x128xf32>
    %6 = arith.addf %3, %5 : vector<32x128xf32>
    %cst = arith.constant 0.000000e+00 : f32
    %7 = vector.broadcast %cst : f32 to vector<32x128xf32>
    %8 = arith.maximumf %6, %7 : vector<32x128xf32>
    %9 = vector.extract_strided_slice %8 {offsets = [0, 0], sizes = [8, 128], strides = [1, 1]} : vector<32x128xf32> to vector<8x128xf32>
    %10 = vector.extract_strided_slice %8 {offsets = [8, 0], sizes = [8, 128], strides = [1, 1]} : vector<32x128xf32> to vector<8x128xf32>
    %11 = vector.extract_strided_slice %8 {offsets = [16, 0], sizes = [8, 128], strides = [1, 1]} : vector<32x128xf32> to vector<8x128xf32>
    %12 = vector.extract_strided_slice %8 {offsets = [24, 0], sizes = [8, 128], strides = [1, 1]} : vector<32x128xf32> to vector<8x128xf32>
    %13 = tpu.concatenate %9, %10, %11, %12 in 1 : vector<8x128xf32>, vector<8x128xf32>, vector<8x128xf32>, vector<8x128xf32> -> vector<8x512xf32>
    %14 = arith.truncf %13 : vector<8x512xf32> to vector<8x512xbf16>
    %c0_5 = arith.constant 0 : index
    %c0_6 = arith.constant 0 : index
    %15 = vector.load %arg4[%c0_5, %c0_6] : memref<512x768xbf16, #tpu.memory_space<vmem>>, vector<512x768xbf16>
    %cst_7 = arith.constant dense<0.000000e+00> : vector<8x768xf32>
    %16 = tpu.matmul %14, %15, %cst_7 {dimension_numbers = #tpu.dot_dimension_numbers<[1], [0], [0], [1], [0, 0, 1, 1], [], []>} : vector<8x512xbf16>, vector<512x768xbf16>, vector<8x768xf32> -> vector<8x768xf32>
    %c0_8 = arith.constant 0 : index
    %c0_9 = arith.constant 0 : index
    %17 = vector.load %arg5[%c0_8, %c0_9] : memref<8x768xf32, #tpu.memory_space<vmem>>, vector<8x768xf32>
    tpu.vector_store %arg5[%c0_8, %c0_9], %16 {strides = array<i32>} : memref<8x768xf32, #tpu.memory_space<vmem>>, vector<8x768xf32>,
    %cst_10 = arith.constant dense<0.000000e+00> : vector<768xf32>
    %18 = vector.multi_reduction <add>, %16, %cst_10 [0] : vector<8x768xf32> to vector<768xf32>
    %19 = vector.shape_cast %18 : vector<768xf32> to vector<1x768xf32>
    %20 = arith.mulf %16, %16 : vector<8x768xf32>
    %cst_11 = arith.constant dense<0.000000e+00> : vector<768xf32>
    %21 = vector.multi_reduction <add>, %20, %cst_11 [0] : vector<8x768xf32> to vector<768xf32>
    %22 = vector.shape_cast %21 : vector<768xf32> to vector<1x768xf32>
    %cst_12 = arith.constant 0.000000e+00 : f32
    %23 = vector.broadcast %cst_12 : f32 to vector<6x768xf32>
    %24 = tpu.concatenate %19, %22, %23 in 0 : vector<1x768xf32>, vector<1x768xf32>, vector<6x768xf32> -> vector<8x768xf32>
    %c0_13 = arith.constant 0 : index
    %c0_14 = arith.constant 0 : index
    %25 = vector.load %arg6[%c0_13, %c0_14] : memref<8x768xf32, #tpu.memory_space<vmem>>, vector<8x768xf32>
    tpu.vector_store %arg6[%c0_13, %c0_14], %24 {strides = array<i32>} : memref<8x768xf32, #tpu.memory_space<vmem>>, vector<8x768xf32>,
    return
  }
  func.func @transform_0(%arg0: i32) -> (i32, i32) {
    %c0_i32 = arith.constant 0 : i32
    %c0_i32_0 = arith.constant 0 : i32
    return %arg0, %c0_i32 : i32, i32
  }
  func.func @transform_1(%arg0: i32) -> (i32, i32) {
    %c0_i32 = arith.constant 0 : i32
    %c0_i32_0 = arith.constant 0 : i32
    %c0_i32_1 = arith.constant 0 : i32
    return %c0_i32, %c0_i32_0 : i32, i32
  }
  func.func @transform_2(%arg0: i32) -> (i32, i32) {
    %c0_i32 = arith.constant 0 : i32
    %c0_i32_0 = arith.constant 0 : i32
    %c0_i32_1 = arith.constant 0 : i32
    return %c0_i32, %c0_i32_0 : i32, i32
  }
  func.func @transform_3(%arg0: i32) -> (i32, i32) {
    %c0_i32 = arith.constant 0 : i32
    %c0_i32_0 = arith.constant 0 : i32
    %c0_i32_1 = arith.constant 0 : i32
    return %c0_i32, %c0_i32_0 : i32, i32
  }
  func.func @transform_4(%arg0: i32) -> (i32, i32) {
    %c0_i32 = arith.constant 0 : i32
    %c0_i32_0 = arith.constant 0 : i32
    return %arg0, %c0_i32 : i32, i32
  }
  func.func @transform_5(%arg0: i32) -> (i32, i32) {
    %c0_i32 = arith.constant 0 : i32
    %c0_i32_0 = arith.constant 0 : i32
    return %arg0, %c0_i32 : i32, i32
  }
}

module attributes {stable_mosaic.version = 11 : i64} {
  func.func @_classifier_kernel(%arg0: i32, %arg1: memref<8x768xf32, #tpu.memory_space<vmem>>, %arg2: memref<1x768xf32, #tpu.memory_space<vmem>>, %arg3: memref<1x768xf32, #tpu.memory_space<vmem>>, %arg4: memref<768x128xbf16, #tpu.memory_space<vmem>>, %arg5: memref<1x128xf32, #tpu.memory_space<vmem>>, %arg6: memref<8x128xf32, #tpu.memory_space<vmem>>) attributes {dimension_semantics = [#tpu.dimension_semantics<parallel>], iteration_bounds = array<i64: 2>, scalar_prefetch = 0 : i64, scratch_operands = 0 : i64, tpu.core_type = #tpu.core_type<tc>, window_params = [{transform_indices = @transform_0, window_bounds = array<i64: 8, 768>}, {pipeline_mode = #tpu.pipeline_mode<synchronous>, transform_indices = @transform_1, window_bounds = array<i64: 1, 768>}, {pipeline_mode = #tpu.pipeline_mode<synchronous>, transform_indices = @transform_2, window_bounds = array<i64: 1, 768>}, {pipeline_mode = #tpu.pipeline_mode<synchronous>, transform_indices = @transform_3, window_bounds = array<i64: 768, 128>}, {pipeline_mode = #tpu.pipeline_mode<synchronous>, transform_indices = @transform_4, window_bounds = array<i64: 1, 128>}, {transform_indices = @transform_5, window_bounds = array<i64: 8, 128>}]} {
    %c0 = arith.constant 0 : index
    %c0_0 = arith.constant 0 : index
    %0 = vector.load %arg1[%c0, %c0_0] : memref<8x768xf32, #tpu.memory_space<vmem>>, vector<8x768xf32>
    %c0_1 = arith.constant 0 : index
    %c0_2 = arith.constant 0 : index
    %1 = vector.load %arg2[%c0_1, %c0_2] : memref<1x768xf32, #tpu.memory_space<vmem>>, vector<1x768xf32>
    %2 = vector.broadcast %1 : vector<1x768xf32> to vector<8x768xf32>
    %3 = arith.mulf %0, %2 : vector<8x768xf32>
    %c0_3 = arith.constant 0 : index
    %c0_4 = arith.constant 0 : index
    %4 = vector.load %arg3[%c0_3, %c0_4] : memref<1x768xf32, #tpu.memory_space<vmem>>, vector<1x768xf32>
    %5 = vector.broadcast %4 : vector<1x768xf32> to vector<8x768xf32>
    %6 = arith.addf %3, %5 : vector<8x768xf32>
    %cst = arith.constant 0.000000e+00 : f32
    %7 = vector.broadcast %cst : f32 to vector<8x768xf32>
    %8 = arith.maximumf %6, %7 : vector<8x768xf32>
    %9 = arith.truncf %8 : vector<8x768xf32> to vector<8x768xbf16>
    %c0_5 = arith.constant 0 : index
    %c0_6 = arith.constant 0 : index
    %10 = vector.load %arg4[%c0_5, %c0_6] : memref<768x128xbf16, #tpu.memory_space<vmem>>, vector<768x128xbf16>
    %cst_7 = arith.constant dense<0.000000e+00> : vector<8x128xf32>
    %11 = tpu.matmul %9, %10, %cst_7 {dimension_numbers = #tpu.dot_dimension_numbers<[1], [0], [0], [1], [0, 0, 1, 1], [], []>} : vector<8x768xbf16>, vector<768x128xbf16>, vector<8x128xf32> -> vector<8x128xf32>
    %c0_8 = arith.constant 0 : index
    %c0_9 = arith.constant 0 : index
    %12 = vector.load %arg5[%c0_8, %c0_9] : memref<1x128xf32, #tpu.memory_space<vmem>>, vector<1x128xf32>
    %13 = vector.broadcast %12 : vector<1x128xf32> to vector<8x128xf32>
    %14 = arith.addf %11, %13 : vector<8x128xf32>
    %c0_10 = arith.constant 0 : index
    %c0_11 = arith.constant 0 : index
    %15 = vector.load %arg6[%c0_10, %c0_11] : memref<8x128xf32, #tpu.memory_space<vmem>>, vector<8x128xf32>
    tpu.vector_store %arg6[%c0_10, %c0_11], %14 {strides = array<i32>} : memref<8x128xf32, #tpu.memory_space<vmem>>, vector<8x128xf32>,
    return
  }
  func.func @transform_0(%arg0: i32) -> (i32, i32) {
    %c0_i32 = arith.constant 0 : i32
    %c0_i32_0 = arith.constant 0 : i32
    return %arg0, %c0_i32 : i32, i32
  }
  func.func @transform_1(%arg0: i32) -> (i32, i32) {
    %c0_i32 = arith.constant 0 : i32
    %c0_i32_0 = arith.constant 0 : i32
    %c0_i32_1 = arith.constant 0 : i32
    return %c0_i32, %c0_i32_0 : i32, i32
  }
  func.func @transform_2(%arg0: i32) -> (i32, i32) {
    %c0_i32 = arith.constant 0 : i32
    %c0_i32_0 = arith.constant 0 : i32
    %c0_i32_1 = arith.constant 0 : i32
    return %c0_i32, %c0_i32_0 : i32, i32
  }
  func.func @transform_3(%arg0: i32) -> (i32, i32) {
    %c0_i32 = arith.constant 0 : i32
    %c0_i32_0 = arith.constant 0 : i32
    %c0_i32_1 = arith.constant 0 : i32
    return %c0_i32, %c0_i32_0 : i32, i32
  }
  func.func @transform_4(%arg0: i32) -> (i32, i32) {
    %c0_i32 = arith.constant 0 : i32
    %c0_i32_0 = arith.constant 0 : i32
    %c0_i32_1 = arith.constant 0 : i32
    return %c0_i32, %c0_i32_0 : i32, i32
  }
  func.func @transform_5(%arg0: i32) -> (i32, i32) {
    %c0_i32 = arith.constant 0 : i32
    %c0_i32_0 = arith.constant 0 : i32
    return %arg0, %c0_i32 : i32, i32
  }
}

</mosaic_0001>

<llo_original>
// kernel: aux_head_forward.3
$region0: #{aux_head_forward.3}
  #allocation0 [shape = 'u32[]', space=smem, size = 0x4, offset = 0x4, fixed_abs, tag = 'smem constant byte address 0x4 - core index']
  #allocation1 [shape = 'u32[144,128]{1,0:T(1,128)}', space=vmem, size = 0x12000, scoped, tag = 'internal scratch']
  %s0 = inlined_call_operand.vmem [shape: bf16[16,8192], index: 0, kind: input, shape index: {}]
  %s1 = inlined_call_operand.vmem [shape: bf16[128,128], index: 1, kind: input, shape index: {}]
  %s2 = inlined_call_operand.vmem [shape: f32[64,128], index: 2, kind: output, shape index: {0}]
  %s3 = inlined_call_operand.vmem [shape: f32[16,128], index: 3, kind: output, shape index: {1}]
  %4 = xla_tuple %s2, %s3
  %s5 = sld [smem:[#allocation0]]
  $region49: #{aux_head_forward.3} parent=0
    _
  %s7 = ssub.s32 1, %s5
  %s8 = scalar_select 0, %s7, %s5
  loop: start=0, step=1, limit=4
  $region2: #{aux_head_forward.3} parent=0 // loop_pre_header
    _
  $region3: #{aux_head_forward.3} parent=0 // loop_header
    %s10 = sphi 0, %s14
    %p11 = scmp.ge.s32.totalorder %s10, 4
    %s20 = sphi 0, %s22
    %s23 = sphi 0, %s20
    %s24 = sphi 0, %s23
    %s40 = sphi 0, %s24
    %s44 = sphi 0, %s44
    %s46 = sphi 0, %s44
    %s47 = sphi 0, %s46
    %s61 = sphi 0, %s47
    %s67 = sphi 0, %s69
    %s70 = sphi 0, %s67
    %s71 = sphi 0, %s70
    %s87 = sphi 0, %s71
    %s93 = sphi 0, %s95
    %s96 = sphi 0, %s93
    %s97 = sphi 0, %s96
    %s113 = sphi 0, %s97
  $region4: #{aux_head_forward.3} parent=0 // loop_header_branch
    %13 = sbr.rel (%p11) target = $region8
  $region5: #{aux_head_forward.3} parent=0 // loop_body
    %s15 = ssub.s32 %s10, 1
    %s16 = ssub.s32 %s10, 2
    %s17 = sadd.s32 %s10, 1
    %s18 = ssub.s32 %s10, %s17
    %p19 = scmp.eq.s32.totalorder %s18, 0
    %s21 = sadd.s32 %s20, 1
    %s22 = scalar_select %p19, %s20, %s21
    %p25 = pneg %p19
    %p26 = scmp.eq.s32.totalorder %s10, 1
    %p27 = por %p25, %p26
    %p28 = scmp.ne.s32.totalorder %s20, %s23
    %p29 = scmp.eq.s32.totalorder %s10, 0
    %p30 = por %p28, %p29
    %p31 = scmp.ne.s32.totalorder %s20, %s23
    %p32 = scmp.eq.s32.totalorder %s15, 1
    %p33 = por %p31, %p32
    %p34 = scmp.ne.s32.totalorder %s23, %s24
    %p35 = scmp.eq.s32.totalorder %s15, 0
    %p36 = por %p34, %p35
    %p37 = scmp.ne.s32.totalorder %s23, %s24
    %p38 = scmp.eq.s32.totalorder %s16, 1
    %p39 = por %p37, %p38
    %p41 = scmp.ne.s32.totalorder %s24, %s40
    %p42 = scmp.eq.s32.totalorder %s16, 0
    %p43 = por %p41, %p42
    %s45 = sadd.s32 %s44, 1
    %p48 = scmp.eq.s32.totalorder %s10, 1
    %p49 = scmp.ne.s32.totalorder %s44, %s46
    %p50 = scmp.eq.s32.totalorder %s10, 0
    %p51 = por %p49, %p50
    %p52 = scmp.ne.s32.totalorder %s44, %s46
    %p53 = scmp.eq.s32.totalorder %s15, 1
    %p54 = por %p52, %p53
    %p55 = scmp.ne.s32.totalorder %s46, %s47
    %p56 = scmp.eq.s32.totalorder %s15, 0
    %p57 = por %p55, %p56
    %p58 = scmp.ne.s32.totalorder %s46, %s47
    %p59 = scmp.eq.s32.totalorder %s16, 1
    %p60 = por %p58, %p59
    %p62 = scmp.ne.s32.totalorder %s47, %s61
    %p63 = scmp.eq.s32.totalorder %s16, 0
    %p64 = por %p62, %p63
    %s65 = ssub.s32 %s10, %s17
    %p66 = scmp.eq.s32.totalorder %s65, 0
    %s68 = sadd.s32 %s67, 1
    %s69 = scalar_select %p66, %s67, %s68
    %p72 = pneg %p66
    %p73 = scmp.eq.s32.totalorder %s10, 1
    %p74 = por %p72, %p73
    %p75 = scmp.ne.s32.totalorder %s67, %s70
    %p76 = scmp.eq.s32.totalorder %s10, 0
    %p77 = por %p75, %p76
    %p78 = scmp.ne.s32.totalorder %s67, %s70
    %p79 = scmp.eq.s32.totalorder %s15, 1
    %p80 = por %p78, %p79
    %p81 = scmp.ne.s32.totalorder %s70, %s71
    %p82 = scmp.eq.s32.totalorder %s15, 0
    %p83 = por %p81, %p82
    %p84 = scmp.ne.s32.totalorder %s70, %s71
    %p85 = scmp.eq.s32.totalorder %s16, 1
    %p86 = por %p84, %p85
    %p88 = scmp.ne.s32.totalorder %s71, %s87
    %p89 = scmp.eq.s32.totalorder %s16, 0
    %p90 = por %p88, %p89
    %s91 = ssub.s32 %s10, %s17
    %p92 = scmp.eq.s32.totalorder %s91, 0
    %s94 = sadd.s32 %s93, 1
    %s95 = scalar_select %p92, %s93, %s94
    %p98 = pneg %p92
    %p99 = scmp.eq.s32.totalorder %s10, 1
    %p100 = por %p98, %p99
    %p101 = scmp.ne.s32.totalorder %s93, %s96
    %p102 = scmp.eq.s32.totalorder %s10, 0
    %p103 = por %p101, %p102
    %p104 = scmp.ne.s32.totalorder %s93, %s96
    %p105 = scmp.eq.s32.totalorder %s15, 1
    %p106 = por %p104, %p105
    %p107 = scmp.ne.s32.totalorder %s96, %s97
    %p108 = scmp.eq.s32.totalorder %s15, 0
    %p109 = por %p107, %p108
    %p110 = scmp.ne.s32.totalorder %s96, %s97
    %p111 = scmp.eq.s32.totalorder %s16, 1
    %p112 = por %p110, %p111
    %p114 = scmp.ne.s32.totalorder %s97, %s113
    %p115 = scmp.eq.s32.totalorder %s16, 0
    %p116 = por %p114, %p115
    %p117 = scmp.le.s32.totalorder 1, %s10
    %p118 = scmp.lt.s32.totalorder %s10, 3
    %p119 = pnand %p117, %p118
    %p120 = pneg %p119
    // Predicated region
    $region9: #{aux_head_forward.3} parent=5 // pred_check
      _
    $region10: #{aux_head_forward.3} parent=5 // pred_check_branch
      %122 = sbr.rel (%p119) target = $region12
    $region11: #{aux_head_forward.3} parent=5 // pred_region
      %s123 = ssub.s32 %s10, 1
      // Predicated region
      $region13: #{aux_head_forward.3} parent=11 // pred_check
        %p124 = pneg %p57
      $region14: #{aux_head_forward.3} parent=11 // pred_check_branch
        %126 = sbr.rel (%p124) target = $region16
      $region15: #{aux_head_forward.3} parent=11 // pred_region
        _
      $region16: #{aux_head_forward.3} parent=11 // pred_fallthru
        _
    $region12: #{aux_head_forward.3} parent=5 // pred_fallthru
      _
    %p127 = scmp.lt.s32.totalorder %s10, 2
    // Predicated region
    $region17: #{aux_head_forward.3} parent=5 // pred_check
      %p128 = pneg %p127
    $region18: #{aux_head_forward.3} parent=5 // pred_check_branch
      %130 = sbr.rel (%p128) target = $region20
    $region19: #{aux_head_forward.3} parent=5 // pred_region
      // Predicated region
      $region21: #{aux_head_forward.3} parent=19 // pred_check
        %p131 = pneg %p30
      $region22: #{aux_head_forward.3} parent=19 // pred_check_branch
        %133 = sbr.rel (%p131) target = $region24
      $region23: #{aux_head_forward.3} parent=19 // pred_region
        %p134 = scmp.lt.s32.totalorder %s10, 1
        %s135 = scalar_select %p134, %s10, 1
        %s136 = smul.addr %s135, 64
        %s137 = smul.addr %s136, 4
        %s138 = scalar_lea.vmem %s0, %s137
      $region24: #{aux_head_forward.3} parent=19 // pred_fallthru
        _
    $region20: #{aux_head_forward.3} parent=5 // pred_fallthru
      _
    %p139 = scmp.le.s32.totalorder 1, %s10
    %p140 = scmp.lt.s32.totalorder %s10, 3
    %p141 = pnand %p139, %p140
    %p142 = pneg %p141
    // Predicated region
    $region25: #{aux_head_forward.3} parent=5 // pred_check
      _
    $region26: #{aux_head_forward.3} parent=5 // pred_check_branch
      %144 = sbr.rel (%p141) target = $region28
    $region27: #{aux_head_forward.3} parent=5 // pred_region
      %s145 = ssub.s32 %s10, 1
      %p146 = scmp.lt.s32.totalorder %s15, 1
      %s147 = scalar_select %p146, %s15, 1
      %s148 = smul.addr %s147, 64
      %s149 = smul.addr %s148, 4
      %s150 = scalar_lea.vmem %s0, %s149
      %p151 = pneg %p36
      %p152 = pneg %p33
      %p153 = pneg %p57
      %p154 = pneg %p54
      %p155 = pneg %p83
      %p156 = pneg %p80
      %s157 = smul.u32 4, %s15
      %p158 = scmp.lt.s32.totalorder %s157, 7
      %s159 = scalar_select %p158, %s157, 7
      %s160 = smul.addr %s159, 8
      %s161 = scalar_lea.vmem %s2, %s160
      %p162 = pneg %p109
      %p163 = pneg %p106
      %p164 = scmp.lt.s32.totalorder %s15, 1
      %s165 = scalar_select %p164, %s15, 1
      %s166 = smul.addr %s165, 8
      %s167 = scalar_lea.vmem %s3, %s166
      %p168 = scmp.lt.s32.totalorder %s15, 1
      %s169 = scalar_select %p168, %s15, 1
      %s170 = smul.addr %s169, 64
      %s171 = smul.addr %s170, 4
      %s172 = scalar_lea.vmem %s0, %s171
      %s173 = smul.u32 4, %s15
      %p174 = scmp.lt.s32.totalorder %s173, 7
      %s175 = scalar_select %p174, %s173, 7
      %s176 = smul.addr %s175, 8
      %s177 = scalar_lea.vmem %s2, %s176
      %s178 = smul.u32 4, %s15
      %p179 = scmp.lt.s32.totalorder %s15, 1
      %s180 = scalar_select %p179, %s15, 1
      %s181 = smul.addr %s180, 8
      %s182 = scalar_lea.vmem %s3, %s181
      %v184 = vld [vmem:[%s172] sm:$0xff]
      %v185 = vld [vmem:[%s172 + $0x8] sm:$0xff]
      %v186 = vld [vmem:[%s172 + $0x10] sm:$0xff]
      %v187 = vld [vmem:[%s172 + $0x18] sm:$0xff]
      %v188 = vld [vmem:[%s172 + $0x20] sm:$0xff]
      %v189 = vld [vmem:[%s172 + $0x28] sm:$0xff]
      %v190 = vld [vmem:[%s172 + $0x30] sm:$0xff]
      %v191 = vld [vmem:[%s172 + $0x38] sm:$0xff]
      %v192 = vld [vmem:[%s172 + $0x40] sm:$0xff]
      %v193 = vld [vmem:[%s172 + $0x48] sm:$0xff]
      %v194 = vld [vmem:[%s172 + $0x50] sm:$0xff]
      %v195 = vld [vmem:[%s172 + $0x58] sm:$0xff]
      %v196 = vld [vmem:[%s172 + $0x60] sm:$0xff]
      %v197 = vld [vmem:[%s172 + $0x68] sm:$0xff]
      %v198 = vld [vmem:[%s172 + $0x70] sm:$0xff]
      %v199 = vld [vmem:[%s172 + $0x78] sm:$0xff]
      %v200 = vld [vmem:[%s172 + $0x80] sm:$0xff]
      %v201 = vld [vmem:[%s172 + $0x88] sm:$0xff]
      %v202 = vld [vmem:[%s172 + $0x90] sm:$0xff]
      %v203 = vld [vmem:[%s172 + $0x98] sm:$0xff]
      %v204 = vld [vmem:[%s172 + $0xa0] sm:$0xff]
      %v205 = vld [vmem:[%s172 + $0xa8] sm:$0xff]
      %v206 = vld [vmem:[%s172 + $0xb0] sm:$0xff]
      %v207 = vld [vmem:[%s172 + $0xb8] sm:$0xff]
      %v208 = vld [vmem:[%s172 + $0xc0] sm:$0xff]
      %v209 = vld [vmem:[%s172 + $0xc8] sm:$0xff]
      %v210 = vld [vmem:[%s172 + $0xd0] sm:$0xff]
      %v211 = vld [vmem:[%s172 + $0xd8] sm:$0xff]
      %v212 = vld [vmem:[%s172 + $0xe0] sm:$0xff]
      %v213 = vld [vmem:[%s172 + $0xe8] sm:$0xff]
      %v214 = vld [vmem:[%s172 + $0xf0] sm:$0xff]
      %v215 = vld [vmem:[%s172 + $0xf8] sm:$0xff]
      %v216 = vmax.bf16 %v184, 0
      %v217 = vmax.bf16 %v185, 0
      %v218 = vmax.bf16 %v186, 0
      %v219 = vmax.bf16 %v187, 0
      %v220 = vmax.bf16 %v188, 0
      %v221 = vmax.bf16 %v189, 0
      %v222 = vmax.bf16 %v190, 0
      %v223 = vmax.bf16 %v191, 0
      %v224 = vmax.bf16 %v192, 0
      %v225 = vmax.bf16 %v193, 0
      %v226 = vmax.bf16 %v194, 0
      %v227 = vmax.bf16 %v195, 0
      %v228 = vmax.bf16 %v196, 0
      %v229 = vmax.bf16 %v197, 0
      %v230 = vmax.bf16 %v198, 0
      %v231 = vmax.bf16 %v199, 0
      %v232 = vmax.bf16 %v200, 0
      %v233 = vmax.bf16 %v201, 0
      %v234 = vmax.bf16 %v202, 0
      %v235 = vmax.bf16 %v203, 0
      %v236 = vmax.bf16 %v204, 0
      %v237 = vmax.bf16 %v205, 0
      %v238 = vmax.bf16 %v206, 0
      %v239 = vmax.bf16 %v207, 0
      %v240 = vmax.bf16 %v208, 0
      %v241 = vmax.bf16 %v209, 0
      %v242 = vmax.bf16 %v210, 0
      %v243 = vmax.bf16 %v211, 0
      %v244 = vmax.bf16 %v212, 0
      %v245 = vmax.bf16 %v213, 0
      %v246 = vmax.bf16 %v214, 0
      %v247 = vmax.bf16 %v215, 0
      %v248 = vunpack.c.l.bf16 %v216
      %v250 = vrot.slane %v216, 4
      %v252 = vunpack.c.l.bf16 %v250
      %v253 = vadd.f32 %v248, %v252
      %v254 = vunpack.c.l.bf16 %v217
      %v255 = vadd.f32 %v253, %v254
      %v257 = vrot.slane %v217, 4
      %v259 = vunpack.c.l.bf16 %v257
      %v260 = vadd.f32 %v255, %v259
      %v261 = vunpack.c.l.bf16 %v218
      %v262 = vadd.f32 %v260, %v261
      %v263 = vunpack.c.l.bf16 %v220
      %v264 = vadd.f32 %v262, %v263
      %v266 = vrot.slane %v220, 4
      %v268 = vunpack.c.l.bf16 %v266
      %v269 = vadd.f32 %v264, %v268
      %v270 = vunpack.c.l.bf16 %v221
      %v271 = vadd.f32 %v269, %v270
      %v273 = vrot.slane %v221, 4
      %v275 = vunpack.c.l.bf16 %v273
      %v276 = vadd.f32 %v271, %v275
      %v277 = vunpack.c.l.bf16 %v222
      %v278 = vadd.f32 %v276, %v277
      %v279 = vunpack.c.l.bf16 %v224
      %v280 = vadd.f32 %v278, %v279
      %v282 = vrot.slane %v224, 4
      %v284 = vunpack.c.l.bf16 %v282
      %v285 = vadd.f32 %v280, %v284
      %v286 = vunpack.c.l.bf16 %v225
      %v287 = vadd.f32 %v285, %v286
      %v289 = vrot.slane %v225, 4
      %v291 = vunpack.c.l.bf16 %v289
      %v292 = vadd.f32 %v287, %v291
      %v293 = vunpack.c.l.bf16 %v226
      %v294 = vadd.f32 %v292, %v293
      %v295 = vunpack.c.l.bf16 %v228
      %v296 = vadd.f32 %v294, %v295
      %v298 = vrot.slane %v228, 4
      %v300 = vunpack.c.l.bf16 %v298
      %v301 = vadd.f32 %v296, %v300
      %v302 = vunpack.c.l.bf16 %v229
      %v303 = vadd.f32 %v301, %v302
      %v305 = vrot.slane %v229, 4
      %v307 = vunpack.c.l.bf16 %v305
      %v308 = vadd.f32 %v303, %v307
      %v309 = vunpack.c.l.bf16 %v230
      %v310 = vadd.f32 %v308, %v309
      %v311 = vunpack.c.l.bf16 %v232
      %v312 = vadd.f32 %v310, %v311
      %v314 = vrot.slane %v232, 4
      %v316 = vunpack.c.l.bf16 %v314
      %v317 = vadd.f32 %v312, %v316
      %v318 = vunpack.c.l.bf16 %v233
      %v319 = vadd.f32 %v317, %v318
      %v321 = vrot.slane %v233, 4
      %v323 = vunpack.c.l.bf16 %v321
      %v324 = vadd.f32 %v319, %v323
      %v325 = vunpack.c.l.bf16 %v234
      %v326 = vadd.f32 %v324, %v325
      %v327 = vadd.f32 %v259, %v261
      %v329 = vrot.slane %v218, 4
      %v331 = vunpack.c.l.bf16 %v329
      %v332 = vadd.f32 %v327, %v331
      %v333 = vunpack.c.l.bf16 %v219
      %v334 = vadd.f32 %v332, %v333
      %v336 = vrot.slane %v219, 4
      %v338 = vunpack.c.l.bf16 %v336
      %v339 = vadd.f32 %v334, %v338
      %v340 = vadd.f32 %v339, %v275
      %v341 = vadd.f32 %v340, %v277
      %v343 = vrot.slane %v222, 4
      %v345 = vunpack.c.l.bf16 %v343
      %v346 = vadd.f32 %v341, %v345
      %v347 = vunpack.c.l.bf16 %v223
      %v348 = vadd.f32 %v346, %v347
      %v350 = vrot.slane %v223, 4
      %v352 = vunpack.c.l.bf16 %v350
      %v353 = vadd.f32 %v348, %v352
      %v354 = vadd.f32 %v353, %v291
      %v355 = vadd.f32 %v354, %v293
      %v357 = vrot.slane %v226, 4
      %v359 = vunpack.c.l.bf16 %v357
      %v360 = vadd.f32 %v355, %v359
      %v361 = vunpack.c.l.bf16 %v227
      %v362 = vadd.f32 %v360, %v361
      %v364 = vrot.slane %v227, 4
      %v366 = vunpack.c.l.bf16 %v364
      %v367 = vadd.f32 %v362, %v366
      %v368 = vadd.f32 %v367, %v307
      %v369 = vadd.f32 %v368, %v309
      %v371 = vrot.slane %v230, 4
      %v373 = vunpack.c.l.bf16 %v371
      %v374 = vadd.f32 %v369, %v373
      %v375 = vunpack.c.l.bf16 %v231
      %v376 = vadd.f32 %v374, %v375
      %v378 = vrot.slane %v231, 4
      %v380 = vunpack.c.l.bf16 %v378
      %v381 = vadd.f32 %v376, %v380
      %v382 = vadd.f32 %v381, %v323
      %v383 = vadd.f32 %v382, %v325
      %v385 = vrot.slane %v234, 4
      %v387 = vunpack.c.l.bf16 %v385
      %v388 = vadd.f32 %v383, %v387
      %v389 = vunpack.c.l.bf16 %v235
      %v390 = vadd.f32 %v388, %v389
      %v392 = vrot.slane %v235, 4
      %v394 = vunpack.c.l.bf16 %v392
      %v395 = vadd.f32 %v390, %v394
      %v396 = vadd.f32 %v295, %v300
      %v397 = vadd.f32 %v396, %v302
      %v398 = vadd.f32 %v397, %v307
      %v399 = vadd.f32 %v398, %v309
      %v400 = vadd.f32 %v399, %v311
      %v401 = vadd.f32 %v400, %v316
      %v402 = vadd.f32 %v401, %v318
      %v403 = vadd.f32 %v402, %v323
      %v404 = vadd.f32 %v403, %v325
      %v405 = vunpack.c.l.bf16 %v236
      %v406 = vadd.f32 %v404, %v405
      %v408 = vrot.slane %v236, 4
      %v410 = vunpack.c.l.bf16 %v408
      %v411 = vadd.f32 %v406, %v410
      %v412 = vunpack.c.l.bf16 %v237
      %v413 = vadd.f32 %v411, %v412
      %v415 = vrot.slane %v237, 4
      %v417 = vunpack.c.l.bf16 %v415
      %v418 = vadd.f32 %v413, %v417
      %v419 = vunpack.c.l.bf16 %v238
      %v420 = vadd.f32 %v418, %v419
      %v421 = vunpack.c.l.bf16 %v240
      %v422 = vadd.f32 %v420, %v421
      %v424 = vrot.slane %v240, 4
      %v426 = vunpack.c.l.bf16 %v424
      %v427 = vadd.f32 %v422, %v426
      %v428 = vunpack.c.l.bf16 %v241
      %v429 = vadd.f32 %v427, %v428
      %v431 = vrot.slane %v241, 4
      %v433 = vunpack.c.l.bf16 %v431
      %v434 = vadd.f32 %v429, %v433
      %v435 = vunpack.c.l.bf16 %v242
      %v436 = vadd.f32 %v434, %v435
      %v437 = vunpack.c.l.bf16 %v244
      %v438 = vadd.f32 %v436, %v437
      %v440 = vrot.slane %v244, 4
      %v442 = vunpack.c.l.bf16 %v440
      %v443 = vadd.f32 %v438, %v442
      %v444 = vunpack.c.l.bf16 %v245
      %v445 = vadd.f32 %v443, %v444
      %v447 = vrot.slane %v245, 4
      %v449 = vunpack.c.l.bf16 %v447
      %v450 = vadd.f32 %v445, %v449
      %v451 = vunpack.c.l.bf16 %v246
      %v452 = vadd.f32 %v450, %v451
      %v453 = vadd.f32 %v307, %v309
      %v454 = vadd.f32 %v453, %v373
      %v455 = vadd.f32 %v454, %v375
      %v456 = vadd.f32 %v455, %v380
      %v457 = vadd.f32 %v456, %v323
      %v458 = vadd.f32 %v457, %v325
      %v459 = vadd.f32 %v458, %v387
      %v460 = vadd.f32 %v459, %v389
      %v461 = vadd.f32 %v460, %v394
      %v462 = vadd.f32 %v461, %v417
      %v463 = vadd.f32 %v462, %v419
      %v465 = vrot.slane %v238, 4
      %v467 = vunpack.c.l.bf16 %v465
      %v468 = vadd.f32 %v463, %v467
      %v469 = vunpack.c.l.bf16 %v239
      %v470 = vadd.f32 %v468, %v469
      %v472 = vrot.slane %v239, 4
      %v474 = vunpack.c.l.bf16 %v472
      %v475 = vadd.f32 %v470, %v474
      %v476 = vadd.f32 %v475, %v433
      %v477 = vadd.f32 %v476, %v435
      %v479 = vrot.slane %v242, 4
      %v481 = vunpack.c.l.bf16 %v479
      %v482 = vadd.f32 %v477, %v481
      %v483 = vunpack.c.l.bf16 %v243
      %v484 = vadd.f32 %v482, %v483
      %v486 = vrot.slane %v243, 4
      %v488 = vunpack.c.l.bf16 %v486
      %v489 = vadd.f32 %v484, %v488
      %v490 = vadd.f32 %v489, %v449
      %v491 = vadd.f32 %v490, %v451
      %v493 = vrot.slane %v246, 4
      %v495 = vunpack.c.l.bf16 %v493
      %v496 = vadd.f32 %v491, %v495
      %v497 = vunpack.c.l.bf16 %v247
      %v498 = vadd.f32 %v496, %v497
      %v500 = vrot.slane %v247, 4
      %v502 = vunpack.c.l.bf16 %v500
      %v503 = vadd.f32 %v498, %v502
      %v504 = vpack.c.bf16 %v395, %v326
      %v505 = vpack.c.bf16 %v503, %v452
      %v506 = vld [vmem:[%s1] sm:$0xf]
      %v507 = vld [vmem:[%s1 + $0x4] sm:$0xf]
      %v508 = vld [vmem:[%s1 + $0x8] sm:$0xf]
      %v509 = vld [vmem:[%s1 + $0xc] sm:$0xf]
      %v510 = vld [vmem:[%s1 + $0x10] sm:$0xf]
      %v511 = vld [vmem:[%s1 + $0x14] sm:$0xf]
      %v512 = vld [vmem:[%s1 + $0x18] sm:$0xf]
      %v513 = vld [vmem:[%s1 + $0x1c] sm:$0xf]
      %v514 = vld [vmem:[%s1 + $0x20] sm:$0xf]
      %v515 = vld [vmem:[%s1 + $0x24] sm:$0xf]
      %v516 = vld [vmem:[%s1 + $0x28] sm:$0xf]
      %v517 = vld [vmem:[%s1 + $0x2c] sm:$0xf]
      %v518 = vld [vmem:[%s1 + $0x30] sm:$0xf]
      %v519 = vld [vmem:[%s1 + $0x34] sm:$0xf]
      %v520 = vld [vmem:[%s1 + $0x38] sm:$0xf]
      %v521 = vld [vmem:[%s1 + $0x3c] sm:$0xf]
      %v538 = vunpack.c.l.b16 %v506
      %v539 = vunpack.c.l.b16 %v507
      %v540 = vunpack.c.l.b16 %v508
      %v541 = vunpack.c.l.b16 %v509
      %v542 = vunpack.c.l.b16 %v510
      %v543 = vunpack.c.l.b16 %v511
      %v544 = vunpack.c.l.b16 %v512
      %v545 = vunpack.c.l.b16 %v513
      %v546 = vunpack.c.l.b16 %v514
      %v547 = vunpack.c.l.b16 %v515
      %v548 = vunpack.c.l.b16 %v516
      %v549 = vunpack.c.l.b16 %v517
      %v550 = vunpack.c.l.b16 %v518
      %v551 = vunpack.c.l.b16 %v519
      %v552 = vunpack.c.l.b16 %v520
      %v553 = vunpack.c.l.b16 %v521
      %v554 = vpack.c.b16 %v539, %v538
      %v555 = vpack.c.b16 %v541, %v540
      %v556 = vpack.c.b16 %v543, %v542
      %v557 = vpack.c.b16 %v545, %v544
      %v558 = vpack.c.b16 %v547, %v546
      %v559 = vpack.c.b16 %v549, %v548
      %v560 = vpack.c.b16 %v551, %v550
      %v561 = vpack.c.b16 %v553, %v552
      %570 = vmatprep.subr.bf16.mxu0 0
      %571 = vmatpush1.bf16.msra.mxu0 %v554
      %572 = vmatprep.subr.bf16.mxu0 0
      %573 = vmatpush1.bf16.msra.mxu0 %v555
      %574 = vmatprep.subr.bf16.mxu0 0
      %575 = vmatpush1.bf16.msra.mxu0 %v556
      %576 = vmatprep.subr.bf16.mxu0 0
      %577 = vmatpush1.bf16.msra.mxu0 %v557
      %578 = vmatprep.subr.bf16.mxu0 0
      %579 = vmatpush1.bf16.msra.mxu0 %v558
      %580 = vmatprep.subr.bf16.mxu0 0
      %581 = vmatpush1.bf16.msra.mxu0 %v559
      %582 = vmatprep.subr.bf16.mxu0 0
      %583 = vmatpush1.bf16.msra.mxu0 %v560
      %584 = vmatprep.subr.bf16.mxu0 0
      %585 = vmatpush1.bf16.msra.mxu0 %v561
      %586 = vmatprep.subr.bf16.mxu0 0
      %587 = vmatpush1.bf16.msra.mxu0 0
      %588 = vmatprep.subr.bf16.mxu0 0
      %589 = vmatpush1.bf16.msra.mxu0 0
      %590 = vmatprep.subr.bf16.mxu0 0
      %591 = vmatpush1.bf16.msra.mxu0 0
      %592 = vmatprep.subr.bf16.mxu0 0
      %593 = vmatpush1.bf16.msra.mxu0 0
      %594 = vmatprep.subr.bf16.mxu0 0
      %595 = vmatpush1.bf16.msra.mxu0 0
      %596 = vmatprep.subr.bf16.mxu0 0
      %597 = vmatpush1.bf16.msra.mxu0 0
      %598 = vmatprep.subr.bf16.mxu0 0
      %599 = vmatpush1.bf16.msra.mxu0 0
      %600 = vmatprep.subr.bf16.mxu0 0
      %601 = vmatpush1.bf16.msra.mxu0 0
      %602 = vmatprep.mubr.bf16.mxu0 0
      %603 = vmatmul.mubr.bf16.gmra.mrb[0].mxu0 %v504
      %v604 = vpop.f32.mrb[0].mxu0
      %v605 = vadd.f32 0.0, %v604
      %v606 = vpop.f32.mrb[0].mxu0
      %v607 = vpop.f32.mrb[0].mxu0
      %v608 = vadd.f32 0.0, %v607
      %v609 = vpop.f32.mrb[0].mxu0
      %610 = vmatprep.mubr.bf16.mxu0 0
      %611 = vmatmul.mubr.bf16.gmra.mrb[0].mxu0 %v505
      %v612 = vpop.f32.mrb[0].mxu0
      %v613 = vadd.f32 0.0, %v612
      %v614 = vpop.f32.mrb[0].mxu0
      %v615 = vpop.f32.mrb[0].mxu0
      %v616 = vadd.f32 0.0, %v615
      %v617 = vpop.f32.mrb[0].mxu0
      %618 = vdwg.mxu0
      %619 = vst [vmem:[%s177] sm:$0xff] %v605
      %620 = vst [vmem:[%s177 + $0x8] sm:$0xff] %v608
      %621 = vst [vmem:[%s177 + $0x10] sm:$0xff] %v613
      %622 = vst [vmem:[%s177 + $0x18] sm:$0xff] %v616
      %v623 = vadd.f32 %v605, %v608
      %v624 = vadd.f32 %v623, %v613
      %v625 = vadd.f32 %v624, %v616
      %v626 = vrot.slane %v625, 4
      %v627 = vadd.f32 %v625, %v626
      %v628 = vrot.slane %v627, 2
      %v629 = vadd.f32 %v627, %v628
      %v630 = vrot.slane %v629, 1
      %v631 = vadd.f32 %v629, %v630
      %v632 = vmul.f32 %v605, %v605
      %v633 = vmul.f32 %v608, %v608
      %v634 = vmul.f32 %v613, %v613
      %v635 = vmul.f32 %v616, %v616
      %v636 = vadd.f32 %v632, %v633
      %v637 = vadd.f32 %v636, %v634
      %v638 = vadd.f32 %v637, %v635
      %v639 = vrot.slane %v638, 4
      %v640 = vadd.f32 %v638, %v639
      %v641 = vrot.slane %v640, 2
      %v642 = vadd.f32 %v640, %v641
      %v643 = vrot.slane %v642, 1
      %v644 = vadd.f32 %v642, %v643
      %vm645 = vcmask 1040384
      %v646 = vsel %vm645, %v631, %v644
      %vm647 = vcmask 1041408
      %v648 = vsel %vm647, %v646, 0.0
      %649 = vst [vmem:[%s182] sm:$0xff] %v648
      %s650 = smul.u32 4, %s15
      %p651 = scmp.lt.s32.totalorder %s650, 7
      %s652 = scalar_select %p651, %s650, 7
      %s653 = smul.addr %s652, 8
      %s654 = scalar_lea.vmem %s2, %s653
      %p655 = scmp.lt.s32.totalorder %s15, 1
      %s656 = scalar_select %p655, %s15, 1
      %s657 = smul.addr %s656, 8
      %s658 = scalar_lea.vmem %s3, %s657
      // Predicated region
      $region29: #{aux_head_forward.3} parent=27 // pred_check
        %p659 = pneg %p80
      $region30: #{aux_head_forward.3} parent=27 // pred_check_branch
        %661 = sbr.rel (%p659) target = $region32
      $region31: #{aux_head_forward.3} parent=27 // pred_region
        %s662 = smul.u32 4, %s15
      $region32: #{aux_head_forward.3} parent=27 // pred_fallthru
        _
      // Predicated region
      $region33: #{aux_head_forward.3} parent=27 // pred_check
        %p663 = pneg %p106
      $region34: #{aux_head_forward.3} parent=27 // pred_check_branch
        %665 = sbr.rel (%p663) target = $region36
      $region35: #{aux_head_forward.3} parent=27 // pred_region
        _
      $region36: #{aux_head_forward.3} parent=27 // pred_fallthru
        _
    $region28: #{aux_head_forward.3} parent=5 // pred_fallthru
      _
    %p666 = scmp.le.s32.totalorder 2, %s10
    // Predicated region
    $region37: #{aux_head_forward.3} parent=5 // pred_check
      %p667 = pneg %p666
    $region38: #{aux_head_forward.3} parent=5 // pred_check_branch
      %669 = sbr.rel (%p667) target = $region40
    $region39: #{aux_head_forward.3} parent=5 // pred_region
      %s670 = ssub.s32 %s10, 2
      // Predicated region
      $region41: #{aux_head_forward.3} parent=39 // pred_check
        %p671 = pneg %p86
      $region42: #{aux_head_forward.3} parent=39 // pred_check_branch
        %673 = sbr.rel (%p671) target = $region44
      $region43: #{aux_head_forward.3} parent=39 // pred_region
        %s674 = smul.u32 4, %s16
        %p675 = scmp.lt.s32.totalorder %s674, 7
        %s676 = scalar_select %p675, %s674, 7
        %s677 = smul.addr %s676, 8
        %s678 = scalar_lea.vmem %s2, %s677
      $region44: #{aux_head_forward.3} parent=39 // pred_fallthru
        _
      // Predicated region
      $region45: #{aux_head_forward.3} parent=39 // pred_check
        %p679 = pneg %p112
      $region46: #{aux_head_forward.3} parent=39 // pred_check_branch
        %681 = sbr.rel (%p679) target = $region48
      $region47: #{aux_head_forward.3} parent=39 // pred_region
        %p682 = scmp.lt.s32.totalorder %s16, 1
        %s683 = scalar_select %p682, %s16, 1
        %s684 = smul.addr %s683, 8
        %s685 = scalar_lea.vmem %s3, %s684
      $region48: #{aux_head_forward.3} parent=39 // pred_fallthru
        _
    $region40: #{aux_head_forward.3} parent=5 // pred_fallthru
      _
  $region6: #{aux_head_forward.3} parent=0 // loop_footer
    %s14 = sadd.s32 1, %s10
  $region7: #{aux_head_forward.3} parent=0 // loop_footer_branch
    %9 = sbr.rel target = $region3
  $region8: #{aux_head_forward.3} parent=0 // loop_exit
    _

// kernel: aux_head_forward.4
$region0: #{aux_head_forward.4}
  #allocation0 [shape = 'u32[]', space=smem, size = 0x4, offset = 0x4, fixed_abs, tag = 'smem constant byte address 0x4 - core index']
  #allocation1 [shape = 'u32[144,128]{1,0:T(1,128)}', space=vmem, size = 0x12000, scoped, tag = 'internal scratch']
  %s0 = inlined_call_operand.vmem [shape: f32[64,128], index: 0, kind: input, shape index: {}]
  %s1 = inlined_call_operand.vmem [shape: f32[1,128], index: 1, kind: input, shape index: {}]
  %s2 = inlined_call_operand.vmem [shape: f32[1,128], index: 2, kind: input, shape index: {}]
  %s3 = inlined_call_operand.vmem [shape: bf16[512,768], index: 3, kind: input, shape index: {}]
  %s4 = inlined_call_operand.vmem [shape: f32[16,768], index: 4, kind: output, shape index: {0}]
  %s5 = inlined_call_operand.vmem [shape: f32[16,768], index: 5, kind: output, shape index: {1}]
  %6 = xla_tuple %s4, %s5
  %s7 = sld [smem:[#allocation0]]
  $region57: #{aux_head_forward.4} parent=0
    _
  %s9 = ssub.s32 1, %s7
  %s10 = scalar_select 0, %s9, %s7
  loop: start=0, step=1, limit=4
  $region2: #{aux_head_forward.4} parent=0 // loop_pre_header
    _
  $region3: #{aux_head_forward.4} parent=0 // loop_header
    %s12 = sphi 0, %s16
    %p13 = scmp.ge.s32.totalorder %s12, 4
    %s22 = sphi 0, %s24
    %s25 = sphi 0, %s22
    %s26 = sphi 0, %s25
    %s42 = sphi 0, %s26
    %s46 = sphi 0, %s46
    %s48 = sphi 0, %s46
    %s49 = sphi 0, %s48
    %s63 = sphi 0, %s49
    %s67 = sphi 0, %s67
    %s69 = sphi 0, %s67
    %s70 = sphi 0, %s69
    %s84 = sphi 0, %s70
    %s88 = sphi 0, %s88
    %s90 = sphi 0, %s88
    %s91 = sphi 0, %s90
    %s105 = sphi 0, %s91
    %s111 = sphi 0, %s113
    %s114 = sphi 0, %s111
    %s115 = sphi 0, %s114
    %s131 = sphi 0, %s115
    %s137 = sphi 0, %s139
    %s140 = sphi 0, %s137
    %s141 = sphi 0, %s140
    %s157 = sphi 0, %s141
  $region4: #{aux_head_forward.4} parent=0 // loop_header_branch
    %15 = sbr.rel (%p13) target = $region8
  $region5: #{aux_head_forward.4} parent=0 // loop_body
    %s17 = ssub.s32 %s12, 1
    %s18 = ssub.s32 %s12, 2
    %s19 = sadd.s32 %s12, 1
    %s20 = ssub.s32 %s12, %s19
    %p21 = scmp.eq.s32.totalorder %s20, 0
    %s23 = sadd.s32 %s22, 1
    %s24 = scalar_select %p21, %s22, %s23
    %p27 = pneg %p21
    %p28 = scmp.eq.s32.totalorder %s12, 1
    %p29 = por %p27, %p28
    %p30 = scmp.ne.s32.totalorder %s22, %s25
    %p31 = scmp.eq.s32.totalorder %s12, 0
    %p32 = por %p30, %p31
    %p33 = scmp.ne.s32.totalorder %s22, %s25
    %p34 = scmp.eq.s32.totalorder %s17, 1
    %p35 = por %p33, %p34
    %p36 = scmp.ne.s32.totalorder %s25, %s26
    %p37 = scmp.eq.s32.totalorder %s17, 0
    %p38 = por %p36, %p37
    %p39 = scmp.ne.s32.totalorder %s25, %s26
    %p40 = scmp.eq.s32.totalorder %s18, 1
    %p41 = por %p39, %p40
    %p43 = scmp.ne.s32.totalorder %s26, %s42
    %p44 = scmp.eq.s32.totalorder %s18, 0
    %p45 = por %p43, %p44
    %s47 = sadd.s32 %s46, 1
    %p50 = scmp.eq.s32.totalorder %s12, 1
    %p51 = scmp.ne.s32.totalorder %s46, %s48
    %p52 = scmp.eq.s32.totalorder %s12, 0
    %p53 = por %p51, %p52
    %p54 = scmp.ne.s32.totalorder %s46, %s48
    %p55 = scmp.eq.s32.totalorder %s17, 1
    %p56 = por %p54, %p55
    %p57 = scmp.ne.s32.totalorder %s48, %s49
    %p58 = scmp.eq.s32.totalorder %s17, 0
    %p59 = por %p57, %p58
    %p60 = scmp.ne.s32.totalorder %s48, %s49
    %p61 = scmp.eq.s32.totalorder %s18, 1
    %p62 = por %p60, %p61
    %p64 = scmp.ne.s32.totalorder %s49, %s63
    %p65 = scmp.eq.s32.totalorder %s18, 0
    %p66 = por %p64, %p65
    %s68 = sadd.s32 %s67, 1
    %p71 = scmp.eq.s32.totalorder %s12, 1
    %p72 = scmp.ne.s32.totalorder %s67, %s69
    %p73 = scmp.eq.s32.totalorder %s12, 0
    %p74 = por %p72, %p73
    %p75 = scmp.ne.s32.totalorder %s67, %s69
    %p76 = scmp.eq.s32.totalorder %s17, 1
    %p77 = por %p75, %p76
    %p78 = scmp.ne.s32.totalorder %s69, %s70
    %p79 = scmp.eq.s32.totalorder %s17, 0
    %p80 = por %p78, %p79
    %p81 = scmp.ne.s32.totalorder %s69, %s70
    %p82 = scmp.eq.s32.totalorder %s18, 1
    %p83 = por %p81, %p82
    %p85 = scmp.ne.s32.totalorder %s70, %s84
    %p86 = scmp.eq.s32.totalorder %s18, 0
    %p87 = por %p85, %p86
    %s89 = sadd.s32 %s88, 1
    %p92 = scmp.eq.s32.totalorder %s12, 1
    %p93 = scmp.ne.s32.totalorder %s88, %s90
    %p94 = scmp.eq.s32.totalorder %s12, 0
    %p95 = por %p93, %p94
    %p96 = scmp.ne.s32.totalorder %s88, %s90
    %p97 = scmp.eq.s32.totalorder %s17, 1
    %p98 = por %p96, %p97
    %p99 = scmp.ne.s32.totalorder %s90, %s91
    %p100 = scmp.eq.s32.totalorder %s17, 0
    %p101 = por %p99, %p100
    %p102 = scmp.ne.s32.totalorder %s90, %s91
    %p103 = scmp.eq.s32.totalorder %s18, 1
    %p104 = por %p102, %p103
    %p106 = scmp.ne.s32.totalorder %s91, %s105
    %p107 = scmp.eq.s32.totalorder %s18, 0
    %p108 = por %p106, %p107
    %s109 = ssub.s32 %s12, %s19
    %p110 = scmp.eq.s32.totalorder %s109, 0
    %s112 = sadd.s32 %s111, 1
    %s113 = scalar_select %p110, %s111, %s112
    %p116 = pneg %p110
    %p117 = scmp.eq.s32.totalorder %s12, 1
    %p118 = por %p116, %p117
    %p119 = scmp.ne.s32.totalorder %s111, %s114
    %p120 = scmp.eq.s32.totalorder %s12, 0
    %p121 = por %p119, %p120
    %p122 = scmp.ne.s32.totalorder %s111, %s114
    %p123 = scmp.eq.s32.totalorder %s17, 1
    %p124 = por %p122, %p123
    %p125 = scmp.ne.s32.totalorder %s114, %s115
    %p126 = scmp.eq.s32.totalorder %s17, 0
    %p127 = por %p125, %p126
    %p128 = scmp.ne.s32.totalorder %s114, %s115
    %p129 = scmp.eq.s32.totalorder %s18, 1
    %p130 = por %p128, %p129
    %p132 = scmp.ne.s32.totalorder %s115, %s131
    %p133 = scmp.eq.s32.totalorder %s18, 0
    %p134 = por %p132, %p133
    %s135 = ssub.s32 %s12, %s19
    %p136 = scmp.eq.s32.totalorder %s135, 0
    %s138 = sadd.s32 %s137, 1
    %s139 = scalar_select %p136, %s137, %s138
    %p142 = pneg %p136
    %p143 = scmp.eq.s32.totalorder %s12, 1
    %p144 = por %p142, %p143
    %p145 = scmp.ne.s32.totalorder %s137, %s140
    %p146 = scmp.eq.s32.totalorder %s12, 0
    %p147 = por %p145, %p146
    %p148 = scmp.ne.s32.totalorder %s137, %s140
    %p149 = scmp.eq.s32.totalorder %s17, 1
    %p150 = por %p148, %p149
    %p151 = scmp.ne.s32.totalorder %s140, %s141
    %p152 = scmp.eq.s32.totalorder %s17, 0
    %p153 = por %p151, %p152
    %p154 = scmp.ne.s32.totalorder %s140, %s141
    %p155 = scmp.eq.s32.totalorder %s18, 1
    %p156 = por %p154, %p155
    %p158 = scmp.ne.s32.totalorder %s141, %s157
    %p159 = scmp.eq.s32.totalorder %s18, 0
    %p160 = por %p158, %p159
    %p161 = scmp.le.s32.totalorder 1, %s12
    %p162 = scmp.lt.s32.totalorder %s12, 3
    %p163 = pnand %p161, %p162
    %p164 = pneg %p163
    // Predicated region
    $region9: #{aux_head_forward.4} parent=5 // pred_check
      _
    $region10: #{aux_head_forward.4} parent=5 // pred_check_branch
      %166 = sbr.rel (%p163) target = $region12
    $region11: #{aux_head_forward.4} parent=5 // pred_region
      %s167 = ssub.s32 %s12, 1
      // Predicated region
      $region13: #{aux_head_forward.4} parent=11 // pred_check
        %p168 = pneg %p59
      $region14: #{aux_head_forward.4} parent=11 // pred_check_branch
        %170 = sbr.rel (%p168) target = $region16
      $region15: #{aux_head_forward.4} parent=11 // pred_region
        _
      $region16: #{aux_head_forward.4} parent=11 // pred_fallthru
        _
      // Predicated region
      $region17: #{aux_head_forward.4} parent=11 // pred_check
        %p171 = pneg %p80
      $region18: #{aux_head_forward.4} parent=11 // pred_check_branch
        %173 = sbr.rel (%p171) target = $region20
      $region19: #{aux_head_forward.4} parent=11 // pred_region
        _
      $region20: #{aux_head_forward.4} parent=11 // pred_fallthru
        _
      // Predicated region
      $region21: #{aux_head_forward.4} parent=11 // pred_check
        %p174 = pneg %p101
      $region22: #{aux_head_forward.4} parent=11 // pred_check_branch
        %176 = sbr.rel (%p174) target = $region24
      $region23: #{aux_head_forward.4} parent=11 // pred_region
        _
      $region24: #{aux_head_forward.4} parent=11 // pred_fallthru
        _
    $region12: #{aux_head_forward.4} parent=5 // pred_fallthru
      _
    %p177 = scmp.lt.s32.totalorder %s12, 2
    // Predicated region
    $region25: #{aux_head_forward.4} parent=5 // pred_check
      %p178 = pneg %p177
    $region26: #{aux_head_forward.4} parent=5 // pred_check_branch
      %180 = sbr.rel (%p178) target = $region28
    $region27: #{aux_head_forward.4} parent=5 // pred_region
      // Predicated region
      $region29: #{aux_head_forward.4} parent=27 // pred_check
        %p181 = pneg %p32
      $region30: #{aux_head_forward.4} parent=27 // pred_check_branch
        %183 = sbr.rel (%p181) target = $region32
      $region31: #{aux_head_forward.4} parent=27 // pred_region
        %s184 = smul.u32 4, %s12
        %p185 = scmp.lt.s32.totalorder %s184, 7
        %s186 = scalar_select %p185, %s184, 7
        %s187 = smul.addr %s186, 8
        %s188 = scalar_lea.vmem %s0, %s187
        %s189 = smul.u32 4, %s12
      $region32: #{aux_head_forward.4} parent=27 // pred_fallthru
        _
    $region28: #{aux_head_forward.4} parent=5 // pred_fallthru
      _
    %p190 = scmp.le.s32.totalorder 1, %s12
    %p191 = scmp.lt.s32.totalorder %s12, 3
    %p192 = pnand %p190, %p191
    %p193 = pneg %p192
    // Predicated region
    $region33: #{aux_head_forward.4} parent=5 // pred_check
      _
    $region34: #{aux_head_forward.4} parent=5 // pred_check_branch
      %195 = sbr.rel (%p192) target = $region36
    $region35: #{aux_head_forward.4} parent=5 // pred_region
      %s196 = ssub.s32 %s12, 1
      %s197 = smul.u32 4, %s17
      %p198 = scmp.lt.s32.totalorder %s197, 7
      %s199 = scalar_select %p198, %s197, 7
      %s200 = smul.addr %s199, 8
      %s201 = scalar_lea.vmem %s0, %s200
      %p202 = pneg %p38
      %p203 = pneg %p35
      %p204 = pneg %p59
      %p205 = pneg %p56
      %p206 = pneg %p80
      %p207 = pneg %p77
      %p208 = pneg %p101
      %p209 = pneg %p98
      %p210 = pneg %p127
      %p211 = pneg %p124
      %p212 = scmp.lt.s32.totalorder %s17, 1
      %s213 = scalar_select %p212, %s17, 1
      %s214 = smul.addr %s213, 6
      %s215 = smul.addr %s214, 8
      %s216 = scalar_lea.vmem %s4, %s215
      %p217 = pneg %p153
      %p218 = pneg %p150
      %p219 = scmp.lt.s32.totalorder %s17, 1
      %s220 = scalar_select %p219, %s17, 1
      %s221 = smul.addr %s220, 6
      %s222 = smul.addr %s221, 8
      %s223 = scalar_lea.vmem %s5, %s222
      %s224 = smul.u32 4, %s17
      %p225 = scmp.lt.s32.totalorder %s224, 7
      %s226 = scalar_select %p225, %s224, 7
      %s227 = smul.addr %s226, 8
      %s228 = scalar_lea.vmem %s0, %s227
      %s229 = smul.u32 4, %s17
      %p230 = scmp.lt.s32.totalorder %s17, 1
      %s231 = scalar_select %p230, %s17, 1
      %s232 = smul.addr %s231, 6
      %s233 = smul.addr %s232, 8
      %s234 = scalar_lea.vmem %s4, %s233
      %p235 = scmp.lt.s32.totalorder %s17, 1
      %s236 = scalar_select %p235, %s17, 1
      %s237 = smul.addr %s236, 6
      %s238 = smul.addr %s237, 8
      %s239 = scalar_lea.vmem %s5, %s238
      %v240 = vld [vmem:[%s228] sm:$0xff]
      %v241 = vld [vmem:[%s228 + $0x8] sm:$0xff]
      %v242 = vld [vmem:[%s228 + $0x10] sm:$0xff]
      %v243 = vld [vmem:[%s228 + $0x18] sm:$0xff]
      %v244 = vld [vmem:[%s1] sm:$0x1]
      %v246 = vlaneseq
      %v247 = vshrl.u32 %v246, 7
      %v248 = vsub.s32 0, %v247
      %v249 = vrot.slane %v244, %v248
      %v251 = vmul.f32 %v240, %v249
      %v252 = vmul.f32 %v241, %v249
      %v253 = vmul.f32 %v242, %v249
      %v254 = vmul.f32 %v243, %v249
      %v255 = vld [vmem:[%s2] sm:$0x1]
      %v257 = vlaneseq
      %v258 = vshrl.u32 %v257, 7
      %v259 = vsub.s32 0, %v258
      %v260 = vrot.slane %v255, %v259
      %v262 = vadd.f32 %v251, %v260
      %v263 = vadd.f32 %v252, %v260
      %v264 = vadd.f32 %v253, %v260
      %v265 = vadd.f32 %v254, %v260
      %v266 = vmax.f32 %v262, 0.0
      %v267 = vmax.f32 %v263, 0.0
      %v268 = vmax.f32 %v264, 0.0
      %v269 = vmax.f32 %v265, 0.0
      %v270 = vpack.c.bf16 %v266, %v266
      %v271 = vpack.c.bf16 %v267, %v267
      %v272 = vpack.c.bf16 %v268, %v268
      %v273 = vpack.c.bf16 %v269, %v269
      %v274 = vld [vmem:[%s3] sm:$0xff]
      %v275 = vld [vmem:[%s3 + $0x8] sm:$0xff]
      %v276 = vld [vmem:[%s3 + $0x10] sm:$0xff]
      %v277 = vld [vmem:[%s3 + $0x18] sm:$0xff]
      %v278 = vld [vmem:[%s3 + $0x20] sm:$0xff]
      %v279 = vld [vmem:[%s3 + $0x28] sm:$0xff]
      %v280 = vld [vmem:[%s3 + $0x30] sm:$0xff]
      %v281 = vld [vmem:[%s3 + $0x38] sm:$0xff]
      %v282 = vld [vmem:[%s3 + $0x40] sm:$0xff]
      %v283 = vld [vmem:[%s3 + $0x48] sm:$0xff]
      %v284 = vld [vmem:[%s3 + $0x50] sm:$0xff]
      %v285 = vld [vmem:[%s3 + $0x58] sm:$0xff]
      %v286 = vld [vmem:[%s3 + $0x60] sm:$0xff]
      %v287 = vld [vmem:[%s3 + $0x68] sm:$0xff]
      %v288 = vld [vmem:[%s3 + $0x70] sm:$0xff]
      %v289 = vld [vmem:[%s3 + $0x78] sm:$0xff]
      %v290 = vld [vmem:[%s3 + $0x80] sm:$0xff]
      %v291 = vld [vmem:[%s3 + $0x88] sm:$0xff]
      %v292 = vld [vmem:[%s3 + $0x90] sm:$0xff]
      %v293 = vld [vmem:[%s3 + $0x98] sm:$0xff]
      %v294 = vld [vmem:[%s3 + $0xa0] sm:$0xff]
      %v295 = vld [vmem:[%s3 + $0xa8] sm:$0xff]
      %v296 = vld [vmem:[%s3 + $0xb0] sm:$0xff]
      %v297 = vld [vmem:[%s3 + $0xb8] sm:$0xff]
      %v298 = vld [vmem:[%s3 + $0xc0] sm:$0xff]
      %v299 = vld [vmem:[%s3 + $0xc8] sm:$0xff]
      %v300 = vld [vmem:[%s3 + $0xd0] sm:$0xff]
      %v301 = vld [vmem:[%s3 + $0xd8] sm:$0xff]
      %v302 = vld [vmem:[%s3 + $0xe0] sm:$0xff]
      %v303 = vld [vmem:[%s3 + $0xe8] sm:$0xff]
      %v304 = vld [vmem:[%s3 + $0xf0] sm:$0xff]
      %v305 = vld [vmem:[%s3 + $0xf8] sm:$0xff]
      %v306 = vld [vmem:[%s3 + $0x100] sm:$0xff]
      %v307 = vld [vmem:[%s3 + $0x108] sm:$0xff]
      %v308 = vld [vmem:[%s3 + $0x110] sm:$0xff]
      %v309 = vld [vmem:[%s3 + $0x118] sm:$0xff]
      %v310 = vld [vmem:[%s3 + $0x120] sm:$0xff]
      %v311 = vld [vmem:[%s3 + $0x128] sm:$0xff]
      %v312 = vld [vmem:[%s3 + $0x130] sm:$0xff]
      %v313 = vld [vmem:[%s3 + $0x138] sm:$0xff]
      %v314 = vld [vmem:[%s3 + $0x140] sm:$0xff]
      %v315 = vld [vmem:[%s3 + $0x148] sm:$0xff]
      %v316 = vld [vmem:[%s3 + $0x150] sm:$0xff]
      %v317 = vld [vmem:[%s3 + $0x158] sm:$0xff]
      %v318 = vld [vmem:[%s3 + $0x160] sm:$0xff]
      %v319 = vld [vmem:[%s3 + $0x168] sm:$0xff]
      %v320 = vld [vmem:[%s3 + $0x170] sm:$0xff]
      %v321 = vld [vmem:[%s3 + $0x178] sm:$0xff]
      %v322 = vld [vmem:[%s3 + $0x180] sm:$0xff]
      %v323 = vld [vmem:[%s3 + $0x188] sm:$0xff]
      %v324 = vld [vmem:[%s3 + $0x190] sm:$0xff]
      %v325 = vld [vmem:[%s3 + $0x198] sm:$0xff]
      %v326 = vld [vmem:[%s3 + $0x1a0] sm:$0xff]
      %v327 = vld [vmem:[%s3 + $0x1a8] sm:$0xff]
      %v328 = vld [vmem:[%s3 + $0x1b0] sm:$0xff]
      %v329 = vld [vmem:[%s3 + $0x1b8] sm:$0xff]
      %v330 = vld [vmem:[%s3 + $0x1c0] sm:$0xff]
      %v331 = vld [vmem:[%s3 + $0x1c8] sm:$0xff]
      %v332 = vld [vmem:[%s3 + $0x1d0] sm:$0xff]
      %v333 = vld [vmem:[%s3 + $0x1d8] sm:$0xff]
      %v334 = vld [vmem:[%s3 + $0x1e0] sm:$0xff]
      %v335 = vld [vmem:[%s3 + $0x1e8] sm:$0xff]
      %v336 = vld [vmem:[%s3 + $0x1f0] sm:$0xff]
      %v337 = vld [vmem:[%s3 + $0x1f8] sm:$0xff]
      %v338 = vld [vmem:[%s3 + $0x200] sm:$0xff]
      %v339 = vld [vmem:[%s3 + $0x208] sm:$0xff]
      %v340 = vld [vmem:[%s3 + $0x210] sm:$0xff]
      %v341 = vld [vmem:[%s3 + $0x218] sm:$0xff]
      %v342 = vld [vmem:[%s3 + $0x220] sm:$0xff]
      %v343 = vld [vmem:[%s3 + $0x228] sm:$0xff]
      %v344 = vld [vmem:[%s3 + $0x230] sm:$0xff]
      %v345 = vld [vmem:[%s3 + $0x238] sm:$0xff]
      %v346 = vld [vmem:[%s3 + $0x240] sm:$0xff]
      %v347 = vld [vmem:[%s3 + $0x248] sm:$0xff]
      %v348 = vld [vmem:[%s3 + $0x250] sm:$0xff]
      %v349 = vld [vmem:[%s3 + $0x258] sm:$0xff]
      %v350 = vld [vmem:[%s3 + $0x260] sm:$0xff]
      %v351 = vld [vmem:[%s3 + $0x268] sm:$0xff]
      %v352 = vld [vmem:[%s3 + $0x270] sm:$0xff]
      %v353 = vld [vmem:[%s3 + $0x278] sm:$0xff]
      %v354 = vld [vmem:[%s3 + $0x280] sm:$0xff]
      %v355 = vld [vmem:[%s3 + $0x288] sm:$0xff]
      %v356 = vld [vmem:[%s3 + $0x290] sm:$0xff]
      %v357 = vld [vmem:[%s3 + $0x298] sm:$0xff]
      %v358 = vld [vmem:[%s3 + $0x2a0] sm:$0xff]
      %v359 = vld [vmem:[%s3 + $0x2a8] sm:$0xff]
      %v360 = vld [vmem:[%s3 + $0x2b0] sm:$0xff]
      %v361 = vld [vmem:[%s3 + $0x2b8] sm:$0xff]
      %v362 = vld [vmem:[%s3 + $0x2c0] sm:$0xff]
      %v363 = vld [vmem:[%s3 + $0x2c8] sm:$0xff]
      %v364 = vld [vmem:[%s3 + $0x2d0] sm:$0xff]
      %v365 = vld [vmem:[%s3 + $0x2d8] sm:$0xff]
      %v366 = vld [vmem:[%s3 + $0x2e0] sm:$0xff]
      %v367 = vld [vmem:[%s3 + $0x2e8] sm:$0xff]
      %v368 = vld [vmem:[%s3 + $0x2f0] sm:$0xff]
      %v369 = vld [vmem:[%s3 + $0x2f8] sm:$0xff]
      %v370 = vld [vmem:[%s3 + $0x300] sm:$0xff]
      %v371 = vld [vmem:[%s3 + $0x308] sm:$0xff]
      %v372 = vld [vmem:[%s3 + $0x310] sm:$0xff]
      %v373 = vld [vmem:[%s3 + $0x318] sm:$0xff]
      %v374 = vld [vmem:[%s3 + $0x320] sm:$0xff]
      %v375 = vld [vmem:[%s3 + $0x328] sm:$0xff]
      %v376 = vld [vmem:[%s3 + $0x330] sm:$0xff]
      %v377 = vld [vmem:[%s3 + $0x338] sm:$0xff]
      %v378 = vld [vmem:[%s3 + $0x340] sm:$0xff]
      %v379 = vld [vmem:[%s3 + $0x348] sm:$0xff]
      %v380 = vld [vmem:[%s3 + $0x350] sm:$0xff]
      %v381 = vld [vmem:[%s3 + $0x358] sm:$0xff]
      %v382 = vld [vmem:[%s3 + $0x360] sm:$0xff]
      %v383 = vld [vmem:[%s3 + $0x368] sm:$0xff]
      %v384 = vld [vmem:[%s3 + $0x370] sm:$0xff]
      %v385 = vld [vmem:[%s3 + $0x378] sm:$0xff]
      %v386 = vld [vmem:[%s3 + $0x380] sm:$0xff]
      %v387 = vld [vmem:[%s3 + $0x388] sm:$0xff]
      %v388 = vld [vmem:[%s3 + $0x390] sm:$0xff]
      %v389 = vld [vmem:[%s3 + $0x398] sm:$0xff]
      %v390 = vld [vmem:[%s3 + $0x3a0] sm:$0xff]
      %v391 = vld [vmem:[%s3 + $0x3a8] sm:$0xff]
      %v392 = vld [vmem:[%s3 + $0x3b0] sm:$0xff]
      %v393 = vld [vmem:[%s3 + $0x3b8] sm:$0xff]
      %v394 = vld [vmem:[%s3 + $0x3c0] sm:$0xff]
      %v395 = vld [vmem:[%s3 + $0x3c8] sm:$0xff]
      %v396 = vld [vmem:[%s3 + $0x3d0] sm:$0xff]
      %v397 = vld [vmem:[%s3 + $0x3d8] sm:$0xff]
      %v398 = vld [vmem:[%s3 + $0x3e0] sm:$0xff]
      %v399 = vld [vmem:[%s3 + $0x3e8] sm:$0xff]
      %v400 = vld [vmem:[%s3 + $0x3f0] sm:$0xff]
      %v401 = vld [vmem:[%s3 + $0x3f8] sm:$0xff]
      %v402 = vld [vmem:[%s3 + $0x400] sm:$0xff]
      %v403 = vld [vmem:[%s3 + $0x408] sm:$0xff]
      %v404 = vld [vmem:[%s3 + $0x410] sm:$0xff]
      %v405 = vld [vmem:[%s3 + $0x418] sm:$0xff]
      %v406 = vld [vmem:[%s3 + $0x420] sm:$0xff]
      %v407 = vld [vmem:[%s3 + $0x428] sm:$0xff]
      %v408 = vld [vmem:[%s3 + $0x430] sm:$0xff]
      %v409 = vld [vmem:[%s3 + $0x438] sm:$0xff]
      %v410 = vld [vmem:[%s3 + $0x440] sm:$0xff]
      %v411 = vld [vmem:[%s3 + $0x448] sm:$0xff]
      %v412 = vld [vmem:[%s3 + $0x450] sm:$0xff]
      %v413 = vld [vmem:[%s3 + $0x458] sm:$0xff]
      %v414 = vld [vmem:[%s3 + $0x460] sm:$0xff]
      %v415 = vld [vmem:[%s3 + $0x468] sm:$0xff]
      %v416 = vld [vmem:[%s3 + $0x470] sm:$0xff]
      %v417 = vld [vmem:[%s3 + $0x478] sm:$0xff]
      %v418 = vld [vmem:[%s3 + $0x480] sm:$0xff]
      %v419 = vld [vmem:[%s3 + $0x488] sm:$0xff]
      %v420 = vld [vmem:[%s3 + $0x490] sm:$0xff]
      %v421 = vld [vmem:[%s3 + $0x498] sm:$0xff]
      %v422 = vld [vmem:[%s3 + $0x4a0] sm:$0xff]
      %v423 = vld [vmem:[%s3 + $0x4a8] sm:$0xff]
      %v424 = vld [vmem:[%s3 + $0x4b0] sm:$0xff]
      %v425 = vld [vmem:[%s3 + $0x4b8] sm:$0xff]
      %v426 = vld [vmem:[%s3 + $0x4c0] sm:$0xff]
      %v427 = vld [vmem:[%s3 + $0x4c8] sm:$0xff]
      %v428 = vld [vmem:[%s3 + $0x4d0] sm:$0xff]
      %v429 = vld [vmem:[%s3 + $0x4d8] sm:$0xff]
      %v430 = vld [vmem:[%s3 + $0x4e0] sm:$0xff]
      %v431 = vld [vmem:[%s3 + $0x4e8] sm:$0xff]
      %v432 = vld [vmem:[%s3 + $0x4f0] sm:$0xff]
      %v433 = vld [vmem:[%s3 + $0x4f8] sm:$0xff]
      %v434 = vld [vmem:[%s3 + $0x500] sm:$0xff]
      %v435 = vld [vmem:[%s3 + $0x508] sm:$0xff]
      %v436 = vld [vmem:[%s3 + $0x510] sm:$0xff]
      %v437 = vld [vmem:[%s3 + $0x518] sm:$0xff]
      %v438 = vld [vmem:[%s3 + $0x520] sm:$0xff]
      %v439 = vld [vmem:[%s3 + $0x528] sm:$0xff]
      %v440 = vld [vmem:[%s3 + $0x530] sm:$0xff]
      %v441 = vld [vmem:[%s3 + $0x538] sm:$0xff]
      %v442 = vld [vmem:[%s3 + $0x540] sm:$0xff]
      %v443 = vld [vmem:[%s3 + $0x548] sm:$0xff]
      %v444 = vld [vmem:[%s3 + $0x550] sm:$0xff]
      %v445 = vld [vmem:[%s3 + $0x558] sm:$0xff]
      %v446 = vld [vmem:[%s3 + $0x560] sm:$0xff]
      %v447 = vld [vmem:[%s3 + $0x568] sm:$0xff]
      %v448 = vld [vmem:[%s3 + $0x570] sm:$0xff]
      %v449 = vld [vmem:[%s3 + $0x578] sm:$0xff]
      %v450 = vld [vmem:[%s3 + $0x580] sm:$0xff]
      %v451 = vld [vmem:[%s3 + $0x588] sm:$0xff]
      %v452 = vld [vmem:[%s3 + $0x590] sm:$0xff]
      %v453 = vld [vmem:[%s3 + $0x598] sm:$0xff]
      %v454 = vld [vmem:[%s3 + $0x5a0] sm:$0xff]
      %v455 = vld [vmem:[%s3 + $0x5a8] sm:$0xff]
      %v456 = vld [vmem:[%s3 + $0x5b0] sm:$0xff]
      %v457 = vld [vmem:[%s3 + $0x5b8] sm:$0xff]
      %v458 = vld [vmem:[%s3 + $0x5c0] sm:$0xff]
      %v459 = vld [vmem:[%s3 + $0x5c8] sm:$0xff]
      %v460 = vld [vmem:[%s3 + $0x5d0] sm:$0xff]
      %v461 = vld [vmem:[%s3 + $0x5d8] sm:$0xff]
      %v462 = vld [vmem:[%s3 + $0x5e0] sm:$0xff]
      %v463 = vld [vmem:[%s3 + $0x5e8] sm:$0xff]
      %v464 = vld [vmem:[%s3 + $0x5f0] sm:$0xff]
      %v465 = vld [vmem:[%s3 + $0x5f8] sm:$0xff]
      %v658 = vunpack.c.l.b16 %v274
      %v659 = vunpack.c.h.b16 %v274
      %v660 = vunpack.c.l.b16 %v275
      %v661 = vunpack.c.h.b16 %v275
      %v662 = vunpack.c.l.b16 %v276
      %v663 = vunpack.c.h.b16 %v276
      %v664 = vunpack.c.l.b16 %v277
      %v665 = vunpack.c.h.b16 %v277
      %v666 = vunpack.c.l.b16 %v278
      %v667 = vunpack.c.h.b16 %v278
      %v668 = vunpack.c.l.b16 %v279
      %v669 = vunpack.c.h.b16 %v279
      %v670 = vunpack.c.l.b16 %v280
      %v671 = vunpack.c.h.b16 %v280
      %v672 = vunpack.c.l.b16 %v281
      %v673 = vunpack.c.h.b16 %v281
      %v674 = vunpack.c.l.b16 %v282
      %v675 = vunpack.c.h.b16 %v282
      %v676 = vunpack.c.l.b16 %v283
      %v677 = vunpack.c.h.b16 %v283
      %v678 = vunpack.c.l.b16 %v284
      %v679 = vunpack.c.h.b16 %v284
      %v680 = vunpack.c.l.b16 %v285
      %v681 = vunpack.c.h.b16 %v285
      %v682 = vunpack.c.l.b16 %v286
      %v683 = vunpack.c.h.b16 %v286
      %v684 = vunpack.c.l.b16 %v287
      %v685 = vunpack.c.h.b16 %v287
      %v686 = vunpack.c.l.b16 %v288
      %v687 = vunpack.c.h.b16 %v288
      %v688 = vunpack.c.l.b16 %v289
      %v689 = vunpack.c.h.b16 %v289
      %v690 = vunpack.c.l.b16 %v290
      %v691 = vunpack.c.h.b16 %v290
      %v692 = vunpack.c.l.b16 %v291
      %v693 = vunpack.c.h.b16 %v291
      %v694 = vunpack.c.l.b16 %v292
      %v695 = vunpack.c.h.b16 %v292
      %v696 = vunpack.c.l.b16 %v293
      %v697 = vunpack.c.h.b16 %v293
      %v698 = vunpack.c.l.b16 %v294
      %v699 = vunpack.c.h.b16 %v294
      %v700 = vunpack.c.l.b16 %v295
      %v701 = vunpack.c.h.b16 %v295
      %v702 = vunpack.c.l.b16 %v296
      %v703 = vunpack.c.h.b16 %v296
      %v704 = vunpack.c.l.b16 %v297
      %v705 = vunpack.c.h.b16 %v297
      %v706 = vunpack.c.l.b16 %v298
      %v707 = vunpack.c.h.b16 %v298
      %v708 = vunpack.c.l.b16 %v299
      %v709 = vunpack.c.h.b16 %v299
      %v710 = vunpack.c.l.b16 %v300
      %v711 = vunpack.c.h.b16 %v300
      %v712 = vunpack.c.l.b16 %v301
      %v713 = vunpack.c.h.b16 %v301
      %v714 = vunpack.c.l.b16 %v302
      %v715 = vunpack.c.h.b16 %v302
      %v716 = vunpack.c.l.b16 %v303
      %v717 = vunpack.c.h.b16 %v303
      %v718 = vunpack.c.l.b16 %v304
      %v719 = vunpack.c.h.b16 %v304
      %v720 = vunpack.c.l.b16 %v305
      %v721 = vunpack.c.h.b16 %v305
      %v722 = vunpack.c.l.b16 %v306
      %v723 = vunpack.c.h.b16 %v306
      %v724 = vunpack.c.l.b16 %v307
      %v725 = vunpack.c.h.b16 %v307
      %v726 = vunpack.c.l.b16 %v308
      %v727 = vunpack.c.h.b16 %v308
      %v728 = vunpack.c.l.b16 %v309
      %v729 = vunpack.c.h.b16 %v309
      %v730 = vunpack.c.l.b16 %v310
      %v731 = vunpack.c.h.b16 %v310
      %v732 = vunpack.c.l.b16 %v311
      %v733 = vunpack.c.h.b16 %v311
      %v734 = vunpack.c.l.b16 %v312
      %v735 = vunpack.c.h.b16 %v312
      %v736 = vunpack.c.l.b16 %v313
      %v737 = vunpack.c.h.b16 %v313
      %v738 = vunpack.c.l.b16 %v314
      %v739 = vunpack.c.h.b16 %v314
      %v740 = vunpack.c.l.b16 %v315
      %v741 = vunpack.c.h.b16 %v315
      %v742 = vunpack.c.l.b16 %v316
      %v743 = vunpack.c.h.b16 %v316
      %v744 = vunpack.c.l.b16 %v317
      %v745 = vunpack.c.h.b16 %v317
      %v746 = vunpack.c.l.b16 %v318
      %v747 = vunpack.c.h.b16 %v318
      %v748 = vunpack.c.l.b16 %v319
      %v749 = vunpack.c.h.b16 %v319
      %v750 = vunpack.c.l.b16 %v320
      %v751 = vunpack.c.h.b16 %v320
      %v752 = vunpack.c.l.b16 %v321
      %v753 = vunpack.c.h.b16 %v321
      %v754 = vunpack.c.l.b16 %v322
      %v755 = vunpack.c.h.b16 %v322
      %v756 = vunpack.c.l.b16 %v323
      %v757 = vunpack.c.h.b16 %v323
      %v758 = vunpack.c.l.b16 %v324
      %v759 = vunpack.c.h.b16 %v324
      %v760 = vunpack.c.l.b16 %v325
      %v761 = vunpack.c.h.b16 %v325
      %v762 = vunpack.c.l.b16 %v326
      %v763 = vunpack.c.h.b16 %v326
      %v764 = vunpack.c.l.b16 %v327
      %v765 = vunpack.c.h.b16 %v327
      %v766 = vunpack.c.l.b16 %v328
      %v767 = vunpack.c.h.b16 %v328
      %v768 = vunpack.c.l.b16 %v329
      %v769 = vunpack.c.h.b16 %v329
      %v770 = vunpack.c.l.b16 %v330
      %v771 = vunpack.c.h.b16 %v330
      %v772 = vunpack.c.l.b16 %v331
      %v773 = vunpack.c.h.b16 %v331
      %v774 = vunpack.c.l.b16 %v332
      %v775 = vunpack.c.h.b16 %v332
      %v776 = vunpack.c.l.b16 %v333
      %v777 = vunpack.c.h.b16 %v333
      %v778 = vunpack.c.l.b16 %v334
      %v779 = vunpack.c.h.b16 %v334
      %v780 = vunpack.c.l.b16 %v335
      %v781 = vunpack.c.h.b16 %v335
      %v782 = vunpack.c.l.b16 %v336
      %v783 = vunpack.c.h.b16 %v336
      %v784 = vunpack.c.l.b16 %v337
      %v785 = vunpack.c.h.b16 %v337
      %v786 = vunpack.c.l.b16 %v338
      %v787 = vunpack.c.h.b16 %v338
      %v788 = vunpack.c.l.b16 %v339
      %v789 = vunpack.c.h.b16 %v339
      %v790 = vunpack.c.l.b16 %v340
      %v791 = vunpack.c.h.b16 %v340
      %v792 = vunpack.c.l.b16 %v341
      %v793 = vunpack.c.h.b16 %v341
      %v794 = vunpack.c.l.b16 %v342
      %v795 = vunpack.c.h.b16 %v342
      %v796 = vunpack.c.l.b16 %v343
      %v797 = vunpack.c.h.b16 %v343
      %v798 = vunpack.c.l.b16 %v344
      %v799 = vunpack.c.h.b16 %v344
      %v800 = vunpack.c.l.b16 %v345
      %v801 = vunpack.c.h.b16 %v345
      %v802 = vunpack.c.l.b16 %v346
      %v803 = vunpack.c.h.b16 %v346
      %v804 = vunpack.c.l.b16 %v347
      %v805 = vunpack.c.h.b16 %v347
      %v806 = vunpack.c.l.b16 %v348
      %v807 = vunpack.c.h.b16 %v348
      %v808 = vunpack.c.l.b16 %v349
      %v809 = vunpack.c.h.b16 %v349
      %v810 = vunpack.c.l.b16 %v350
      %v811 = vunpack.c.h.b16 %v350
      %v812 = vunpack.c.l.b16 %v351
      %v813 = vunpack.c.h.b16 %v351
      %v814 = vunpack.c.l.b16 %v352
      %v815 = vunpack.c.h.b16 %v352
      %v816 = vunpack.c.l.b16 %v353
      %v817 = vunpack.c.h.b16 %v353
      %v818 = vunpack.c.l.b16 %v354
      %v819 = vunpack.c.h.b16 %v354
      %v820 = vunpack.c.l.b16 %v355
      %v821 = vunpack.c.h.b16 %v355
      %v822 = vunpack.c.l.b16 %v356
      %v823 = vunpack.c.h.b16 %v356
      %v824 = vunpack.c.l.b16 %v357
      %v825 = vunpack.c.h.b16 %v357
      %v826 = vunpack.c.l.b16 %v358
      %v827 = vunpack.c.h.b16 %v358
      %v828 = vunpack.c.l.b16 %v359
      %v829 = vunpack.c.h.b16 %v359
      %v830 = vunpack.c.l.b16 %v360
      %v831 = vunpack.c.h.b16 %v360
      %v832 = vunpack.c.l.b16 %v361
      %v833 = vunpack.c.h.b16 %v361
      %v834 = vunpack.c.l.b16 %v362
      %v835 = vunpack.c.h.b16 %v362
      %v836 = vunpack.c.l.b16 %v363
      %v837 = vunpack.c.h.b16 %v363
      %v838 = vunpack.c.l.b16 %v364
      %v839 = vunpack.c.h.b16 %v364
      %v840 = vunpack.c.l.b16 %v365
      %v841 = vunpack.c.h.b16 %v365
      %v842 = vunpack.c.l.b16 %v366
      %v843 = vunpack.c.h.b16 %v366
      %v844 = vunpack.c.l.b16 %v367
      %v845 = vunpack.c.h.b16 %v367
      %v846 = vunpack.c.l.b16 %v368
      %v847 = vunpack.c.h.b16 %v368
      %v848 = vunpack.c.l.b16 %v369
      %v849 = vunpack.c.h.b16 %v369
      %v850 = vunpack.c.l.b16 %v370
      %v851 = vunpack.c.h.b16 %v370
      %v852 = vunpack.c.l.b16 %v371
      %v853 = vunpack.c.h.b16 %v371
      %v854 = vunpack.c.l.b16 %v372
      %v855 = vunpack.c.h.b16 %v372
      %v856 = vunpack.c.l.b16 %v373
      %v857 = vunpack.c.h.b16 %v373
      %v858 = vunpack.c.l.b16 %v374
      %v859 = vunpack.c.h.b16 %v374
      %v860 = vunpack.c.l.b16 %v375
      %v861 = vunpack.c.h.b16 %v375
      %v862 = vunpack.c.l.b16 %v376
      %v863 = vunpack.c.h.b16 %v376
      %v864 = vunpack.c.l.b16 %v377
      %v865 = vunpack.c.h.b16 %v377
      %v866 = vunpack.c.l.b16 %v378
      %v867 = vunpack.c.h.b16 %v378
      %v868 = vunpack.c.l.b16 %v379
      %v869 = vunpack.c.h.b16 %v379
      %v870 = vunpack.c.l.b16 %v380
      %v871 = vunpack.c.h.b16 %v380
      %v872 = vunpack.c.l.b16 %v381
      %v873 = vunpack.c.h.b16 %v381
      %v874 = vunpack.c.l.b16 %v382
      %v875 = vunpack.c.h.b16 %v382
      %v876 = vunpack.c.l.b16 %v383
      %v877 = vunpack.c.h.b16 %v383
      %v878 = vunpack.c.l.b16 %v384
      %v879 = vunpack.c.h.b16 %v384
      %v880 = vunpack.c.l.b16 %v385
      %v881 = vunpack.c.h.b16 %v385
      %v882 = vunpack.c.l.b16 %v386
      %v883 = vunpack.c.h.b16 %v386
      %v884 = vunpack.c.l.b16 %v387
      %v885 = vunpack.c.h.b16 %v387
      %v886 = vunpack.c.l.b16 %v388
      %v887 = vunpack.c.h.b16 %v388
      %v888 = vunpack.c.l.b16 %v389
      %v889 = vunpack.c.h.b16 %v389
      %v890 = vunpack.c.l.b16 %v390
      %v891 = vunpack.c.h.b16 %v390
      %v892 = vunpack.c.l.b16 %v391
      %v893 = vunpack.c.h.b16 %v391
      %v894 = vunpack.c.l.b16 %v392
      %v895 = vunpack.c.h.b16 %v392
      %v896 = vunpack.c.l.b16 %v393
      %v897 = vunpack.c.h.b16 %v393
      %v898 = vunpack.c.l.b16 %v394
      %v899 = vunpack.c.h.b16 %v394
      %v900 = vunpack.c.l.b16 %v395
      %v901 = vunpack.c.h.b16 %v395
      %v902 = vunpack.c.l.b16 %v396
      %v903 = vunpack.c.h.b16 %v396
      %v904 = vunpack.c.l.b16 %v397
      %v905 = vunpack.c.h.b16 %v397
      %v906 = vunpack.c.l.b16 %v398
      %v907 = vunpack.c.h.b16 %v398
      %v908 = vunpack.c.l.b16 %v399
      %v909 = vunpack.c.h.b16 %v399
      %v910 = vunpack.c.l.b16 %v400
      %v911 = vunpack.c.h.b16 %v400
      %v912 = vunpack.c.l.b16 %v401
      %v913 = vunpack.c.h.b16 %v401
      %v914 = vunpack.c.l.b16 %v402
      %v915 = vunpack.c.h.b16 %v402
      %v916 = vunpack.c.l.b16 %v403
      %v917 = vunpack.c.h.b16 %v403
      %v918 = vunpack.c.l.b16 %v404
      %v919 = vunpack.c.h.b16 %v404
      %v920 = vunpack.c.l.b16 %v405
      %v921 = vunpack.c.h.b16 %v405
      %v922 = vunpack.c.l.b16 %v406
      %v923 = vunpack.c.h.b16 %v406
      %v924 = vunpack.c.l.b16 %v407
      %v925 = vunpack.c.h.b16 %v407
      %v926 = vunpack.c.l.b16 %v408
      %v927 = vunpack.c.h.b16 %v408
      %v928 = vunpack.c.l.b16 %v409
      %v929 = vunpack.c.h.b16 %v409
      %v930 = vunpack.c.l.b16 %v410
      %v931 = vunpack.c.h.b16 %v410
      %v932 = vunpack.c.l.b16 %v411
      %v933 = vunpack.c.h.b16 %v411
      %v934 = vunpack.c.l.b16 %v412
      %v935 = vunpack.c.h.b16 %v412
      %v936 = vunpack.c.l.b16 %v413
      %v937 = vunpack.c.h.b16 %v413
      %v938 = vunpack.c.l.b16 %v414
      %v939 = vunpack.c.h.b16 %v414
      %v940 = vunpack.c.l.b16 %v415
      %v941 = vunpack.c.h.b16 %v415
      %v942 = vunpack.c.l.b16 %v416
      %v943 = vunpack.c.h.b16 %v416
      %v944 = vunpack.c.l.b16 %v417
      %v945 = vunpack.c.h.b16 %v417
      %v946 = vunpack.c.l.b16 %v418
      %v947 = vunpack.c.h.b16 %v418
      %v948 = vunpack.c.l.b16 %v419
      %v949 = vunpack.c.h.b16 %v419
      %v950 = vunpack.c.l.b16 %v420
      %v951 = vunpack.c.h.b16 %v420
      %v952 = vunpack.c.l.b16 %v421
      %v953 = vunpack.c.h.b16 %v421
      %v954 = vunpack.c.l.b16 %v422
      %v955 = vunpack.c.h.b16 %v422
      %v956 = vunpack.c.l.b16 %v423
      %v957 = vunpack.c.h.b16 %v423
      %v958 = vunpack.c.l.b16 %v424
      %v959 = vunpack.c.h.b16 %v424
      %v960 = vunpack.c.l.b16 %v425
      %v961 = vunpack.c.h.b16 %v425
      %v962 = vunpack.c.l.b16 %v426
      %v963 = vunpack.c.h.b16 %v426
      %v964 = vunpack.c.l.b16 %v427
      %v965 = vunpack.c.h.b16 %v427
      %v966 = vunpack.c.l.b16 %v428
      %v967 = vunpack.c.h.b16 %v428
      %v968 = vunpack.c.l.b16 %v429
      %v969 = vunpack.c.h.b16 %v429
      %v970 = vunpack.c.l.b16 %v430
      %v971 = vunpack.c.h.b16 %v430
      %v972 = vunpack.c.l.b16 %v431
      %v973 = vunpack.c.h.b16 %v431
      %v974 = vunpack.c.l.b16 %v432
      %v975 = vunpack.c.h.b16 %v432
      %v976 = vunpack.c.l.b16 %v433
      %v977 = vunpack.c.h.b16 %v433
      %v978 = vunpack.c.l.b16 %v434
      %v979 = vunpack.c.h.b16 %v434
      %v980 = vunpack.c.l.b16 %v435
      %v981 = vunpack.c.h.b16 %v435
      %v982 = vunpack.c.l.b16 %v436
      %v983 = vunpack.c.h.b16 %v436
      %v984 = vunpack.c.l.b16 %v437
      %v985 = vunpack.c.h.b16 %v437
      %v986 = vunpack.c.l.b16 %v438
      %v987 = vunpack.c.h.b16 %v438
      %v988 = vunpack.c.l.b16 %v439
      %v989 = vunpack.c.h.b16 %v439
      %v990 = vunpack.c.l.b16 %v440
      %v991 = vunpack.c.h.b16 %v440
      %v992 = vunpack.c.l.b16 %v441
      %v993 = vunpack.c.h.b16 %v441
      %v994 = vunpack.c.l.b16 %v442
      %v995 = vunpack.c.h.b16 %v442
      %v996 = vunpack.c.l.b16 %v443
      %v997 = vunpack.c.h.b16 %v443
      %v998 = vunpack.c.l.b16 %v444
      %v999 = vunpack.c.h.b16 %v444
      %v1000 = vunpack.c.l.b16 %v445
      %v1001 = vunpack.c.h.b16 %v445
      %v1002 = vunpack.c.l.b16 %v446
      %v1003 = vunpack.c.h.b16 %v446
      %v1004 = vunpack.c.l.b16 %v447
      %v1005 = vunpack.c.h.b16 %v447
      %v1006 = vunpack.c.l.b16 %v448
      %v1007 = vunpack.c.h.b16 %v448
      %v1008 = vunpack.c.l.b16 %v449
      %v1009 = vunpack.c.h.b16 %v449
      %v1010 = vunpack.c.l.b16 %v450
      %v1011 = vunpack.c.h.b16 %v450
      %v1012 = vunpack.c.l.b16 %v451
      %v1013 = vunpack.c.h.b16 %v451
      %v1014 = vunpack.c.l.b16 %v452
      %v1015 = vunpack.c.h.b16 %v452
      %v1016 = vunpack.c.l.b16 %v453
      %v1017 = vunpack.c.h.b16 %v453
      %v1018 = vunpack.c.l.b16 %v454
      %v1019 = vunpack.c.h.b16 %v454
      %v1020 = vunpack.c.l.b16 %v455
      %v1021 = vunpack.c.h.b16 %v455
      %v1022 = vunpack.c.l.b16 %v456
      %v1023 = vunpack.c.h.b16 %v456
      %v1024 = vunpack.c.l.b16 %v457
      %v1025 = vunpack.c.h.b16 %v457
      %v1026 = vunpack.c.l.b16 %v458
      %v1027 = vunpack.c.h.b16 %v458
      %v1028 = vunpack.c.l.b16 %v459
      %v1029 = vunpack.c.h.b16 %v459
      %v1030 = vunpack.c.l.b16 %v460
      %v1031 = vunpack.c.h.b16 %v460
      %v1032 = vunpack.c.l.b16 %v461
      %v1033 = vunpack.c.h.b16 %v461
      %v1034 = vunpack.c.l.b16 %v462
      %v1035 = vunpack.c.h.b16 %v462
      %v1036 = vunpack.c.l.b16 %v463
      %v1037 = vunpack.c.h.b16 %v463
      %v1038 = vunpack.c.l.b16 %v464
      %v1039 = vunpack.c.h.b16 %v464
      %v1040 = vunpack.c.l.b16 %v465
      %v1041 = vunpack.c.h.b16 %v465
      %v1042 = vpack.c.b16 %v664, %v658
      %v1043 = vpack.c.b16 %v665, %v659
      %v1044 = vpack.c.b16 %v666, %v660
      %v1045 = vpack.c.b16 %v667, %v661
      %v1046 = vpack.c.b16 %v668, %v662
      %v1047 = vpack.c.b16 %v669, %v663
      %v1048 = vpack.c.b16 %v676, %v670
      %v1049 = vpack.c.b16 %v677, %v671
      %v1050 = vpack.c.b16 %v678, %v672
      %v1051 = vpack.c.b16 %v679, %v673
      %v1052 = vpack.c.b16 %v680, %v674
      %v1053 = vpack.c.b16 %v681, %v675
      %v1054 = vpack.c.b16 %v688, %v682
      %v1055 = vpack.c.b16 %v689, %v683
      %v1056 = vpack.c.b16 %v690, %v684
      %v1057 = vpack.c.b16 %v691, %v685
      %v1058 = vpack.c.b16 %v692, %v686
      %v1059 = vpack.c.b16 %v693, %v687
      %v1060 = vpack.c.b16 %v700, %v694
      %v1061 = vpack.c.b16 %v701, %v695
      %v1062 = vpack.c.b16 %v702, %v696
      %v1063 = vpack.c.b16 %v703, %v697
      %v1064 = vpack.c.b16 %v704, %v698
      %v1065 = vpack.c.b16 %v705, %v699
      %v1066 = vpack.c.b16 %v712, %v706
      %v1067 = vpack.c.b16 %v713, %v707
      %v1068 = vpack.c.b16 %v714, %v708
      %v1069 = vpack.c.b16 %v715, %v709
      %v1070 = vpack.c.b16 %v716, %v710
      %v1071 = vpack.c.b16 %v717, %v711
      %v1072 = vpack.c.b16 %v724, %v718
      %v1073 = vpack.c.b16 %v725, %v719
      %v1074 = vpack.c.b16 %v726, %v720
      %v1075 = vpack.c.b16 %v727, %v721
      %v1076 = vpack.c.b16 %v728, %v722
      %v1077 = vpack.c.b16 %v729, %v723
      %v1078 = vpack.c.b16 %v736, %v730
      %v1079 = vpack.c.b16 %v737, %v731
      %v1080 = vpack.c.b16 %v738, %v732
      %v1081 = vpack.c.b16 %v739, %v733
      %v1082 = vpack.c.b16 %v740, %v734
      %v1083 = vpack.c.b16 %v741, %v735
      %v1084 = vpack.c.b16 %v748, %v742
      %v1085 = vpack.c.b16 %v749, %v743
      %v1086 = vpack.c.b16 %v750, %v744
      %v1087 = vpack.c.b16 %v751, %v745
      %v1088 = vpack.c.b16 %v752, %v746
      %v1089 = vpack.c.b16 %v753, %v747
      %v1090 = vpack.c.b16 %v760, %v754
      %v1091 = vpack.c.b16 %v761, %v755
      %v1092 = vpack.c.b16 %v762, %v756
      %v1093 = vpack.c.b16 %v763, %v757
      %v1094 = vpack.c.b16 %v764, %v758
      %v1095 = vpack.c.b16 %v765, %v759
      %v1096 = vpack.c.b16 %v772, %v766
      %v1097 = vpack.c.b16 %v773, %v767
      %v1098 = vpack.c.b16 %v774, %v768
      %v1099 = vpack.c.b16 %v775, %v769
      %v1100 = vpack.c.b16 %v776, %v770
      %v1101 = vpack.c.b16 %v777, %v771
      %v1102 = vpack.c.b16 %v784, %v778
      %v1103 = vpack.c.b16 %v785, %v779
      %v1104 = vpack.c.b16 %v786, %v780
      %v1105 = vpack.c.b16 %v787, %v781
      %v1106 = vpack.c.b16 %v788, %v782
      %v1107 = vpack.c.b16 %v789, %v783
      %v1108 = vpack.c.b16 %v796, %v790
      %v1109 = vpack.c.b16 %v797, %v791
      %v1110 = vpack.c.b16 %v798, %v792
      %v1111 = vpack.c.b16 %v799, %v793
      %v1112 = vpack.c.b16 %v800, %v794
      %v1113 = vpack.c.b16 %v801, %v795
      %v1114 = vpack.c.b16 %v808, %v802
      %v1115 = vpack.c.b16 %v809, %v803
      %v1116 = vpack.c.b16 %v810, %v804
      %v1117 = vpack.c.b16 %v811, %v805
      %v1118 = vpack.c.b16 %v812, %v806
      %v1119 = vpack.c.b16 %v813, %v807
      %v1120 = vpack.c.b16 %v820, %v814
      %v1121 = vpack.c.b16 %v821, %v815
      %v1122 = vpack.c.b16 %v822, %v816
      %v1123 = vpack.c.b16 %v823, %v817
      %v1124 = vpack.c.b16 %v824, %v818
      %v1125 = vpack.c.b16 %v825, %v819
      %v1126 = vpack.c.b16 %v832, %v826
      %v1127 = vpack.c.b16 %v833, %v827
      %v1128 = vpack.c.b16 %v834, %v828
      %v1129 = vpack.c.b16 %v835, %v829
      %v1130 = vpack.c.b16 %v836, %v830
      %v1131 = vpack.c.b16 %v837, %v831
      %v1132 = vpack.c.b16 %v844, %v838
      %v1133 = vpack.c.b16 %v845, %v839
      %v1134 = vpack.c.b16 %v846, %v840
      %v1135 = vpack.c.b16 %v847, %v841
      %v1136 = vpack.c.b16 %v848, %v842
      %v1137 = vpack.c.b16 %v849, %v843
      %v1138 = vpack.c.b16 %v856, %v850
      %v1139 = vpack.c.b16 %v857, %v851
      %v1140 = vpack.c.b16 %v858, %v852
      %v1141 = vpack.c.b16 %v859, %v853
      %v1142 = vpack.c.b16 %v860, %v854
      %v1143 = vpack.c.b16 %v861, %v855
      %v1144 = vpack.c.b16 %v868, %v862
      %v1145 = vpack.c.b16 %v869, %v863
      %v1146 = vpack.c.b16 %v870, %v864
      %v1147 = vpack.c.b16 %v871, %v865
      %v1148 = vpack.c.b16 %v872, %v866
      %v1149 = vpack.c.b16 %v873, %v867
      %v1150 = vpack.c.b16 %v880, %v874
      %v1151 = vpack.c.b16 %v881, %v875
      %v1152 = vpack.c.b16 %v882, %v876
      %v1153 = vpack.c.b16 %v883, %v877
      %v1154 = vpack.c.b16 %v884, %v878
      %v1155 = vpack.c.b16 %v885, %v879
      %v1156 = vpack.c.b16 %v892, %v886
      %v1157 = vpack.c.b16 %v893, %v887
      %v1158 = vpack.c.b16 %v894, %v888
      %v1159 = vpack.c.b16 %v895, %v889
      %v1160 = vpack.c.b16 %v896, %v890
      %v1161 = vpack.c.b16 %v897, %v891
      %v1162 = vpack.c.b16 %v904, %v898
      %v1163 = vpack.c.b16 %v905, %v899
      %v1164 = vpack.c.b16 %v906, %v900
      %v1165 = vpack.c.b16 %v907, %v901
      %v1166 = vpack.c.b16 %v908, %v902
      %v1167 = vpack.c.b16 %v909, %v903
      %v1168 = vpack.c.b16 %v916, %v910
      %v1169 = vpack.c.b16 %v917, %v911
      %v1170 = vpack.c.b16 %v918, %v912
      %v1171 = vpack.c.b16 %v919, %v913
      %v1172 = vpack.c.b16 %v920, %v914
      %v1173 = vpack.c.b16 %v921, %v915
      %v1174 = vpack.c.b16 %v928, %v922
      %v1175 = vpack.c.b16 %v929, %v923
      %v1176 = vpack.c.b16 %v930, %v924
      %v1177 = vpack.c.b16 %v931, %v925
      %v1178 = vpack.c.b16 %v932, %v926
      %v1179 = vpack.c.b16 %v933, %v927
      %v1180 = vpack.c.b16 %v940, %v934
      %v1181 = vpack.c.b16 %v941, %v935
      %v1182 = vpack.c.b16 %v942, %v936
      %v1183 = vpack.c.b16 %v943, %v937
      %v1184 = vpack.c.b16 %v944, %v938
      %v1185 = vpack.c.b16 %v945, %v939
      %v1186 = vpack.c.b16 %v952, %v946
      %v1187 = vpack.c.b16 %v953, %v947
      %v1188 = vpack.c.b16 %v954, %v948
      %v1189 = vpack.c.b16 %v955, %v949
      %v1190 = vpack.c.b16 %v956, %v950
      %v1191 = vpack.c.b16 %v957, %v951
      %v1192 = vpack.c.b16 %v964, %v958
      %v1193 = vpack.c.b16 %v965, %v959
      %v1194 = vpack.c.b16 %v966, %v960
      %v1195 = vpack.c.b16 %v967, %v961
      %v1196 = vpack.c.b16 %v968, %v962
      %v1197 = vpack.c.b16 %v969, %v963
      %v1198 = vpack.c.b16 %v976, %v970
      %v1199 = vpack.c.b16 %v977, %v971
      %v1200 = vpack.c.b16 %v978, %v972
      %v1201 = vpack.c.b16 %v979, %v973
      %v1202 = vpack.c.b16 %v980, %v974
      %v1203 = vpack.c.b16 %v981, %v975
      %v1204 = vpack.c.b16 %v988, %v982
      %v1205 = vpack.c.b16 %v989, %v983
      %v1206 = vpack.c.b16 %v990, %v984
      %v1207 = vpack.c.b16 %v991, %v985
      %v1208 = vpack.c.b16 %v992, %v986
      %v1209 = vpack.c.b16 %v993, %v987
      %v1210 = vpack.c.b16 %v1000, %v994
      %v1211 = vpack.c.b16 %v1001, %v995
      %v1212 = vpack.c.b16 %v1002, %v996
      %v1213 = vpack.c.b16 %v1003, %v997
      %v1214 = vpack.c.b16 %v1004, %v998
      %v1215 = vpack.c.b16 %v1005, %v999
      %v1216 = vpack.c.b16 %v1012, %v1006
      %v1217 = vpack.c.b16 %v1013, %v1007
      %v1218 = vpack.c.b16 %v1014, %v1008
      %v1219 = vpack.c.b16 %v1015, %v1009
      %v1220 = vpack.c.b16 %v1016, %v1010
      %v1221 = vpack.c.b16 %v1017, %v1011
      %v1222 = vpack.c.b16 %v1024, %v1018
      %v1223 = vpack.c.b16 %v1025, %v1019
      %v1224 = vpack.c.b16 %v1026, %v1020
      %v1225 = vpack.c.b16 %v1027, %v1021
      %v1226 = vpack.c.b16 %v1028, %v1022
      %v1227 = vpack.c.b16 %v1029, %v1023
      %v1228 = vpack.c.b16 %v1036, %v1030
      %v1229 = vpack.c.b16 %v1037, %v1031
      %v1230 = vpack.c.b16 %v1038, %v1032
      %v1231 = vpack.c.b16 %v1039, %v1033
      %v1232 = vpack.c.b16 %v1040, %v1034
      %v1233 = vpack.c.b16 %v1041, %v1035
      %1426 = vmatprep.subr.bf16.mxu0 %v1043
      %1427 = vmatpush1.bf16.msra.mxu0 %v1042
      %1428 = vmatprep.subr.bf16.mxu0 %v1049
      %1429 = vmatpush1.bf16.msra.mxu0 %v1048
      %1430 = vmatprep.subr.bf16.mxu0 %v1055
      %1431 = vmatpush1.bf16.msra.mxu0 %v1054
      %1432 = vmatprep.subr.bf16.mxu0 %v1061
      %1433 = vmatpush1.bf16.msra.mxu0 %v1060
      %1434 = vmatprep.subr.bf16.mxu0 %v1067
      %1435 = vmatpush1.bf16.msra.mxu0 %v1066
      %1436 = vmatprep.subr.bf16.mxu0 %v1073
      %1437 = vmatpush1.bf16.msra.mxu0 %v1072
      %1438 = vmatprep.subr.bf16.mxu0 %v1079
      %1439 = vmatpush1.bf16.msra.mxu0 %v1078
      %1440 = vmatprep.subr.bf16.mxu0 %v1085
      %1441 = vmatpush1.bf16.msra.mxu0 %v1084
      %1442 = vmatprep.subr.bf16.mxu0 %v1091
      %1443 = vmatpush1.bf16.msra.mxu0 %v1090
      %1444 = vmatprep.subr.bf16.mxu0 %v1097
      %1445 = vmatpush1.bf16.msra.mxu0 %v1096
      %1446 = vmatprep.subr.bf16.mxu0 %v1103
      %1447 = vmatpush1.bf16.msra.mxu0 %v1102
      %1448 = vmatprep.subr.bf16.mxu0 %v1109
      %1449 = vmatpush1.bf16.msra.mxu0 %v1108
      %1450 = vmatprep.subr.bf16.mxu0 %v1115
      %1451 = vmatpush1.bf16.msra.mxu0 %v1114
      %1452 = vmatprep.subr.bf16.mxu0 %v1121
      %1453 = vmatpush1.bf16.msra.mxu0 %v1120
      %1454 = vmatprep.subr.bf16.mxu0 %v1127
      %1455 = vmatpush1.bf16.msra.mxu0 %v1126
      %1456 = vmatprep.subr.bf16.mxu0 %v1133
      %1457 = vmatpush1.bf16.msra.mxu0 %v1132
      %1458 = vmatprep.mubr.bf16.mxu0 %v271
      %1459 = vmatmul.mubr.bf16.gmra.mrb[0].mxu0 %v270
      %v1460 = vpop.f32.mrb[0].mxu0
      %v1461 = vadd.f32 0.0, %v1460
      %v1462 = vpop.f32.mrb[0].mxu0
      %v1463 = vadd.f32 0.0, %v1462
      %v1464 = vpop.f32.mrb[0].mxu0
      %v1465 = vpop.f32.mrb[0].mxu0
      %1466 = vdwg.mxu0
      %1467 = vmatprep.subr.bf16.mxu0 %v1139
      %1468 = vmatpush1.bf16.msra.mxu0 %v1138
      %1469 = vmatprep.subr.bf16.mxu0 %v1145
      %1470 = vmatpush1.bf16.msra.mxu0 %v1144
      %1471 = vmatprep.subr.bf16.mxu0 %v1151
      %1472 = vmatpush1.bf16.msra.mxu0 %v1150
      %1473 = vmatprep.subr.bf16.mxu0 %v1157
      %1474 = vmatpush1.bf16.msra.mxu0 %v1156
      %1475 = vmatprep.subr.bf16.mxu0 %v1163
      %1476 = vmatpush1.bf16.msra.mxu0 %v1162
      %1477 = vmatprep.subr.bf16.mxu0 %v1169
      %1478 = vmatpush1.bf16.msra.mxu0 %v1168
      %1479 = vmatprep.subr.bf16.mxu0 %v1175
      %1480 = vmatpush1.bf16.msra.mxu0 %v1174
      %1481 = vmatprep.subr.bf16.mxu0 %v1181
      %1482 = vmatpush1.bf16.msra.mxu0 %v1180
      %1483 = vmatprep.subr.bf16.mxu0 %v1187
      %1484 = vmatpush1.bf16.msra.mxu0 %v1186
      %1485 = vmatprep.subr.bf16.mxu0 %v1193
      %1486 = vmatpush1.bf16.msra.mxu0 %v1192
      %1487 = vmatprep.subr.bf16.mxu0 %v1199
      %1488 = vmatpush1.bf16.msra.mxu0 %v1198
      %1489 = vmatprep.subr.bf16.mxu0 %v1205
      %1490 = vmatpush1.bf16.msra.mxu0 %v1204
      %1491 = vmatprep.subr.bf16.mxu0 %v1211
      %1492 = vmatpush1.bf16.msra.mxu0 %v1210
      %1493 = vmatprep.subr.bf16.mxu0 %v1217
      %1494 = vmatpush1.bf16.msra.mxu0 %v1216
      %1495 = vmatprep.subr.bf16.mxu0 %v1223
      %1496 = vmatpush1.bf16.msra.mxu0 %v1222
      %1497 = vmatprep.subr.bf16.mxu0 %v1229
      %1498 = vmatpush1.bf16.msra.mxu0 %v1228
      %1499 = vmatprep.mubr.bf16.mxu0 %v273
      %1500 = vmatmul.mubr.bf16.gmra.mrb[0].mxu0 %v272
      %v1501 = vpop.f32.mrb[0].mxu0
      %v1502 = vadd.f32 %v1461, %v1501
      %v1503 = vpop.f32.mrb[0].mxu0
      %v1504 = vadd.f32 %v1463, %v1503
      %v1505 = vpop.f32.mrb[0].mxu0
      %v1506 = vpop.f32.mrb[0].mxu0
      %1507 = vdwg.mxu0
      %1508 = vmatprep.subr.bf16.mxu0 %v1045
      %1509 = vmatpush1.bf16.msra.mxu0 %v1044
      %1510 = vmatprep.subr.bf16.mxu0 %v1051
      %1511 = vmatpush1.bf16.msra.mxu0 %v1050
      %1512 = vmatprep.subr.bf16.mxu0 %v1057
      %1513 = vmatpush1.bf16.msra.mxu0 %v1056
      %1514 = vmatprep.subr.bf16.mxu0 %v1063
      %1515 = vmatpush1.bf16.msra.mxu0 %v1062
      %1516 = vmatprep.subr.bf16.mxu0 %v1069
      %1517 = vmatpush1.bf16.msra.mxu0 %v1068
      %1518 = vmatprep.subr.bf16.mxu0 %v1075
      %1519 = vmatpush1.bf16.msra.mxu0 %v1074
      %1520 = vmatprep.subr.bf16.mxu0 %v1081
      %1521 = vmatpush1.bf16.msra.mxu0 %v1080
      %1522 = vmatprep.subr.bf16.mxu0 %v1087
      %1523 = vmatpush1.bf16.msra.mxu0 %v1086
      %1524 = vmatprep.subr.bf16.mxu0 %v1093
      %1525 = vmatpush1.bf16.msra.mxu0 %v1092
      %1526 = vmatprep.subr.bf16.mxu0 %v1099
      %1527 = vmatpush1.bf16.msra.mxu0 %v1098
      %1528 = vmatprep.subr.bf16.mxu0 %v1105
      %1529 = vmatpush1.bf16.msra.mxu0 %v1104
      %1530 = vmatprep.subr.bf16.mxu0 %v1111
      %1531 = vmatpush1.bf16.msra.mxu0 %v1110
      %1532 = vmatprep.subr.bf16.mxu0 %v1117
      %1533 = vmatpush1.bf16.msra.mxu0 %v1116
      %1534 = vmatprep.subr.bf16.mxu0 %v1123
      %1535 = vmatpush1.bf16.msra.mxu0 %v1122
      %1536 = vmatprep.subr.bf16.mxu0 %v1129
      %1537 = vmatpush1.bf16.msra.mxu0 %v1128
      %1538 = vmatprep.subr.bf16.mxu0 %v1135
      %1539 = vmatpush1.bf16.msra.mxu0 %v1134
      %1540 = vmatprep.mubr.bf16.mxu0 %v271
      %1541 = vmatmul.mubr.bf16.gmra.mrb[0].mxu0 %v270
      %v1542 = vpop.f32.mrb[0].mxu0
      %v1543 = vadd.f32 0.0, %v1542
      %v1544 = vpop.f32.mrb[0].mxu0
      %v1545 = vadd.f32 0.0, %v1544
      %v1546 = vpop.f32.mrb[0].mxu0
      %v1547 = vpop.f32.mrb[0].mxu0
      %1548 = vdwg.mxu0
      %1549 = vmatprep.subr.bf16.mxu0 %v1141
      %1550 = vmatpush1.bf16.msra.mxu0 %v1140
      %1551 = vmatprep.subr.bf16.mxu0 %v1147
      %1552 = vmatpush1.bf16.msra.mxu0 %v1146
      %1553 = vmatprep.subr.bf16.mxu0 %v1153
      %1554 = vmatpush1.bf16.msra.mxu0 %v1152
      %1555 = vmatprep.subr.bf16.mxu0 %v1159
      %1556 = vmatpush1.bf16.msra.mxu0 %v1158
      %1557 = vmatprep.subr.bf16.mxu0 %v1165
      %1558 = vmatpush1.bf16.msra.mxu0 %v1164
      %1559 = vmatprep.subr.bf16.mxu0 %v1171
      %1560 = vmatpush1.bf16.msra.mxu0 %v1170
      %1561 = vmatprep.subr.bf16.mxu0 %v1177
      %1562 = vmatpush1.bf16.msra.mxu0 %v1176
      %1563 = vmatprep.subr.bf16.mxu0 %v1183
      %1564 = vmatpush1.bf16.msra.mxu0 %v1182
      %1565 = vmatprep.subr.bf16.mxu0 %v1189
      %1566 = vmatpush1.bf16.msra.mxu0 %v1188
      %1567 = vmatprep.subr.bf16.mxu0 %v1195
      %1568 = vmatpush1.bf16.msra.mxu0 %v1194
      %1569 = vmatprep.subr.bf16.mxu0 %v1201
      %1570 = vmatpush1.bf16.msra.mxu0 %v1200
      %1571 = vmatprep.subr.bf16.mxu0 %v1207
      %1572 = vmatpush1.bf16.msra.mxu0 %v1206
      %1573 = vmatprep.subr.bf16.mxu0 %v1213
      %1574 = vmatpush1.bf16.msra.mxu0 %v1212
      %1575 = vmatprep.subr.bf16.mxu0 %v1219
      %1576 = vmatpush1.bf16.msra.mxu0 %v1218
      %1577 = vmatprep.subr.bf16.mxu0 %v1225
      %1578 = vmatpush1.bf16.msra.mxu0 %v1224
      %1579 = vmatprep.subr.bf16.mxu0 %v1231
      %1580 = vmatpush1.bf16.msra.mxu0 %v1230
      %1581 = vmatprep.mubr.bf16.mxu0 %v273
      %1582 = vmatmul.mubr.bf16.gmra.mrb[0].mxu0 %v272
      %v1583 = vpop.f32.mrb[0].mxu0
      %v1584 = vadd.f32 %v1543, %v1583
      %v1585 = vpop.f32.mrb[0].mxu0
      %v1586 = vadd.f32 %v1545, %v1585
      %v1587 = vpop.f32.mrb[0].mxu0
      %v1588 = vpop.f32.mrb[0].mxu0
      %1589 = vdwg.mxu0
      %1590 = vmatprep.subr.bf16.mxu0 %v1047
      %1591 = vmatpush1.bf16.msra.mxu0 %v1046
      %1592 = vmatprep.subr.bf16.mxu0 %v1053
      %1593 = vmatpush1.bf16.msra.mxu0 %v1052
      %1594 = vmatprep.subr.bf16.mxu0 %v1059
      %1595 = vmatpush1.bf16.msra.mxu0 %v1058
      %1596 = vmatprep.subr.bf16.mxu0 %v1065
      %1597 = vmatpush1.bf16.msra.mxu0 %v1064
      %1598 = vmatprep.subr.bf16.mxu0 %v1071
      %1599 = vmatpush1.bf16.msra.mxu0 %v1070
      %1600 = vmatprep.subr.bf16.mxu0 %v1077
      %1601 = vmatpush1.bf16.msra.mxu0 %v1076
      %1602 = vmatprep.subr.bf16.mxu0 %v1083
      %1603 = vmatpush1.bf16.msra.mxu0 %v1082
      %1604 = vmatprep.subr.bf16.mxu0 %v1089
      %1605 = vmatpush1.bf16.msra.mxu0 %v1088
      %1606 = vmatprep.subr.bf16.mxu0 %v1095
      %1607 = vmatpush1.bf16.msra.mxu0 %v1094
      %1608 = vmatprep.subr.bf16.mxu0 %v1101
      %1609 = vmatpush1.bf16.msra.mxu0 %v1100
      %1610 = vmatprep.subr.bf16.mxu0 %v1107
      %1611 = vmatpush1.bf16.msra.mxu0 %v1106
      %1612 = vmatprep.subr.bf16.mxu0 %v1113
      %1613 = vmatpush1.bf16.msra.mxu0 %v1112
      %1614 = vmatprep.subr.bf16.mxu0 %v1119
      %1615 = vmatpush1.bf16.msra.mxu0 %v1118
      %1616 = vmatprep.subr.bf16.mxu0 %v1125
      %1617 = vmatpush1.bf16.msra.mxu0 %v1124
      %1618 = vmatprep.subr.bf16.mxu0 %v1131
      %1619 = vmatpush1.bf16.msra.mxu0 %v1130
      %1620 = vmatprep.subr.bf16.mxu0 %v1137
      %1621 = vmatpush1.bf16.msra.mxu0 %v1136
      %1622 = vmatprep.mubr.bf16.mxu0 %v271
      %1623 = vmatmul.mubr.bf16.gmra.mrb[0].mxu0 %v270
      %v1624 = vpop.f32.mrb[0].mxu0
      %v1625 = vadd.f32 0.0, %v1624
      %v1626 = vpop.f32.mrb[0].mxu0
      %v1627 = vadd.f32 0.0, %v1626
      %v1628 = vpop.f32.mrb[0].mxu0
      %v1629 = vpop.f32.mrb[0].mxu0
      %1630 = vdwg.mxu0
      %1631 = vmatprep.subr.bf16.mxu0 %v1143
      %1632 = vmatpush1.bf16.msra.mxu0 %v1142
      %1633 = vmatprep.subr.bf16.mxu0 %v1149
      %1634 = vmatpush1.bf16.msra.mxu0 %v1148
      %1635 = vmatprep.subr.bf16.mxu0 %v1155
      %1636 = vmatpush1.bf16.msra.mxu0 %v1154
      %1637 = vmatprep.subr.bf16.mxu0 %v1161
      %1638 = vmatpush1.bf16.msra.mxu0 %v1160
      %1639 = vmatprep.subr.bf16.mxu0 %v1167
      %1640 = vmatpush1.bf16.msra.mxu0 %v1166
      %1641 = vmatprep.subr.bf16.mxu0 %v1173
      %1642 = vmatpush1.bf16.msra.mxu0 %v1172
      %1643 = vmatprep.subr.bf16.mxu0 %v1179
      %1644 = vmatpush1.bf16.msra.mxu0 %v1178
      %1645 = vmatprep.subr.bf16.mxu0 %v1185
      %1646 = vmatpush1.bf16.msra.mxu0 %v1184
      %1647 = vmatprep.subr.bf16.mxu0 %v1191
      %1648 = vmatpush1.bf16.msra.mxu0 %v1190
      %1649 = vmatprep.subr.bf16.mxu0 %v1197
      %1650 = vmatpush1.bf16.msra.mxu0 %v1196
      %1651 = vmatprep.subr.bf16.mxu0 %v1203
      %1652 = vmatpush1.bf16.msra.mxu0 %v1202
      %1653 = vmatprep.subr.bf16.mxu0 %v1209
      %1654 = vmatpush1.bf16.msra.mxu0 %v1208
      %1655 = vmatprep.subr.bf16.mxu0 %v1215
      %1656 = vmatpush1.bf16.msra.mxu0 %v1214
      %1657 = vmatprep.subr.bf16.mxu0 %v1221
      %1658 = vmatpush1.bf16.msra.mxu0 %v1220
      %1659 = vmatprep.subr.bf16.mxu0 %v1227
      %1660 = vmatpush1.bf16.msra.mxu0 %v1226
      %1661 = vmatprep.subr.bf16.mxu0 %v1233
      %1662 = vmatpush1.bf16.msra.mxu0 %v1232
      %1663 = vmatprep.mubr.bf16.mxu0 %v273
      %1664 = vmatmul.mubr.bf16.gmra.mrb[0].mxu0 %v272
      %v1665 = vpop.f32.mrb[0].mxu0
      %v1666 = vadd.f32 %v1625, %v1665
      %v1667 = vpop.f32.mrb[0].mxu0
      %v1668 = vadd.f32 %v1627, %v1667
      %v1669 = vpop.f32.mrb[0].mxu0
      %v1670 = vpop.f32.mrb[0].mxu0
      %1671 = vdwg.mxu0
      %1672 = vst [vmem:[%s234] sm:$0xff] %v1502
      %1673 = vst [vmem:[%s234 + $0x8] sm:$0xff] %v1504
      %1674 = vst [vmem:[%s234 + $0x10] sm:$0xff] %v1584
      %1675 = vst [vmem:[%s234 + $0x18] sm:$0xff] %v1586
      %1676 = vst [vmem:[%s234 + $0x20] sm:$0xff] %v1666
      %1677 = vst [vmem:[%s234 + $0x28] sm:$0xff] %v1668
      %v1678 = vrot.slane %v1502, 4
      %v1679 = vadd.f32 %v1502, %v1678
      %v1680 = vrot.slane %v1679, 2
      %v1681 = vadd.f32 %v1679, %v1680
      %v1682 = vrot.slane %v1681, 1
      %v1683 = vadd.f32 %v1681, %v1682
      %v1684 = vrot.slane %v1504, 4
      %v1685 = vadd.f32 %v1504, %v1684
      %v1686 = vrot.slane %v1685, 2
      %v1687 = vadd.f32 %v1685, %v1686
      %v1688 = vrot.slane %v1687, 1
      %v1689 = vadd.f32 %v1687, %v1688
      %v1690 = vrot.slane %v1584, 4
      %v1691 = vadd.f32 %v1584, %v1690
      %v1692 = vrot.slane %v1691, 2
      %v1693 = vadd.f32 %v1691, %v1692
      %v1694 = vrot.slane %v1693, 1
      %v1695 = vadd.f32 %v1693, %v1694
      %v1696 = vrot.slane %v1586, 4
      %v1697 = vadd.f32 %v1586, %v1696
      %v1698 = vrot.slane %v1697, 2
      %v1699 = vadd.f32 %v1697, %v1698
      %v1700 = vrot.slane %v1699, 1
      %v1701 = vadd.f32 %v1699, %v1700
      %v1702 = vrot.slane %v1666, 4
      %v1703 = vadd.f32 %v1666, %v1702
      %v1704 = vrot.slane %v1703, 2
      %v1705 = vadd.f32 %v1703, %v1704
      %v1706 = vrot.slane %v1705, 1
      %v1707 = vadd.f32 %v1705, %v1706
      %v1708 = vrot.slane %v1668, 4
      %v1709 = vadd.f32 %v1668, %v1708
      %v1710 = vrot.slane %v1709, 2
      %v1711 = vadd.f32 %v1709, %v1710
      %v1712 = vrot.slane %v1711, 1
      %v1713 = vadd.f32 %v1711, %v1712
      %v1714 = vmul.f32 %v1502, %v1502
      %v1715 = vmul.f32 %v1504, %v1504
      %v1716 = vmul.f32 %v1584, %v1584
      %v1717 = vmul.f32 %v1586, %v1586
      %v1718 = vmul.f32 %v1666, %v1666
      %v1719 = vmul.f32 %v1668, %v1668
      %v1720 = vrot.slane %v1714, 4
      %v1721 = vadd.f32 %v1714, %v1720
      %v1722 = vrot.slane %v1721, 2
      %v1723 = vadd.f32 %v1721, %v1722
      %v1724 = vrot.slane %v1723, 1
      %v1725 = vadd.f32 %v1723, %v1724
      %v1726 = vrot.slane %v1715, 4
      %v1727 = vadd.f32 %v1715, %v1726
      %v1728 = vrot.slane %v1727, 2
      %v1729 = vadd.f32 %v1727, %v1728
      %v1730 = vrot.slane %v1729, 1
      %v1731 = vadd.f32 %v1729, %v1730
      %v1732 = vrot.slane %v1716, 4
      %v1733 = vadd.f32 %v1716, %v1732
      %v1734 = vrot.slane %v1733, 2
      %v1735 = vadd.f32 %v1733, %v1734
      %v1736 = vrot.slane %v1735, 1
      %v1737 = vadd.f32 %v1735, %v1736
      %v1738 = vrot.slane %v1717, 4
      %v1739 = vadd.f32 %v1717, %v1738
      %v1740 = vrot.slane %v1739, 2
      %v1741 = vadd.f32 %v1739, %v1740
      %v1742 = vrot.slane %v1741, 1
      %v1743 = vadd.f32 %v1741, %v1742
      %v1744 = vrot.slane %v1718, 4
      %v1745 = vadd.f32 %v1718, %v1744
      %v1746 = vrot.slane %v1745, 2
      %v1747 = vadd.f32 %v1745, %v1746
      %v1748 = vrot.slane %v1747, 1
      %v1749 = vadd.f32 %v1747, %v1748
      %v1750 = vrot.slane %v1719, 4
      %v1751 = vadd.f32 %v1719, %v1750
      %v1752 = vrot.slane %v1751, 2
      %v1753 = vadd.f32 %v1751, %v1752
      %v1754 = vrot.slane %v1753, 1
      %v1755 = vadd.f32 %v1753, %v1754
      %vm1756 = vcmask 1040384
      %v1757 = vsel %vm1756, %v1683, %v1725
      %v1758 = vsel %vm1756, %v1689, %v1731
      %v1759 = vsel %vm1756, %v1695, %v1737
      %v1760 = vsel %vm1756, %v1701, %v1743
      %v1761 = vsel %vm1756, %v1707, %v1749
      %v1762 = vsel %vm1756, %v1713, %v1755
      %vm1763 = vcmask 1041408
      %v1764 = vsel %vm1763, %v1757, 0.0
      %v1765 = vsel %vm1763, %v1758, 0.0
      %v1766 = vsel %vm1763, %v1759, 0.0
      %v1767 = vsel %vm1763, %v1760, 0.0
      %v1768 = vsel %vm1763, %v1761, 0.0
      %v1769 = vsel %vm1763, %v1762, 0.0
      %1770 = vst [vmem:[%s239] sm:$0xff] %v1764
      %1771 = vst [vmem:[%s239 + $0x8] sm:$0xff] %v1765
      %1772 = vst [vmem:[%s239 + $0x10] sm:$0xff] %v1766
      %1773 = vst [vmem:[%s239 + $0x18] sm:$0xff] %v1767
      %1774 = vst [vmem:[%s239 + $0x20] sm:$0xff] %v1768
      %1775 = vst [vmem:[%s239 + $0x28] sm:$0xff] %v1769
      %p1776 = scmp.lt.s32.totalorder %s17, 1
      %s1777 = scalar_select %p1776, %s17, 1
      %s1778 = smul.addr %s1777, 6
      %s1779 = smul.addr %s1778, 8
      %s1780 = scalar_lea.vmem %s4, %s1779
      %p1781 = scmp.lt.s32.totalorder %s17, 1
      %s1782 = scalar_select %p1781, %s17, 1
      %s1783 = smul.addr %s1782, 6
      %s1784 = smul.addr %s1783, 8
      %s1785 = scalar_lea.vmem %s5, %s1784
      // Predicated region
      $region37: #{aux_head_forward.4} parent=35 // pred_check
        %p1786 = pneg %p124
      $region38: #{aux_head_forward.4} parent=35 // pred_check_branch
        %1788 = sbr.rel (%p1786) target = $region40
      $region39: #{aux_head_forward.4} parent=35 // pred_region
        _
      $region40: #{aux_head_forward.4} parent=35 // pred_fallthru
        _
      // Predicated region
      $region41: #{aux_head_forward.4} parent=35 // pred_check
        %p1789 = pneg %p150
      $region42: #{aux_head_forward.4} parent=35 // pred_check_branch
        %1791 = sbr.rel (%p1789) target = $region44
      $region43: #{aux_head_forward.4} parent=35 // pred_region
        _
      $region44: #{aux_head_forward.4} parent=35 // pred_fallthru
        _
    $region36: #{aux_head_forward.4} parent=5 // pred_fallthru
      _
    %p1792 = scmp.le.s32.totalorder 2, %s12
    // Predicated region
    $region45: #{aux_head_forward.4} parent=5 // pred_check
      %p1793 = pneg %p1792
    $region46: #{aux_head_forward.4} parent=5 // pred_check_branch
      %1795 = sbr.rel (%p1793) target = $region48
    $region47: #{aux_head_forward.4} parent=5 // pred_region
      %s1796 = ssub.s32 %s12, 2
      // Predicated region
      $region49: #{aux_head_forward.4} parent=47 // pred_check
        %p1797 = pneg %p130
      $region50: #{aux_head_forward.4} parent=47 // pred_check_branch
        %1799 = sbr.rel (%p1797) target = $region52
      $region51: #{aux_head_forward.4} parent=47 // pred_region
        %p1800 = scmp.lt.s32.totalorder %s18, 1
        %s1801 = scalar_select %p1800, %s18, 1
        %s1802 = smul.addr %s1801, 6
        %s1803 = smul.addr %s1802, 8
        %s1804 = scalar_lea.vmem %s4, %s1803
      $region52: #{aux_head_forward.4} parent=47 // pred_fallthru
        _
      // Predicated region
      $region53: #{aux_head_forward.4} parent=47 // pred_check
        %p1805 = pneg %p156
      $region54: #{aux_head_forward.4} parent=47 // pred_check_branch
        %1807 = sbr.rel (%p1805) target = $region56
      $region55: #{aux_head_forward.4} parent=47 // pred_region
        %p1808 = scmp.lt.s32.totalorder %s18, 1
        %s1809 = scalar_select %p1808, %s18, 1
        %s1810 = smul.addr %s1809, 6
        %s1811 = smul.addr %s1810, 8
        %s1812 = scalar_lea.vmem %s5, %s1811
      $region56: #{aux_head_forward.4} parent=47 // pred_fallthru
        _
    $region48: #{aux_head_forward.4} parent=5 // pred_fallthru
      _
  $region6: #{aux_head_forward.4} parent=0 // loop_footer
    %s16 = sadd.s32 1, %s12
  $region7: #{aux_head_forward.4} parent=0 // loop_footer_branch
    %11 = sbr.rel target = $region3
  $region8: #{aux_head_forward.4} parent=0 // loop_exit
    _

// kernel: aux_head_forward.5
$region0: #{aux_head_forward.5}
  #allocation0 [shape = 'u32[]', space=smem, size = 0x4, offset = 0x4, fixed_abs, tag = 'smem constant byte address 0x4 - core index']
  #allocation1 [shape = 'u32[144,128]{1,0:T(1,128)}', space=vmem, size = 0x12000, scoped, tag = 'internal scratch']
  %s0 = inlined_call_operand.vmem [shape: f32[16,768], index: 0, kind: input, shape index: {}]
  %s1 = inlined_call_operand.vmem [shape: f32[1,768], index: 1, kind: input, shape index: {}]
  %s2 = inlined_call_operand.vmem [shape: f32[1,768], index: 2, kind: input, shape index: {}]
  %s3 = inlined_call_operand.vmem [shape: bf16[768,128], index: 3, kind: input, shape index: {}]
  %s4 = inlined_call_operand.vmem [shape: f32[1,128], index: 4, kind: input, shape index: {}]
  %s5 = inlined_call_operand.hbm [shape: f32[16,128], index: 5, kind: output, shape index: {}]
  %s6 = sld [smem:[#allocation0]]
  $region53: #{aux_head_forward.5} parent=0
    _
  %s8 = ssub.s32 1, %s6
  %s9 = scalar_select 0, %s8, %s6
  $region1: #{aux_head_forward.5} parent=0
    #allocation2 [shape = 'u8[8192]{0}', space=vmem, size = 0x2000, scoped, tag = 'output window, operand 0']
    #allocation3 [shape = 's32[2]{0}', space=sflag, size = 0x8, scoped, tag = 'scoped memory for aux_head_forward.5']
    %10 = vsyncpa [#allocation3], 0
    %s11 = scalar_lea.sflag [#allocation3], 1
    %12 = vsyncpa %s11, 0
    loop: start=0, step=1, limit=4
    $region2: #{aux_head_forward.5} parent=1 // loop_pre_header
      _
    $region3: #{aux_head_forward.5} parent=1 // loop_header
      %s14 = sphi 0, %s18
      %p15 = scmp.ge.s32.totalorder %s14, 4
      %s24 = sphi 0, %s26
      %s27 = sphi 0, %s24
      %s28 = sphi 0, %s27
      %s44 = sphi 0, %s28
      %s48 = sphi 0, %s48
      %s50 = sphi 0, %s48
      %s51 = sphi 0, %s50
      %s65 = sphi 0, %s51
      %s69 = sphi 0, %s69
      %s71 = sphi 0, %s69
      %s72 = sphi 0, %s71
      %s86 = sphi 0, %s72
      %s90 = sphi 0, %s90
      %s92 = sphi 0, %s90
      %s93 = sphi 0, %s92
      %s107 = sphi 0, %s93
      %s111 = sphi 0, %s111
      %s113 = sphi 0, %s111
      %s114 = sphi 0, %s113
      %s128 = sphi 0, %s114
      %s134 = sphi 0, %s136
      %s137 = sphi 0, %s134
      %s138 = sphi 0, %s137
      %s154 = sphi 0, %s138
    $region4: #{aux_head_forward.5} parent=1 // loop_header_branch
      %17 = sbr.rel (%p15) target = $region8
    $region5: #{aux_head_forward.5} parent=1 // loop_body
      %s19 = ssub.s32 %s14, 1
      %s20 = ssub.s32 %s14, 2
      %s21 = sadd.s32 %s14, 1
      %s22 = ssub.s32 %s14, %s21
      %p23 = scmp.eq.s32.totalorder %s22, 0
      %s25 = sadd.s32 %s24, 1
      %s26 = scalar_select %p23, %s24, %s25
      %p29 = pneg %p23
      %p30 = scmp.eq.s32.totalorder %s14, 1
      %p31 = por %p29, %p30
      %p32 = scmp.ne.s32.totalorder %s24, %s27
      %p33 = scmp.eq.s32.totalorder %s14, 0
      %p34 = por %p32, %p33
      %p35 = scmp.ne.s32.totalorder %s24, %s27
      %p36 = scmp.eq.s32.totalorder %s19, 1
      %p37 = por %p35, %p36
      %p38 = scmp.ne.s32.totalorder %s27, %s28
      %p39 = scmp.eq.s32.totalorder %s19, 0
      %p40 = por %p38, %p39
      %p41 = scmp.ne.s32.totalorder %s27, %s28
      %p42 = scmp.eq.s32.totalorder %s20, 1
      %p43 = por %p41, %p42
      %p45 = scmp.ne.s32.totalorder %s28, %s44
      %p46 = scmp.eq.s32.totalorder %s20, 0
      %p47 = por %p45, %p46
      %s49 = sadd.s32 %s48, 1
      %p52 = scmp.eq.s32.totalorder %s14, 1
      %p53 = scmp.ne.s32.totalorder %s48, %s50
      %p54 = scmp.eq.s32.totalorder %s14, 0
      %p55 = por %p53, %p54
      %p56 = scmp.ne.s32.totalorder %s48, %s50
      %p57 = scmp.eq.s32.totalorder %s19, 1
      %p58 = por %p56, %p57
      %p59 = scmp.ne.s32.totalorder %s50, %s51
      %p60 = scmp.eq.s32.totalorder %s19, 0
      %p61 = por %p59, %p60
      %p62 = scmp.ne.s32.totalorder %s50, %s51
      %p63 = scmp.eq.s32.totalorder %s20, 1
      %p64 = por %p62, %p63
      %p66 = scmp.ne.s32.totalorder %s51, %s65
      %p67 = scmp.eq.s32.totalorder %s20, 0
      %p68 = por %p66, %p67
      %s70 = sadd.s32 %s69, 1
      %p73 = scmp.eq.s32.totalorder %s14, 1
      %p74 = scmp.ne.s32.totalorder %s69, %s71
      %p75 = scmp.eq.s32.totalorder %s14, 0
      %p76 = por %p74, %p75
      %p77 = scmp.ne.s32.totalorder %s69, %s71
      %p78 = scmp.eq.s32.totalorder %s19, 1
      %p79 = por %p77, %p78
      %p80 = scmp.ne.s32.totalorder %s71, %s72
      %p81 = scmp.eq.s32.totalorder %s19, 0
      %p82 = por %p80, %p81
      %p83 = scmp.ne.s32.totalorder %s71, %s72
      %p84 = scmp.eq.s32.totalorder %s20, 1
      %p85 = por %p83, %p84
      %p87 = scmp.ne.s32.totalorder %s72, %s86
      %p88 = scmp.eq.s32.totalorder %s20, 0
      %p89 = por %p87, %p88
      %s91 = sadd.s32 %s90, 1
      %p94 = scmp.eq.s32.totalorder %s14, 1
      %p95 = scmp.ne.s32.totalorder %s90, %s92
      %p96 = scmp.eq.s32.totalorder %s14, 0
      %p97 = por %p95, %p96
      %p98 = scmp.ne.s32.totalorder %s90, %s92
      %p99 = scmp.eq.s32.totalorder %s19, 1
      %p100 = por %p98, %p99
      %p101 = scmp.ne.s32.totalorder %s92, %s93
      %p102 = scmp.eq.s32.totalorder %s19, 0
      %p103 = por %p101, %p102
      %p104 = scmp.ne.s32.totalorder %s92, %s93
      %p105 = scmp.eq.s32.totalorder %s20, 1
      %p106 = por %p104, %p105
      %p108 = scmp.ne.s32.totalorder %s93, %s107
      %p109 = scmp.eq.s32.totalorder %s20, 0
      %p110 = por %p108, %p109
      %s112 = sadd.s32 %s111, 1
      %p115 = scmp.eq.s32.totalorder %s14, 1
      %p116 = scmp.ne.s32.totalorder %s111, %s113
      %p117 = scmp.eq.s32.totalorder %s14, 0
      %p118 = por %p116, %p117
      %p119 = scmp.ne.s32.totalorder %s111, %s113
      %p120 = scmp.eq.s32.totalorder %s19, 1
      %p121 = por %p119, %p120
      %p122 = scmp.ne.s32.totalorder %s113, %s114
      %p123 = scmp.eq.s32.totalorder %s19, 0
      %p124 = por %p122, %p123
      %p125 = scmp.ne.s32.totalorder %s113, %s114
      %p126 = scmp.eq.s32.totalorder %s20, 1
      %p127 = por %p125, %p126
      %p129 = scmp.ne.s32.totalorder %s114, %s128
      %p130 = scmp.eq.s32.totalorder %s20, 0
      %p131 = por %p129, %p130
      %s132 = ssub.s32 %s14, %s21
      %p133 = scmp.eq.s32.totalorder %s132, 0
      %s135 = sadd.s32 %s134, 1
      %s136 = scalar_select %p133, %s134, %s135
      %p139 = pneg %p133
      %p140 = scmp.eq.s32.totalorder %s14, 1
      %p141 = por %p139, %p140
      %p142 = scmp.ne.s32.totalorder %s134, %s137
      %p143 = scmp.eq.s32.totalorder %s14, 0
      %p144 = por %p142, %p143
      %p145 = scmp.ne.s32.totalorder %s134, %s137
      %p146 = scmp.eq.s32.totalorder %s19, 1
      %p147 = por %p145, %p146
      %p148 = scmp.ne.s32.totalorder %s137, %s138
      %p149 = scmp.eq.s32.totalorder %s19, 0
      %p150 = por %p148, %p149
      %p151 = scmp.ne.s32.totalorder %s137, %s138
      %p152 = scmp.eq.s32.totalorder %s20, 1
      %p153 = por %p151, %p152
      %p155 = scmp.ne.s32.totalorder %s138, %s154
      %p156 = scmp.eq.s32.totalorder %s20, 0
      %p157 = por %p155, %p156
      %p158 = scmp.le.s32.totalorder 1, %s14
      %p159 = scmp.lt.s32.totalorder %s14, 3
      %p160 = pnand %p158, %p159
      %p161 = pneg %p160
      // Predicated region
      $region9: #{aux_head_forward.5} parent=5 // pred_check
        _
      $region10: #{aux_head_forward.5} parent=5 // pred_check_branch
        %163 = sbr.rel (%p160) target = $region12
      $region11: #{aux_head_forward.5} parent=5 // pred_region
        %s164 = ssub.s32 %s14, 1
        // Predicated region
        $region13: #{aux_head_forward.5} parent=11 // pred_check
          %p165 = pneg %p61
        $region14: #{aux_head_forward.5} parent=11 // pred_check_branch
          %167 = sbr.rel (%p165) target = $region16
        $region15: #{aux_head_forward.5} parent=11 // pred_region
          _
        $region16: #{aux_head_forward.5} parent=11 // pred_fallthru
          _
        // Predicated region
        $region17: #{aux_head_forward.5} parent=11 // pred_check
          %p168 = pneg %p82
        $region18: #{aux_head_forward.5} parent=11 // pred_check_branch
          %170 = sbr.rel (%p168) target = $region20
        $region19: #{aux_head_forward.5} parent=11 // pred_region
          _
        $region20: #{aux_head_forward.5} parent=11 // pred_fallthru
          _
        // Predicated region
        $region21: #{aux_head_forward.5} parent=11 // pred_check
          %p171 = pneg %p103
        $region22: #{aux_head_forward.5} parent=11 // pred_check_branch
          %173 = sbr.rel (%p171) target = $region24
        $region23: #{aux_head_forward.5} parent=11 // pred_region
          _
        $region24: #{aux_head_forward.5} parent=11 // pred_fallthru
          _
        // Predicated region
        $region25: #{aux_head_forward.5} parent=11 // pred_check
          %p174 = pneg %p124
        $region26: #{aux_head_forward.5} parent=11 // pred_check_branch
          %176 = sbr.rel (%p174) target = $region28
        $region27: #{aux_head_forward.5} parent=11 // pred_region
          _
        $region28: #{aux_head_forward.5} parent=11 // pred_fallthru
          _
      $region12: #{aux_head_forward.5} parent=5 // pred_fallthru
        _
      %p177 = scmp.lt.s32.totalorder %s14, 2
      // Predicated region
      $region29: #{aux_head_forward.5} parent=5 // pred_check
        %p178 = pneg %p177
      $region30: #{aux_head_forward.5} parent=5 // pred_check_branch
        %180 = sbr.rel (%p178) target = $region32
      $region31: #{aux_head_forward.5} parent=5 // pred_region
        // Predicated region
        $region33: #{aux_head_forward.5} parent=31 // pred_check
          %p181 = pneg %p34
        $region34: #{aux_head_forward.5} parent=31 // pred_check_branch
          %183 = sbr.rel (%p181) target = $region36
        $region35: #{aux_head_forward.5} parent=31 // pred_region
          %p184 = scmp.lt.s32.totalorder %s14, 1
          %s185 = scalar_select %p184, %s14, 1
          %s186 = smul.addr %s185, 6
          %s187 = smul.addr %s186, 8
          %s188 = scalar_lea.vmem %s0, %s187
        $region36: #{aux_head_forward.5} parent=31 // pred_fallthru
          _
      $region32: #{aux_head_forward.5} parent=5 // pred_fallthru
        _
      %p189 = scmp.le.s32.totalorder 1, %s14
      %p190 = scmp.lt.s32.totalorder %s14, 3
      %p191 = pnand %p189, %p190
      %p192 = pneg %p191
      // Predicated region
      $region37: #{aux_head_forward.5} parent=5 // pred_check
        _
      $region38: #{aux_head_forward.5} parent=5 // pred_check_branch
        %194 = sbr.rel (%p191) target = $region40
      $region39: #{aux_head_forward.5} parent=5 // pred_region
        %s195 = ssub.s32 %s14, 1
        %p196 = scmp.lt.s32.totalorder %s19, 1
        %s197 = scalar_select %p196, %s19, 1
        %s198 = smul.addr %s197, 6
        %s199 = smul.addr %s198, 8
        %s200 = scalar_lea.vmem %s0, %s199
        %p201 = pneg %p40
        %p202 = pneg %p37
        %p203 = pneg %p61
        %p204 = pneg %p58
        %p205 = pneg %p82
        %p206 = pneg %p79
        %p207 = pneg %p103
        %p208 = pneg %p100
        %p209 = pneg %p124
        %p210 = pneg %p121
        %p211 = pneg %p150
        %p212 = pneg %p147
        %s213 = sand.u32 %s137, 1
        %s214 = scalar_lea.sflag [#allocation3], %s213
        %s215 = sand.u32 %s137, 1
        %s216 = smul.addr %s215, 8
        %s217 = scalar_lea.vmem [#allocation2], %s216
        %p218 = scmp.lt.s32.totalorder %s19, 1
        %s219 = scalar_select %p218, %s19, 1
        %s220 = smul.addr %s219, 6
        %s221 = smul.addr %s220, 8
        %s222 = scalar_lea.vmem %s0, %s221
        %v224 = vld [vmem:[%s222] sm:$0xff]
        %v225 = vld [vmem:[%s222 + $0x8] sm:$0xff]
        %v226 = vld [vmem:[%s222 + $0x10] sm:$0xff]
        %v227 = vld [vmem:[%s222 + $0x18] sm:$0xff]
        %v228 = vld [vmem:[%s222 + $0x20] sm:$0xff]
        %v229 = vld [vmem:[%s222 + $0x28] sm:$0xff]
        %v230 = vld [vmem:[%s1] sm:$0x3f]
        %v232 = vlaneseq
        %v233 = vshrl.u32 %v232, 7
        %v234 = vsub.s32 0, %v233
        %v235 = vrot.slane %v230, %v234
        %v236 = vlaneseq
        %v237 = vshrl.u32 %v236, 7
        %v238 = vsub.s32 1, %v237
        %v239 = vrot.slane %v230, %v238
        %v240 = vlaneseq
        %v241 = vshrl.u32 %v240, 7
        %v242 = vsub.s32 2, %v241
        %v243 = vrot.slane %v230, %v242
        %v244 = vlaneseq
        %v245 = vshrl.u32 %v244, 7
        %v246 = vsub.s32 3, %v245
        %v247 = vrot.slane %v230, %v246
        %v248 = vlaneseq
        %v249 = vshrl.u32 %v248, 7
        %v250 = vsub.s32 4, %v249
        %v251 = vrot.slane %v230, %v250
        %v252 = vlaneseq
        %v253 = vshrl.u32 %v252, 7
        %v254 = vsub.s32 5, %v253
        %v255 = vrot.slane %v230, %v254
        %v262 = vmul.f32 %v224, %v235
        %v263 = vmul.f32 %v225, %v239
        %v264 = vmul.f32 %v226, %v243
        %v265 = vmul.f32 %v227, %v247
        %v266 = vmul.f32 %v228, %v251
        %v267 = vmul.f32 %v229, %v255
        %v268 = vld [vmem:[%s2] sm:$0x3f]
        %v270 = vlaneseq
        %v271 = vshrl.u32 %v270, 7
        %v272 = vsub.s32 0, %v271
        %v273 = vrot.slane %v268, %v272
        %v274 = vlaneseq
        %v275 = vshrl.u32 %v274, 7
        %v276 = vsub.s32 1, %v275
        %v277 = vrot.slane %v268, %v276
        %v278 = vlaneseq
        %v279 = vshrl.u32 %v278, 7
        %v280 = vsub.s32 2, %v279
        %v281 = vrot.slane %v268, %v280
        %v282 = vlaneseq
        %v283 = vshrl.u32 %v282, 7
        %v284 = vsub.s32 3, %v283
        %v285 = vrot.slane %v268, %v284
        %v286 = vlaneseq
        %v287 = vshrl.u32 %v286, 7
        %v288 = vsub.s32 4, %v287
        %v289 = vrot.slane %v268, %v288
        %v290 = vlaneseq
        %v291 = vshrl.u32 %v290, 7
        %v292 = vsub.s32 5, %v291
        %v293 = vrot.slane %v268, %v292
        %v300 = vadd.f32 %v262, %v273
        %v301 = vadd.f32 %v263, %v277
        %v302 = vadd.f32 %v264, %v281
        %v303 = vadd.f32 %v265, %v285
        %v304 = vadd.f32 %v266, %v289
        %v305 = vadd.f32 %v267, %v293
        %v306 = vmax.f32 %v300, 0.0
        %v307 = vmax.f32 %v301, 0.0
        %v308 = vmax.f32 %v302, 0.0
        %v309 = vmax.f32 %v303, 0.0
        %v310 = vmax.f32 %v304, 0.0
        %v311 = vmax.f32 %v305, 0.0
        %v312 = vpack.c.bf16 %v306, %v306
        %v313 = vpack.c.bf16 %v307, %v307
        %v314 = vpack.c.bf16 %v308, %v308
        %v315 = vpack.c.bf16 %v309, %v309
        %v316 = vpack.c.bf16 %v310, %v310
        %v317 = vpack.c.bf16 %v311, %v311
        %v318 = vld [vmem:[%s3] sm:$0xf]
        %v319 = vld [vmem:[%s3 + $0x4] sm:$0xf]
        %v320 = vld [vmem:[%s3 + $0x8] sm:$0xf]
        %v321 = vld [vmem:[%s3 + $0xc] sm:$0xf]
        %v322 = vld [vmem:[%s3 + $0x10] sm:$0xf]
        %v323 = vld [vmem:[%s3 + $0x14] sm:$0xf]
        %v324 = vld [vmem:[%s3 + $0x18] sm:$0xf]
        %v325 = vld [vmem:[%s3 + $0x1c] sm:$0xf]
        %v326 = vld [vmem:[%s3 + $0x20] sm:$0xf]
        %v327 = vld [vmem:[%s3 + $0x24] sm:$0xf]
        %v328 = vld [vmem:[%s3 + $0x28] sm:$0xf]
        %v329 = vld [vmem:[%s3 + $0x2c] sm:$0xf]
        %v330 = vld [vmem:[%s3 + $0x30] sm:$0xf]
        %v331 = vld [vmem:[%s3 + $0x34] sm:$0xf]
        %v332 = vld [vmem:[%s3 + $0x38] sm:$0xf]
        %v333 = vld [vmem:[%s3 + $0x3c] sm:$0xf]
        %v334 = vld [vmem:[%s3 + $0x40] sm:$0xf]
        %v335 = vld [vmem:[%s3 + $0x44] sm:$0xf]
        %v336 = vld [vmem:[%s3 + $0x48] sm:$0xf]
        %v337 = vld [vmem:[%s3 + $0x4c] sm:$0xf]
        %v338 = vld [vmem:[%s3 + $0x50] sm:$0xf]
        %v339 = vld [vmem:[%s3 + $0x54] sm:$0xf]
        %v340 = vld [vmem:[%s3 + $0x58] sm:$0xf]
        %v341 = vld [vmem:[%s3 + $0x5c] sm:$0xf]
        %v342 = vld [vmem:[%s3 + $0x60] sm:$0xf]
        %v343 = vld [vmem:[%s3 + $0x64] sm:$0xf]
        %v344 = vld [vmem:[%s3 + $0x68] sm:$0xf]
        %v345 = vld [vmem:[%s3 + $0x6c] sm:$0xf]
        %v346 = vld [vmem:[%s3 + $0x70] sm:$0xf]
        %v347 = vld [vmem:[%s3 + $0x74] sm:$0xf]
        %v348 = vld [vmem:[%s3 + $0x78] sm:$0xf]
        %v349 = vld [vmem:[%s3 + $0x7c] sm:$0xf]
        %v350 = vld [vmem:[%s3 + $0x80] sm:$0xf]
        %v351 = vld [vmem:[%s3 + $0x84] sm:$0xf]
        %v352 = vld [vmem:[%s3 + $0x88] sm:$0xf]
        %v353 = vld [vmem:[%s3 + $0x8c] sm:$0xf]
        %v354 = vld [vmem:[%s3 + $0x90] sm:$0xf]
        %v355 = vld [vmem:[%s3 + $0x94] sm:$0xf]
        %v356 = vld [vmem:[%s3 + $0x98] sm:$0xf]
        %v357 = vld [vmem:[%s3 + $0x9c] sm:$0xf]
        %v358 = vld [vmem:[%s3 + $0xa0] sm:$0xf]
        %v359 = vld [vmem:[%s3 + $0xa4] sm:$0xf]
        %v360 = vld [vmem:[%s3 + $0xa8] sm:$0xf]
        %v361 = vld [vmem:[%s3 + $0xac] sm:$0xf]
        %v362 = vld [vmem:[%s3 + $0xb0] sm:$0xf]
        %v363 = vld [vmem:[%s3 + $0xb4] sm:$0xf]
        %v364 = vld [vmem:[%s3 + $0xb8] sm:$0xf]
        %v365 = vld [vmem:[%s3 + $0xbc] sm:$0xf]
        %v366 = vld [vmem:[%s3 + $0xc0] sm:$0xf]
        %v367 = vld [vmem:[%s3 + $0xc4] sm:$0xf]
        %v368 = vld [vmem:[%s3 + $0xc8] sm:$0xf]
        %v369 = vld [vmem:[%s3 + $0xcc] sm:$0xf]
        %v370 = vld [vmem:[%s3 + $0xd0] sm:$0xf]
        %v371 = vld [vmem:[%s3 + $0xd4] sm:$0xf]
        %v372 = vld [vmem:[%s3 + $0xd8] sm:$0xf]
        %v373 = vld [vmem:[%s3 + $0xdc] sm:$0xf]
        %v374 = vld [vmem:[%s3 + $0xe0] sm:$0xf]
        %v375 = vld [vmem:[%s3 + $0xe4] sm:$0xf]
        %v376 = vld [vmem:[%s3 + $0xe8] sm:$0xf]
        %v377 = vld [vmem:[%s3 + $0xec] sm:$0xf]
        %v378 = vld [vmem:[%s3 + $0xf0] sm:$0xf]
        %v379 = vld [vmem:[%s3 + $0xf4] sm:$0xf]
        %v380 = vld [vmem:[%s3 + $0xf8] sm:$0xf]
        %v381 = vld [vmem:[%s3 + $0xfc] sm:$0xf]
        %v382 = vld [vmem:[%s3 + $0x100] sm:$0xf]
        %v383 = vld [vmem:[%s3 + $0x104] sm:$0xf]
        %v384 = vld [vmem:[%s3 + $0x108] sm:$0xf]
        %v385 = vld [vmem:[%s3 + $0x10c] sm:$0xf]
        %v386 = vld [vmem:[%s3 + $0x110] sm:$0xf]
        %v387 = vld [vmem:[%s3 + $0x114] sm:$0xf]
        %v388 = vld [vmem:[%s3 + $0x118] sm:$0xf]
        %v389 = vld [vmem:[%s3 + $0x11c] sm:$0xf]
        %v390 = vld [vmem:[%s3 + $0x120] sm:$0xf]
        %v391 = vld [vmem:[%s3 + $0x124] sm:$0xf]
        %v392 = vld [vmem:[%s3 + $0x128] sm:$0xf]
        %v393 = vld [vmem:[%s3 + $0x12c] sm:$0xf]
        %v394 = vld [vmem:[%s3 + $0x130] sm:$0xf]
        %v395 = vld [vmem:[%s3 + $0x134] sm:$0xf]
        %v396 = vld [vmem:[%s3 + $0x138] sm:$0xf]
        %v397 = vld [vmem:[%s3 + $0x13c] sm:$0xf]
        %v398 = vld [vmem:[%s3 + $0x140] sm:$0xf]
        %v399 = vld [vmem:[%s3 + $0x144] sm:$0xf]
        %v400 = vld [vmem:[%s3 + $0x148] sm:$0xf]
        %v401 = vld [vmem:[%s3 + $0x14c] sm:$0xf]
        %v402 = vld [vmem:[%s3 + $0x150] sm:$0xf]
        %v403 = vld [vmem:[%s3 + $0x154] sm:$0xf]
        %v404 = vld [vmem:[%s3 + $0x158] sm:$0xf]
        %v405 = vld [vmem:[%s3 + $0x15c] sm:$0xf]
        %v406 = vld [vmem:[%s3 + $0x160] sm:$0xf]
        %v407 = vld [vmem:[%s3 + $0x164] sm:$0xf]
        %v408 = vld [vmem:[%s3 + $0x168] sm:$0xf]
        %v409 = vld [vmem:[%s3 + $0x16c] sm:$0xf]
        %v410 = vld [vmem:[%s3 + $0x170] sm:$0xf]
        %v411 = vld [vmem:[%s3 + $0x174] sm:$0xf]
        %v412 = vld [vmem:[%s3 + $0x178] sm:$0xf]
        %v413 = vld [vmem:[%s3 + $0x17c] sm:$0xf]
        %v414 = vld [vmem:[%s4] sm:$0x1]
        %v416 = vlaneseq
        %v417 = vshrl.u32 %v416, 7
        %v418 = vsub.s32 0, %v417
        %v419 = vrot.slane %v414, %v418
        %v517 = vunpack.c.l.b16 %v318
        %v518 = vunpack.c.l.b16 %v319
        %v519 = vunpack.c.l.b16 %v320
        %v520 = vunpack.c.l.b16 %v321
        %v521 = vunpack.c.l.b16 %v322
        %v522 = vunpack.c.l.b16 %v323
        %v523 = vunpack.c.l.b16 %v324
        %v524 = vunpack.c.l.b16 %v325
        %v525 = vunpack.c.l.b16 %v326
        %v526 = vunpack.c.l.b16 %v327
        %v527 = vunpack.c.l.b16 %v328
        %v528 = vunpack.c.l.b16 %v329
        %v529 = vunpack.c.l.b16 %v330
        %v530 = vunpack.c.l.b16 %v331
        %v531 = vunpack.c.l.b16 %v332
        %v532 = vunpack.c.l.b16 %v333
        %v533 = vunpack.c.l.b16 %v334
        %v534 = vunpack.c.l.b16 %v335
        %v535 = vunpack.c.l.b16 %v336
        %v536 = vunpack.c.l.b16 %v337
        %v537 = vunpack.c.l.b16 %v338
        %v538 = vunpack.c.l.b16 %v339
        %v539 = vunpack.c.l.b16 %v340
        %v540 = vunpack.c.l.b16 %v341
        %v541 = vunpack.c.l.b16 %v342
        %v542 = vunpack.c.l.b16 %v343
        %v543 = vunpack.c.l.b16 %v344
        %v544 = vunpack.c.l.b16 %v345
        %v545 = vunpack.c.l.b16 %v346
        %v546 = vunpack.c.l.b16 %v347
        %v547 = vunpack.c.l.b16 %v348
        %v548 = vunpack.c.l.b16 %v349
        %v549 = vunpack.c.l.b16 %v350
        %v550 = vunpack.c.l.b16 %v351
        %v551 = vunpack.c.l.b16 %v352
        %v552 = vunpack.c.l.b16 %v353
        %v553 = vunpack.c.l.b16 %v354
        %v554 = vunpack.c.l.b16 %v355
        %v555 = vunpack.c.l.b16 %v356
        %v556 = vunpack.c.l.b16 %v357
        %v557 = vunpack.c.l.b16 %v358
        %v558 = vunpack.c.l.b16 %v359
        %v559 = vunpack.c.l.b16 %v360
        %v560 = vunpack.c.l.b16 %v361
        %v561 = vunpack.c.l.b16 %v362
        %v562 = vunpack.c.l.b16 %v363
        %v563 = vunpack.c.l.b16 %v364
        %v564 = vunpack.c.l.b16 %v365
        %v565 = vunpack.c.l.b16 %v366
        %v566 = vunpack.c.l.b16 %v367
        %v567 = vunpack.c.l.b16 %v368
        %v568 = vunpack.c.l.b16 %v369
        %v569 = vunpack.c.l.b16 %v370
        %v570 = vunpack.c.l.b16 %v371
        %v571 = vunpack.c.l.b16 %v372
        %v572 = vunpack.c.l.b16 %v373
        %v573 = vunpack.c.l.b16 %v374
        %v574 = vunpack.c.l.b16 %v375
        %v575 = vunpack.c.l.b16 %v376
        %v576 = vunpack.c.l.b16 %v377
        %v577 = vunpack.c.l.b16 %v378
        %v578 = vunpack.c.l.b16 %v379
        %v579 = vunpack.c.l.b16 %v380
        %v580 = vunpack.c.l.b16 %v381
        %v581 = vunpack.c.l.b16 %v382
        %v582 = vunpack.c.l.b16 %v383
        %v583 = vunpack.c.l.b16 %v384
        %v584 = vunpack.c.l.b16 %v385
        %v585 = vunpack.c.l.b16 %v386
        %v586 = vunpack.c.l.b16 %v387
        %v587 = vunpack.c.l.b16 %v388
        %v588 = vunpack.c.l.b16 %v389
        %v589 = vunpack.c.l.b16 %v390
        %v590 = vunpack.c.l.b16 %v391
        %v591 = vunpack.c.l.b16 %v392
        %v592 = vunpack.c.l.b16 %v393
        %v593 = vunpack.c.l.b16 %v394
        %v594 = vunpack.c.l.b16 %v395
        %v595 = vunpack.c.l.b16 %v396
        %v596 = vunpack.c.l.b16 %v397
        %v597 = vunpack.c.l.b16 %v398
        %v598 = vunpack.c.l.b16 %v399
        %v599 = vunpack.c.l.b16 %v400
        %v600 = vunpack.c.l.b16 %v401
        %v601 = vunpack.c.l.b16 %v402
        %v602 = vunpack.c.l.b16 %v403
        %v603 = vunpack.c.l.b16 %v404
        %v604 = vunpack.c.l.b16 %v405
        %v605 = vunpack.c.l.b16 %v406
        %v606 = vunpack.c.l.b16 %v407
        %v607 = vunpack.c.l.b16 %v408
        %v608 = vunpack.c.l.b16 %v409
        %v609 = vunpack.c.l.b16 %v410
        %v610 = vunpack.c.l.b16 %v411
        %v611 = vunpack.c.l.b16 %v412
        %v612 = vunpack.c.l.b16 %v413
        %v613 = vpack.c.b16 %v518, %v517
        %v614 = vpack.c.b16 %v520, %v519
        %v615 = vpack.c.b16 %v522, %v521
        %v616 = vpack.c.b16 %v524, %v523
        %v617 = vpack.c.b16 %v526, %v525
        %v618 = vpack.c.b16 %v528, %v527
        %v619 = vpack.c.b16 %v530, %v529
        %v620 = vpack.c.b16 %v532, %v531
        %v621 = vpack.c.b16 %v534, %v533
        %v622 = vpack.c.b16 %v536, %v535
        %v623 = vpack.c.b16 %v538, %v537
        %v624 = vpack.c.b16 %v540, %v539
        %v625 = vpack.c.b16 %v542, %v541
        %v626 = vpack.c.b16 %v544, %v543
        %v627 = vpack.c.b16 %v546, %v545
        %v628 = vpack.c.b16 %v548, %v547
        %v629 = vpack.c.b16 %v550, %v549
        %v630 = vpack.c.b16 %v552, %v551
        %v631 = vpack.c.b16 %v554, %v553
        %v632 = vpack.c.b16 %v556, %v555
        %v633 = vpack.c.b16 %v558, %v557
        %v634 = vpack.c.b16 %v560, %v559
        %v635 = vpack.c.b16 %v562, %v561
        %v636 = vpack.c.b16 %v564, %v563
        %v637 = vpack.c.b16 %v566, %v565
        %v638 = vpack.c.b16 %v568, %v567
        %v639 = vpack.c.b16 %v570, %v569
        %v640 = vpack.c.b16 %v572, %v571
        %v641 = vpack.c.b16 %v574, %v573
        %v642 = vpack.c.b16 %v576, %v575
        %v643 = vpack.c.b16 %v578, %v577
        %v644 = vpack.c.b16 %v580, %v579
        %v645 = vpack.c.b16 %v582, %v581
        %v646 = vpack.c.b16 %v584, %v583
        %v647 = vpack.c.b16 %v586, %v585
        %v648 = vpack.c.b16 %v588, %v587
        %v649 = vpack.c.b16 %v590, %v589
        %v650 = vpack.c.b16 %v592, %v591
        %v651 = vpack.c.b16 %v594, %v593
        %v652 = vpack.c.b16 %v596, %v595
        %v653 = vpack.c.b16 %v598, %v597
        %v654 = vpack.c.b16 %v600, %v599
        %v655 = vpack.c.b16 %v602, %v601
        %v656 = vpack.c.b16 %v604, %v603
        %v657 = vpack.c.b16 %v606, %v605
        %v658 = vpack.c.b16 %v608, %v607
        %v659 = vpack.c.b16 %v610, %v609
        %v660 = vpack.c.b16 %v612, %v611
        %709 = vmatprep.subr.bf16.mxu0 0
        %710 = vmatpush1.bf16.msra.mxu0 %v613
        %711 = vmatprep.subr.bf16.mxu0 0
        %712 = vmatpush1.bf16.msra.mxu0 %v614
        %713 = vmatprep.subr.bf16.mxu0 0
        %714 = vmatpush1.bf16.msra.mxu0 %v615
        %715 = vmatprep.subr.bf16.mxu0 0
        %716 = vmatpush1.bf16.msra.mxu0 %v616
        %717 = vmatprep.subr.bf16.mxu0 0
        %718 = vmatpush1.bf16.msra.mxu0 %v617
        %719 = vmatprep.subr.bf16.mxu0 0
        %720 = vmatpush1.bf16.msra.mxu0 %v618
        %721 = vmatprep.subr.bf16.mxu0 0
        %722 = vmatpush1.bf16.msra.mxu0 %v619
        %723 = vmatprep.subr.bf16.mxu0 0
        %724 = vmatpush1.bf16.msra.mxu0 %v620
        %725 = vmatprep.subr.bf16.mxu0 0
        %726 = vmatpush1.bf16.msra.mxu0 %v621
        %727 = vmatprep.subr.bf16.mxu0 0
        %728 = vmatpush1.bf16.msra.mxu0 %v622
        %729 = vmatprep.subr.bf16.mxu0 0
        %730 = vmatpush1.bf16.msra.mxu0 %v623
        %731 = vmatprep.subr.bf16.mxu0 0
        %732 = vmatpush1.bf16.msra.mxu0 %v624
        %733 = vmatprep.subr.bf16.mxu0 0
        %734 = vmatpush1.bf16.msra.mxu0 %v625
        %735 = vmatprep.subr.bf16.mxu0 0
        %736 = vmatpush1.bf16.msra.mxu0 %v626
        %737 = vmatprep.subr.bf16.mxu0 0
        %738 = vmatpush1.bf16.msra.mxu0 %v627
        %739 = vmatprep.subr.bf16.mxu0 0
        %740 = vmatpush1.bf16.msra.mxu0 %v628
        %741 = vmatprep.mubr.bf16.mxu0 %v313
        %742 = vmatmul.mubr.bf16.gmra.mrb[0].mxu0 %v312
        %v743 = vpop.f32.mrb[0].mxu0
        %v744 = vadd.f32 %v419, %v743
        %v745 = vpop.f32.mrb[0].mxu0
        %v746 = vpop.f32.mrb[0].mxu0
        %v747 = vpop.f32.mrb[0].mxu0
        %748 = vdwg.mxu0
        %749 = vmatprep.subr.bf16.mxu0 0
        %750 = vmatpush1.bf16.msra.mxu0 %v629
        %751 = vmatprep.subr.bf16.mxu0 0
        %752 = vmatpush1.bf16.msra.mxu0 %v630
        %753 = vmatprep.subr.bf16.mxu0 0
        %754 = vmatpush1.bf16.msra.mxu0 %v631
        %755 = vmatprep.subr.bf16.mxu0 0
        %756 = vmatpush1.bf16.msra.mxu0 %v632
        %757 = vmatprep.subr.bf16.mxu0 0
        %758 = vmatpush1.bf16.msra.mxu0 %v633
        %759 = vmatprep.subr.bf16.mxu0 0
        %760 = vmatpush1.bf16.msra.mxu0 %v634
        %761 = vmatprep.subr.bf16.mxu0 0
        %762 = vmatpush1.bf16.msra.mxu0 %v635
        %763 = vmatprep.subr.bf16.mxu0 0
        %764 = vmatpush1.bf16.msra.mxu0 %v636
        %765 = vmatprep.subr.bf16.mxu0 0
        %766 = vmatpush1.bf16.msra.mxu0 %v637
        %767 = vmatprep.subr.bf16.mxu0 0
        %768 = vmatpush1.bf16.msra.mxu0 %v638
        %769 = vmatprep.subr.bf16.mxu0 0
        %770 = vmatpush1.bf16.msra.mxu0 %v639
        %771 = vmatprep.subr.bf16.mxu0 0
        %772 = vmatpush1.bf16.msra.mxu0 %v640
        %773 = vmatprep.subr.bf16.mxu0 0
        %774 = vmatpush1.bf16.msra.mxu0 %v641
        %775 = vmatprep.subr.bf16.mxu0 0
        %776 = vmatpush1.bf16.msra.mxu0 %v642
        %777 = vmatprep.subr.bf16.mxu0 0
        %778 = vmatpush1.bf16.msra.mxu0 %v643
        %779 = vmatprep.subr.bf16.mxu0 0
        %780 = vmatpush1.bf16.msra.mxu0 %v644
        %781 = vmatprep.mubr.bf16.mxu0 %v315
        %782 = vmatmul.mubr.bf16.gmra.mrb[0].mxu0 %v314
        %v783 = vpop.f32.mrb[0].mxu0
        %v784 = vadd.f32 %v744, %v783
        %v785 = vpop.f32.mrb[0].mxu0
        %v786 = vpop.f32.mrb[0].mxu0
        %v787 = vpop.f32.mrb[0].mxu0
        %788 = vdwg.mxu0
        %789 = vmatprep.subr.bf16.mxu0 0
        %790 = vmatpush1.bf16.msra.mxu0 %v645
        %791 = vmatprep.subr.bf16.mxu0 0
        %792 = vmatpush1.bf16.msra.mxu0 %v646
        %793 = vmatprep.subr.bf16.mxu0 0
        %794 = vmatpush1.bf16.msra.mxu0 %v647
        %795 = vmatprep.subr.bf16.mxu0 0
        %796 = vmatpush1.bf16.msra.mxu0 %v648
        %797 = vmatprep.subr.bf16.mxu0 0
        %798 = vmatpush1.bf16.msra.mxu0 %v649
        %799 = vmatprep.subr.bf16.mxu0 0
        %800 = vmatpush1.bf16.msra.mxu0 %v650
        %801 = vmatprep.subr.bf16.mxu0 0
        %802 = vmatpush1.bf16.msra.mxu0 %v651
        %803 = vmatprep.subr.bf16.mxu0 0
        %804 = vmatpush1.bf16.msra.mxu0 %v652
        %805 = vmatprep.subr.bf16.mxu0 0
        %806 = vmatpush1.bf16.msra.mxu0 %v653
        %807 = vmatprep.subr.bf16.mxu0 0
        %808 = vmatpush1.bf16.msra.mxu0 %v654
        %809 = vmatprep.subr.bf16.mxu0 0
        %810 = vmatpush1.bf16.msra.mxu0 %v655
        %811 = vmatprep.subr.bf16.mxu0 0
        %812 = vmatpush1.bf16.msra.mxu0 %v656
        %813 = vmatprep.subr.bf16.mxu0 0
        %814 = vmatpush1.bf16.msra.mxu0 %v657
        %815 = vmatprep.subr.bf16.mxu0 0
        %816 = vmatpush1.bf16.msra.mxu0 %v658
        %817 = vmatprep.subr.bf16.mxu0 0
        %818 = vmatpush1.bf16.msra.mxu0 %v659
        %819 = vmatprep.subr.bf16.mxu0 0
        %820 = vmatpush1.bf16.msra.mxu0 %v660
        %821 = vmatprep.mubr.bf16.mxu0 %v317
        %822 = vmatmul.mubr.bf16.gmra.mrb[0].mxu0 %v316
        %v823 = vpop.f32.mrb[0].mxu0
        %v824 = vadd.f32 %v784, %v823
        %v825 = vpop.f32.mrb[0].mxu0
        %v826 = vpop.f32.mrb[0].mxu0
        %v827 = vpop.f32.mrb[0].mxu0
        %828 = vdwg.mxu0
        %829 = vst [vmem:[%s217] sm:$0xff] %v824
        %s830 = sand.u32 %s137, 1
        %s831 = scalar_lea.sflag [#allocation3], %s830
        %s832 = sand.u32 %s137, 1
        %s833 = smul.addr %s832, 8
        %s834 = scalar_lea.vmem [#allocation2], %s833
        // Predicated region
        $region41: #{aux_head_forward.5} parent=39 // pred_check
          %p835 = pneg %p147
        $region42: #{aux_head_forward.5} parent=39 // pred_check_branch
          %837 = sbr.rel (%p835) target = $region44
        $region43: #{aux_head_forward.5} parent=39 // pred_region
          %s839 = ssub.s32 128, 128
          %840 = vsyncadd %s831, %s839
          %s841 = smul.addr %s19, 128
          %s842 = scalar_lea.hbm %s5, %s841
          %s844 = sshll.u32 %s834, 4
          %s845 = int_to_ptr.vmem [resolvable:$true] %s844
          %847 = dma.vmem_to_hbm [thread:$0]  %s845, 128, %s842, %s831
        $region44: #{aux_head_forward.5} parent=39 // pred_fallthru
          _
      $region40: #{aux_head_forward.5} parent=5 // pred_fallthru
        _
      %p848 = scmp.le.s32.totalorder 2, %s14
      // Predicated region
      $region45: #{aux_head_forward.5} parent=5 // pred_check
        %p849 = pneg %p848
      $region46: #{aux_head_forward.5} parent=5 // pred_check_branch
        %851 = sbr.rel (%p849) target = $region48
      $region47: #{aux_head_forward.5} parent=5 // pred_region
        %s852 = ssub.s32 %s14, 2
        // Predicated region
        $region49: #{aux_head_forward.5} parent=47 // pred_check
          %p853 = pneg %p153
        $region50: #{aux_head_forward.5} parent=47 // pred_check_branch
          %855 = sbr.rel (%p853) target = $region52
        $region51: #{aux_head_forward.5} parent=47 // pred_region
          %s856 = sand.u32 %s138, 1
          %s857 = scalar_lea.sflag [#allocation3], %s856
          %s858 = sand.u32 %s138, 1
          %s859 = smul.addr %s858, 8
          %s860 = scalar_lea.vmem [#allocation2], %s859
          %861 = dma.done %s857, 128
        $region52: #{aux_head_forward.5} parent=47 // pred_fallthru
          _
      $region48: #{aux_head_forward.5} parent=5 // pred_fallthru
        _
    $region6: #{aux_head_forward.5} parent=1 // loop_footer
      %s18 = sadd.s32 1, %s14
    $region7: #{aux_head_forward.5} parent=1 // loop_footer_branch
      %13 = sbr.rel target = $region3
    $region8: #{aux_head_forward.5} parent=1 // loop_exit
      _
    %862 = vsyncpa [#allocation3], 1
    %s863 = scalar_lea.sflag [#allocation3], 1
    %864 = vsyncpa %s863, 1

</llo_original>
